<compile_context>
chip_gen: v7x
topology: tpu7x:2x2x1
jax: 0.10.0
libtpu: 0.0.40
codegen_flags: <defaults>
</compile_context>

<pallas_src>
import functools

import jax
import jax.numpy as jnp
from jax.experimental import pallas as pl
from jax.experimental.pallas import tpu as pltpu

F_IN = 512        # LSTM input_size (self.features)
HID = 256         # LSTM hidden_size
NCLS = 318        # num_classes
NCLS_PAD = 384    # next multiple of 128 -> lane-dense output slab
BP = 8            # padded batch (one full sublane group)


def lstm_key_kernel(x_ref, wih_ref, b_ref, fcb_ref, whh_hbm, fcw_hbm,
                    out_ref, pg_ref, whh_buf, fcw_buf, sem, *, seq_len):
    """Single-invocation kernel: hoisted input projection + LSTM recurrence + FC/log-softmax.

    x_ref   : (T*BP, F)   bf16  time-major inputs, batch padded to BP rows/step
    wih_ref : (F, 4H)     bf16  W_ih^T (gate order [i,f,o,g])
    b_ref   : (1, 4H)     f32   b_ih + b_hh (same gate order)
    fcb_ref : (1, NCLS_PAD) f32 FC1.bias, padded columns = -1e30
    whh_hbm : (H, 4H)     bf16  W_hh^T, left in HBM, DMA'd manually
    fcw_hbm : (H, NCLS_PAD) bf16 FC1.weight^T (zero-padded cols), in HBM
    out_ref : (BP, NCLS_PAD) f32 log-softmax scores
    pg_ref  : (T*BP, 4H)  f32   VMEM scratch for the hoisted pre-gates
    """
    h_dim = HID

    # Kick off DMAs for weights that are only needed later; they overlap with
    # the hoisted input-projection matmul below.
    cp_whh = pltpu.make_async_copy(whh_hbm, whh_buf, sem.at[0])
    cp_fcw = pltpu.make_async_copy(fcw_hbm, fcw_buf, sem.at[1])
    cp_whh.start()
    cp_fcw.start()

    # 1) Hoisted input projection for ALL timesteps at once (one big MXU
    #    matmul, M = T*BP), bias folded in; bf16 inputs, f32 accumulation.
    pg_ref[...] = (jnp.dot(x_ref[...], wih_ref[...],
                           preferred_element_type=jnp.float32)
                   + b_ref[...])

    # 2) Recurrence over T; h/c live in vregs as fori_loop carries.
    cp_whh.wait()

    def step(t, carry):
        h, c = carry
        row0 = pl.multiple_of(t * BP, BP)
        gates = pg_ref[pl.ds(row0, BP), :] + jnp.dot(
            h.astype(jnp.bfloat16), whh_buf[...],
            preferred_element_type=jnp.float32)
        # Gate order after wrapper permutation: [i, f, o, g].
        sig = jax.nn.sigmoid(gates[:, :3 * h_dim])
        i_g = sig[:, 0 * h_dim:1 * h_dim]
        f_g = sig[:, 1 * h_dim:2 * h_dim]
        o_g = sig[:, 2 * h_dim:3 * h_dim]
        g_g = jnp.tanh(gates[:, 3 * h_dim:4 * h_dim])
        c_new = f_g * c + i_g * g_g
        h_new = o_g * jnp.tanh(c_new)
        return h_new, c_new

    h0 = jnp.zeros((BP, h_dim), jnp.float32)
    c0 = jnp.zeros((BP, h_dim), jnp.float32)
    h, _ = jax.lax.fori_loop(0, seq_len, step, (h0, c0), unroll=True)

    # 3) FC1 on the last hidden state + LogSoftmax over the lane-dense padded
    #    class dim. Padded columns carry a -1e30 bias -> exp() underflows to 0
    #    and the normalizer is exact for the real 318 classes.
    cp_fcw.wait()
    logits = jnp.dot(h.astype(jnp.bfloat16), fcw_buf[...],
                     preferred_element_type=jnp.float32) + fcb_ref[...]
    m = jnp.max(logits, axis=1, keepdims=True)
    z = logits - m
    lse = jnp.log(jnp.sum(jnp.exp(z), axis=1, keepdims=True))
    out_ref[...] = z - lse


def _reorder_gates(w, axis=0):
    """Permute PyTorch LSTM gate order [i, f, g, o] -> [i, f, o, g]."""
    i, f, g, o = jnp.split(w, 4, axis=axis)
    return jnp.concatenate([i, f, o, g], axis=axis)


def lstm_key_forward(x, w_ih, w_hh, b_ih, b_hh, fc_w, fc_b):
    T, B, F = x.shape
    assert F == F_IN and B <= BP

    # Pad batch to one full sublane group (fusible pad, rows are independent
    # in every matmul / elementwise op and dropped at the end). Heavy operands
    # are cast to bf16; accumulation stays f32 inside the kernel.
    x2d = jnp.pad(x, ((0, 0), (0, BP - B), (0, 0)))
    x2d = x2d.reshape(T * BP, F).astype(jnp.bfloat16)          # (T*BP, F)

    wihT = _reorder_gates(w_ih, 0).T.astype(jnp.bfloat16)      # (F, 4H)
    whhT = _reorder_gates(w_hh, 0).T.astype(jnp.bfloat16)      # (H, 4H)
    b = _reorder_gates(b_ih + b_hh, 0).reshape(1, 4 * HID).astype(jnp.float32)

    # Lane-dense class dim: zero-pad the weight columns, -1e30-pad the bias.
    fcwT = jnp.pad(fc_w.T, ((0, 0), (0, NCLS_PAD - NCLS))).astype(jnp.bfloat16)
    fcb = jnp.concatenate(
        [fc_b.astype(jnp.float32),
         jnp.full((NCLS_PAD - NCLS,), -1e30, jnp.float32)]).reshape(1, NCLS_PAD)

    vmem = pl.BlockSpec(memory_space=pltpu.MemorySpace.VMEM)
    hbm = pl.BlockSpec(memory_space=pl.ANY)

    out = pl.pallas_call(
        functools.partial(lstm_key_kernel, seq_len=T),
        out_shape=jax.ShapeDtypeStruct((BP, NCLS_PAD), jnp.float32),
        in_specs=[vmem, vmem, vmem, vmem, hbm, hbm],
        out_specs=vmem,
        scratch_shapes=[
            pltpu.VMEM((T * BP, 4 * HID), jnp.float32),    # hoisted pre-gates
            pltpu.VMEM((HID, 4 * HID), jnp.bfloat16),      # W_hh^T landing buf
            pltpu.VMEM((HID, NCLS_PAD), jnp.bfloat16),     # FC weight landing buf
            pltpu.SemaphoreType.DMA((2,)),
        ],
    )(x2d, wihT, b, fcb, whhT, fcwT)
    return out[:B, :NCLS]


def xavier_uniform(key, shape):
    fan_out, fan_in = shape  # PyTorch Linear/LSTM weight layout: (out, in)
    bound = (6.0 / (fan_in + fan_out)) ** 0.5
    return jax.random.uniform(key, shape, jnp.float32, -bound, bound)


def reference_forward(x, w_ih, w_hh, b_ih, b_hh, fc_w, fc_b):
    """Pure-JAX f32 reference of the PyTorch forward pass."""
    T, B, _ = x.shape
    h = jnp.zeros((B, HID), jnp.float32)
    c = jnp.zeros((B, HID), jnp.float32)
    for t in range(T):
        gates = x[t] @ w_ih.T + h @ w_hh.T + b_ih + b_hh
        i = jax.nn.sigmoid(gates[:, 0 * HID:1 * HID])
        f = jax.nn.sigmoid(gates[:, 1 * HID:2 * HID])
        g = jnp.tanh(gates[:, 2 * HID:3 * HID])
        o = jax.nn.sigmoid(gates[:, 3 * HID:4 * HID])
        c = f * c + i * g
        h = o * jnp.tanh(c)
    logits = h @ fc_w.T + fc_b
    return jax.nn.log_softmax(logits, axis=1)


if __name__ == "__main__":
    T = 8    # sequence length
    B = 2    # batch

    key = jax.random.PRNGKey(0)
    kx, kih, khh, kfc = jax.random.split(key, 4)

    x = jax.random.normal(kx, (T, B, F_IN), jnp.float32)

    # Parameters match the PyTorch init: xavier_uniform_ weights, zero biases.
    w_ih = xavier_uniform(kih, (4 * HID, F_IN))   # weight_ih_l0
    w_hh = xavier_uniform(khh, (4 * HID, HID))    # weight_hh_l0
    b_ih = jnp.zeros((4 * HID,), jnp.float32)
    b_hh = jnp.zeros((4 * HID,), jnp.float32)
    fc_w = xavier_uniform(kfc, (NCLS, HID))       # FC1.weight
    fc_b = jnp.zeros((NCLS,), jnp.float32)

    out = lstm_key_forward(x, w_ih, w_hh, b_ih, b_hh, fc_w, fc_b)
    out = jax.block_until_ready(out)

    ref = reference_forward(x, w_ih, w_hh, b_ih, b_hh, fc_w, fc_b)
    assert out.shape == (B, NCLS)
    assert jnp.allclose(out, ref, atol=1e-2, rtol=1e-2), (
        f"max abs diff {jnp.max(jnp.abs(out - ref))}")

    print("KERNEL_OK")
</pallas_src>

<mosaic_0001>
module attributes {stable_mosaic.version = 11 : i64} {
  func.func @lstm_key_kernel(%arg0: memref<64x512xbf16, #tpu.memory_space<vmem>>, %arg1: memref<512x1024xbf16, #tpu.memory_space<vmem>>, %arg2: memref<1x1024xf32, #tpu.memory_space<vmem>>, %arg3: memref<1x384xf32, #tpu.memory_space<vmem>>, %arg4: memref<256x1024xbf16, #tpu.memory_space<any>>, %arg5: memref<256x384xbf16, #tpu.memory_space<any>>, %arg6: memref<8x384xf32, #tpu.memory_space<vmem>>, %arg7: memref<64x1024xf32, #tpu.memory_space<vmem>>, %arg8: memref<256x1024xbf16, #tpu.memory_space<vmem>>, %arg9: memref<256x384xbf16, #tpu.memory_space<vmem>>, %arg10: memref<2x!tpu.dma_semaphore, #tpu.memory_space<semaphore_mem>>) attributes {dimension_semantics = [], scalar_prefetch = 0 : i64, scratch_operands = 4 : i64, tpu.core_type = #tpu.core_type<tc>} {
    %c0_i32 = arith.constant 0 : i32
    %0 = tpu.memref_slice %arg10[%c0_i32] : memref<2x!tpu.dma_semaphore, #tpu.memory_space<semaphore_mem>> -> memref<1x!tpu.dma_semaphore, #tpu.memory_space<semaphore_mem>>
    %1 = tpu.memref_squeeze %0 : memref<1x!tpu.dma_semaphore, #tpu.memory_space<semaphore_mem>> -> memref<!tpu.dma_semaphore, #tpu.memory_space<semaphore_mem>>
    tpu.enqueue_dma source(%arg4 : memref<256x1024xbf16, #tpu.memory_space<any>>) target(%arg8 : memref<256x1024xbf16, #tpu.memory_space<vmem>>) target_semaphore(%1 : memref<!tpu.dma_semaphore, #tpu.memory_space<semaphore_mem>>)
    %c1_i32 = arith.constant 1 : i32
    %2 = tpu.memref_slice %arg10[%c1_i32] : memref<2x!tpu.dma_semaphore, #tpu.memory_space<semaphore_mem>> -> memref<1x!tpu.dma_semaphore, #tpu.memory_space<semaphore_mem>>
    %3 = tpu.memref_squeeze %2 : memref<1x!tpu.dma_semaphore, #tpu.memory_space<semaphore_mem>> -> memref<!tpu.dma_semaphore, #tpu.memory_space<semaphore_mem>>
    tpu.enqueue_dma source(%arg5 : memref<256x384xbf16, #tpu.memory_space<any>>) target(%arg9 : memref<256x384xbf16, #tpu.memory_space<vmem>>) target_semaphore(%3 : memref<!tpu.dma_semaphore, #tpu.memory_space<semaphore_mem>>)
    %c0 = arith.constant 0 : index
    %c0_0 = arith.constant 0 : index
    %4 = vector.load %arg0[%c0, %c0_0] : memref<64x512xbf16, #tpu.memory_space<vmem>>, vector<64x512xbf16>
    %c0_1 = arith.constant 0 : index
    %c0_2 = arith.constant 0 : index
    %5 = vector.load %arg1[%c0_1, %c0_2] : memref<512x1024xbf16, #tpu.memory_space<vmem>>, vector<512x1024xbf16>
    %cst = arith.constant dense<0.000000e+00> : vector<64x1024xf32>
    %6 = tpu.matmul %4, %5, %cst {dimension_numbers = #tpu.dot_dimension_numbers<[1], [0], [0], [1], [0, 0, 1, 1], [], []>} : vector<64x512xbf16>, vector<512x1024xbf16>, vector<64x1024xf32> -> vector<64x1024xf32>
    %c0_3 = arith.constant 0 : index
    %c0_4 = arith.constant 0 : index
    %7 = vector.load %arg2[%c0_3, %c0_4] : memref<1x1024xf32, #tpu.memory_space<vmem>>, vector<1x1024xf32>
    %8 = vector.broadcast %7 : vector<1x1024xf32> to vector<64x1024xf32>
    %9 = arith.addf %6, %8 : vector<64x1024xf32>
    %c0_5 = arith.constant 0 : index
    %c0_6 = arith.constant 0 : index
    %10 = vector.load %arg7[%c0_5, %c0_6] : memref<64x1024xf32, #tpu.memory_space<vmem>>, vector<64x1024xf32>
    tpu.vector_store %arg7[%c0_5, %c0_6], %9 {strides = array<i32>} : memref<64x1024xf32, #tpu.memory_space<vmem>>, vector<64x1024xf32>,
    %c0_i32_7 = arith.constant 0 : i32
    %11 = tpu.memref_slice %arg10[%c0_i32_7] : memref<2x!tpu.dma_semaphore, #tpu.memory_space<semaphore_mem>> -> memref<1x!tpu.dma_semaphore, #tpu.memory_space<semaphore_mem>>
    %12 = tpu.memref_squeeze %11 : memref<1x!tpu.dma_semaphore, #tpu.memory_space<semaphore_mem>> -> memref<!tpu.dma_semaphore, #tpu.memory_space<semaphore_mem>>
    tpu.wait_dma2 semaphore(%12 : memref<!tpu.dma_semaphore, #tpu.memory_space<semaphore_mem>>) src(%arg4 : memref<256x1024xbf16, #tpu.memory_space<any>>) dst(%arg8 : memref<256x1024xbf16, #tpu.memory_space<vmem>>)
    %cst_8 = arith.constant 0.000000e+00 : f32
    %13 = vector.broadcast %cst_8 : f32 to vector<8x256xf32>
    %cst_9 = arith.constant 0.000000e+00 : f32
    %14 = vector.broadcast %cst_9 : f32 to vector<8x256xf32>
    %c0_i32_10 = arith.constant 0 : i32
    %c8_i32 = arith.constant 8 : i32
    %15 = arith.muli %c0_i32_10, %c8_i32 : i32
    %16 = tpu.assume_multiple %15, 8 : i32
    %17 = arith.index_cast %16 : i32 to index
    %c0_11 = arith.constant 0 : index
    %18 = vector.load %arg7[%17, %c0_11] : memref<64x1024xf32, #tpu.memory_space<vmem>>, vector<8x1024xf32>
    %19 = arith.truncf %13 : vector<8x256xf32> to vector<8x256xbf16>
    %c0_12 = arith.constant 0 : index
    %c0_13 = arith.constant 0 : index
    %20 = vector.load %arg8[%c0_12, %c0_13] : memref<256x1024xbf16, #tpu.memory_space<vmem>>, vector<256x1024xbf16>
    %cst_14 = arith.constant dense<0.000000e+00> : vector<8x1024xf32>
    %21 = tpu.matmul %19, %20, %cst_14 {dimension_numbers = #tpu.dot_dimension_numbers<[1], [0], [0], [1], [0, 0, 1, 1], [], []>} : vector<8x256xbf16>, vector<256x1024xbf16>, vector<8x1024xf32> -> vector<8x1024xf32>
    %22 = arith.addf %18, %21 : vector<8x1024xf32>
    %23 = vector.extract_strided_slice %22 {offsets = [0, 0], sizes = [8, 768], strides = [1, 1]} : vector<8x1024xf32> to vector<8x768xf32>
    %24 = arith.negf %23 : vector<8x768xf32>
    %25 = math.exp %24 : vector<8x768xf32>
    %cst_15 = arith.constant 1.000000e+00 : f32
    %26 = vector.broadcast %cst_15 : f32 to vector<8x768xf32>
    %27 = arith.addf %26, %25 : vector<8x768xf32>
    %28 = arith.divf %26, %27 : vector<8x768xf32>
    %29 = vector.extract_strided_slice %28 {offsets = [0, 0], sizes = [8, 256], strides = [1, 1]} : vector<8x768xf32> to vector<8x256xf32>
    %30 = vector.extract_strided_slice %28 {offsets = [0, 256], sizes = [8, 256], strides = [1, 1]} : vector<8x768xf32> to vector<8x256xf32>
    %31 = vector.extract_strided_slice %28 {offsets = [0, 512], sizes = [8, 256], strides = [1, 1]} : vector<8x768xf32> to vector<8x256xf32>
    %32 = vector.extract_strided_slice %22 {offsets = [0, 768], sizes = [8, 256], strides = [1, 1]} : vector<8x1024xf32> to vector<8x256xf32>
    %33 = math.tanh %32 : vector<8x256xf32>
    %34 = arith.mulf %30, %14 : vector<8x256xf32>
    %35 = arith.mulf %29, %33 : vector<8x256xf32>
    %36 = arith.addf %34, %35 : vector<8x256xf32>
    %37 = math.tanh %36 : vector<8x256xf32>
    %38 = arith.mulf %31, %37 : vector<8x256xf32>
    %c1_i32_16 = arith.constant 1 : i32
    %c8_i32_17 = arith.constant 8 : i32
    %39 = arith.muli %c1_i32_16, %c8_i32_17 : i32
    %40 = tpu.assume_multiple %39, 8 : i32
    %41 = arith.index_cast %40 : i32 to index
    %c0_18 = arith.constant 0 : index
    %42 = vector.load %arg7[%41, %c0_18] : memref<64x1024xf32, #tpu.memory_space<vmem>>, vector<8x1024xf32>
    %43 = arith.truncf %38 : vector<8x256xf32> to vector<8x256xbf16>
    %c0_19 = arith.constant 0 : index
    %c0_20 = arith.constant 0 : index
    %44 = vector.load %arg8[%c0_19, %c0_20] : memref<256x1024xbf16, #tpu.memory_space<vmem>>, vector<256x1024xbf16>
    %cst_21 = arith.constant dense<0.000000e+00> : vector<8x1024xf32>
    %45 = tpu.matmul %43, %44, %cst_21 {dimension_numbers = #tpu.dot_dimension_numbers<[1], [0], [0], [1], [0, 0, 1, 1], [], []>} : vector<8x256xbf16>, vector<256x1024xbf16>, vector<8x1024xf32> -> vector<8x1024xf32>
    %46 = arith.addf %42, %45 : vector<8x1024xf32>
    %47 = vector.extract_strided_slice %46 {offsets = [0, 0], sizes = [8, 768], strides = [1, 1]} : vector<8x1024xf32> to vector<8x768xf32>
    %48 = arith.negf %47 : vector<8x768xf32>
    %49 = math.exp %48 : vector<8x768xf32>
    %cst_22 = arith.constant 1.000000e+00 : f32
    %50 = vector.broadcast %cst_22 : f32 to vector<8x768xf32>
    %51 = arith.addf %50, %49 : vector<8x768xf32>
    %52 = arith.divf %50, %51 : vector<8x768xf32>
    %53 = vector.extract_strided_slice %52 {offsets = [0, 0], sizes = [8, 256], strides = [1, 1]} : vector<8x768xf32> to vector<8x256xf32>
    %54 = vector.extract_strided_slice %52 {offsets = [0, 256], sizes = [8, 256], strides = [1, 1]} : vector<8x768xf32> to vector<8x256xf32>
    %55 = vector.extract_strided_slice %52 {offsets = [0, 512], sizes = [8, 256], strides = [1, 1]} : vector<8x768xf32> to vector<8x256xf32>
    %56 = vector.extract_strided_slice %46 {offsets = [0, 768], sizes = [8, 256], strides = [1, 1]} : vector<8x1024xf32> to vector<8x256xf32>
    %57 = math.tanh %56 : vector<8x256xf32>
    %58 = arith.mulf %54, %36 : vector<8x256xf32>
    %59 = arith.mulf %53, %57 : vector<8x256xf32>
    %60 = arith.addf %58, %59 : vector<8x256xf32>
    %61 = math.tanh %60 : vector<8x256xf32>
    %62 = arith.mulf %55, %61 : vector<8x256xf32>
    %c2_i32 = arith.constant 2 : i32
    %c8_i32_23 = arith.constant 8 : i32
    %63 = arith.muli %c2_i32, %c8_i32_23 : i32
    %64 = tpu.assume_multiple %63, 8 : i32
    %65 = arith.index_cast %64 : i32 to index
    %c0_24 = arith.constant 0 : index
    %66 = vector.load %arg7[%65, %c0_24] : memref<64x1024xf32, #tpu.memory_space<vmem>>, vector<8x1024xf32>
    %67 = arith.truncf %62 : vector<8x256xf32> to vector<8x256xbf16>
    %c0_25 = arith.constant 0 : index
    %c0_26 = arith.constant 0 : index
    %68 = vector.load %arg8[%c0_25, %c0_26] : memref<256x1024xbf16, #tpu.memory_space<vmem>>, vector<256x1024xbf16>
    %cst_27 = arith.constant dense<0.000000e+00> : vector<8x1024xf32>
    %69 = tpu.matmul %67, %68, %cst_27 {dimension_numbers = #tpu.dot_dimension_numbers<[1], [0], [0], [1], [0, 0, 1, 1], [], []>} : vector<8x256xbf16>, vector<256x1024xbf16>, vector<8x1024xf32> -> vector<8x1024xf32>
    %70 = arith.addf %66, %69 : vector<8x1024xf32>
    %71 = vector.extract_strided_slice %70 {offsets = [0, 0], sizes = [8, 768], strides = [1, 1]} : vector<8x1024xf32> to vector<8x768xf32>
    %72 = arith.negf %71 : vector<8x768xf32>
    %73 = math.exp %72 : vector<8x768xf32>
    %cst_28 = arith.constant 1.000000e+00 : f32
    %74 = vector.broadcast %cst_28 : f32 to vector<8x768xf32>
    %75 = arith.addf %74, %73 : vector<8x768xf32>
    %76 = arith.divf %74, %75 : vector<8x768xf32>
    %77 = vector.extract_strided_slice %76 {offsets = [0, 0], sizes = [8, 256], strides = [1, 1]} : vector<8x768xf32> to vector<8x256xf32>
    %78 = vector.extract_strided_slice %76 {offsets = [0, 256], sizes = [8, 256], strides = [1, 1]} : vector<8x768xf32> to vector<8x256xf32>
    %79 = vector.extract_strided_slice %76 {offsets = [0, 512], sizes = [8, 256], strides = [1, 1]} : vector<8x768xf32> to vector<8x256xf32>
    %80 = vector.extract_strided_slice %70 {offsets = [0, 768], sizes = [8, 256], strides = [1, 1]} : vector<8x1024xf32> to vector<8x256xf32>
    %81 = math.tanh %80 : vector<8x256xf32>
    %82 = arith.mulf %78, %60 : vector<8x256xf32>
    %83 = arith.mulf %77, %81 : vector<8x256xf32>
    %84 = arith.addf %82, %83 : vector<8x256xf32>
    %85 = math.tanh %84 : vector<8x256xf32>
    %86 = arith.mulf %79, %85 : vector<8x256xf32>
    %c3_i32 = arith.constant 3 : i32
    %c8_i32_29 = arith.constant 8 : i32
    %87 = arith.muli %c3_i32, %c8_i32_29 : i32
    %88 = tpu.assume_multiple %87, 8 : i32
    %89 = arith.index_cast %88 : i32 to index
    %c0_30 = arith.constant 0 : index
    %90 = vector.load %arg7[%89, %c0_30] : memref<64x1024xf32, #tpu.memory_space<vmem>>, vector<8x1024xf32>
    %91 = arith.truncf %86 : vector<8x256xf32> to vector<8x256xbf16>
    %c0_31 = arith.constant 0 : index
    %c0_32 = arith.constant 0 : index
    %92 = vector.load %arg8[%c0_31, %c0_32] : memref<256x1024xbf16, #tpu.memory_space<vmem>>, vector<256x1024xbf16>
    %cst_33 = arith.constant dense<0.000000e+00> : vector<8x1024xf32>
    %93 = tpu.matmul %91, %92, %cst_33 {dimension_numbers = #tpu.dot_dimension_numbers<[1], [0], [0], [1], [0, 0, 1, 1], [], []>} : vector<8x256xbf16>, vector<256x1024xbf16>, vector<8x1024xf32> -> vector<8x1024xf32>
    %94 = arith.addf %90, %93 : vector<8x1024xf32>
    %95 = vector.extract_strided_slice %94 {offsets = [0, 0], sizes = [8, 768], strides = [1, 1]} : vector<8x1024xf32> to vector<8x768xf32>
    %96 = arith.negf %95 : vector<8x768xf32>
    %97 = math.exp %96 : vector<8x768xf32>
    %cst_34 = arith.constant 1.000000e+00 : f32
    %98 = vector.broadcast %cst_34 : f32 to vector<8x768xf32>
    %99 = arith.addf %98, %97 : vector<8x768xf32>
    %100 = arith.divf %98, %99 : vector<8x768xf32>
    %101 = vector.extract_strided_slice %100 {offsets = [0, 0], sizes = [8, 256], strides = [1, 1]} : vector<8x768xf32> to vector<8x256xf32>
    %102 = vector.extract_strided_slice %100 {offsets = [0, 256], sizes = [8, 256], strides = [1, 1]} : vector<8x768xf32> to vector<8x256xf32>
    %103 = vector.extract_strided_slice %100 {offsets = [0, 512], sizes = [8, 256], strides = [1, 1]} : vector<8x768xf32> to vector<8x256xf32>
    %104 = vector.extract_strided_slice %94 {offsets = [0, 768], sizes = [8, 256], strides = [1, 1]} : vector<8x1024xf32> to vector<8x256xf32>
    %105 = math.tanh %104 : vector<8x256xf32>
    %106 = arith.mulf %102, %84 : vector<8x256xf32>
    %107 = arith.mulf %101, %105 : vector<8x256xf32>
    %108 = arith.addf %106, %107 : vector<8x256xf32>
    %109 = math.tanh %108 : vector<8x256xf32>
    %110 = arith.mulf %103, %109 : vector<8x256xf32>
    %c4_i32 = arith.constant 4 : i32
    %c8_i32_35 = arith.constant 8 : i32
    %111 = arith.muli %c4_i32, %c8_i32_35 : i32
    %112 = tpu.assume_multiple %111, 8 : i32
    %113 = arith.index_cast %112 : i32 to index
    %c0_36 = arith.constant 0 : index
    %114 = vector.load %arg7[%113, %c0_36] : memref<64x1024xf32, #tpu.memory_space<vmem>>, vector<8x1024xf32>
    %115 = arith.truncf %110 : vector<8x256xf32> to vector<8x256xbf16>
    %c0_37 = arith.constant 0 : index
    %c0_38 = arith.constant 0 : index
    %116 = vector.load %arg8[%c0_37, %c0_38] : memref<256x1024xbf16, #tpu.memory_space<vmem>>, vector<256x1024xbf16>
    %cst_39 = arith.constant dense<0.000000e+00> : vector<8x1024xf32>
    %117 = tpu.matmul %115, %116, %cst_39 {dimension_numbers = #tpu.dot_dimension_numbers<[1], [0], [0], [1], [0, 0, 1, 1], [], []>} : vector<8x256xbf16>, vector<256x1024xbf16>, vector<8x1024xf32> -> vector<8x1024xf32>
    %118 = arith.addf %114, %117 : vector<8x1024xf32>
    %119 = vector.extract_strided_slice %118 {offsets = [0, 0], sizes = [8, 768], strides = [1, 1]} : vector<8x1024xf32> to vector<8x768xf32>
    %120 = arith.negf %119 : vector<8x768xf32>
    %121 = math.exp %120 : vector<8x768xf32>
    %cst_40 = arith.constant 1.000000e+00 : f32
    %122 = vector.broadcast %cst_40 : f32 to vector<8x768xf32>
    %123 = arith.addf %122, %121 : vector<8x768xf32>
    %124 = arith.divf %122, %123 : vector<8x768xf32>
    %125 = vector.extract_strided_slice %124 {offsets = [0, 0], sizes = [8, 256], strides = [1, 1]} : vector<8x768xf32> to vector<8x256xf32>
    %126 = vector.extract_strided_slice %124 {offsets = [0, 256], sizes = [8, 256], strides = [1, 1]} : vector<8x768xf32> to vector<8x256xf32>
    %127 = vector.extract_strided_slice %124 {offsets = [0, 512], sizes = [8, 256], strides = [1, 1]} : vector<8x768xf32> to vector<8x256xf32>
    %128 = vector.extract_strided_slice %118 {offsets = [0, 768], sizes = [8, 256], strides = [1, 1]} : vector<8x1024xf32> to vector<8x256xf32>
    %129 = math.tanh %128 : vector<8x256xf32>
    %130 = arith.mulf %126, %108 : vector<8x256xf32>
    %131 = arith.mulf %125, %129 : vector<8x256xf32>
    %132 = arith.addf %130, %131 : vector<8x256xf32>
    %133 = math.tanh %132 : vector<8x256xf32>
    %134 = arith.mulf %127, %133 : vector<8x256xf32>
    %c5_i32 = arith.constant 5 : i32
    %c8_i32_41 = arith.constant 8 : i32
    %135 = arith.muli %c5_i32, %c8_i32_41 : i32
    %136 = tpu.assume_multiple %135, 8 : i32
    %137 = arith.index_cast %136 : i32 to index
    %c0_42 = arith.constant 0 : index
    %138 = vector.load %arg7[%137, %c0_42] : memref<64x1024xf32, #tpu.memory_space<vmem>>, vector<8x1024xf32>
    %139 = arith.truncf %134 : vector<8x256xf32> to vector<8x256xbf16>
    %c0_43 = arith.constant 0 : index
    %c0_44 = arith.constant 0 : index
    %140 = vector.load %arg8[%c0_43, %c0_44] : memref<256x1024xbf16, #tpu.memory_space<vmem>>, vector<256x1024xbf16>
    %cst_45 = arith.constant dense<0.000000e+00> : vector<8x1024xf32>
    %141 = tpu.matmul %139, %140, %cst_45 {dimension_numbers = #tpu.dot_dimension_numbers<[1], [0], [0], [1], [0, 0, 1, 1], [], []>} : vector<8x256xbf16>, vector<256x1024xbf16>, vector<8x1024xf32> -> vector<8x1024xf32>
    %142 = arith.addf %138, %141 : vector<8x1024xf32>
    %143 = vector.extract_strided_slice %142 {offsets = [0, 0], sizes = [8, 768], strides = [1, 1]} : vector<8x1024xf32> to vector<8x768xf32>
    %144 = arith.negf %143 : vector<8x768xf32>
    %145 = math.exp %144 : vector<8x768xf32>
    %cst_46 = arith.constant 1.000000e+00 : f32
    %146 = vector.broadcast %cst_46 : f32 to vector<8x768xf32>
    %147 = arith.addf %146, %145 : vector<8x768xf32>
    %148 = arith.divf %146, %147 : vector<8x768xf32>
    %149 = vector.extract_strided_slice %148 {offsets = [0, 0], sizes = [8, 256], strides = [1, 1]} : vector<8x768xf32> to vector<8x256xf32>
    %150 = vector.extract_strided_slice %148 {offsets = [0, 256], sizes = [8, 256], strides = [1, 1]} : vector<8x768xf32> to vector<8x256xf32>
    %151 = vector.extract_strided_slice %148 {offsets = [0, 512], sizes = [8, 256], strides = [1, 1]} : vector<8x768xf32> to vector<8x256xf32>
    %152 = vector.extract_strided_slice %142 {offsets = [0, 768], sizes = [8, 256], strides = [1, 1]} : vector<8x1024xf32> to vector<8x256xf32>
    %153 = math.tanh %152 : vector<8x256xf32>
    %154 = arith.mulf %150, %132 : vector<8x256xf32>
    %155 = arith.mulf %149, %153 : vector<8x256xf32>
    %156 = arith.addf %154, %155 : vector<8x256xf32>
    %157 = math.tanh %156 : vector<8x256xf32>
    %158 = arith.mulf %151, %157 : vector<8x256xf32>
    %c6_i32 = arith.constant 6 : i32
    %c8_i32_47 = arith.constant 8 : i32
    %159 = arith.muli %c6_i32, %c8_i32_47 : i32
    %160 = tpu.assume_multiple %159, 8 : i32
    %161 = arith.index_cast %160 : i32 to index
    %c0_48 = arith.constant 0 : index
    %162 = vector.load %arg7[%161, %c0_48] : memref<64x1024xf32, #tpu.memory_space<vmem>>, vector<8x1024xf32>
    %163 = arith.truncf %158 : vector<8x256xf32> to vector<8x256xbf16>
    %c0_49 = arith.constant 0 : index
    %c0_50 = arith.constant 0 : index
    %164 = vector.load %arg8[%c0_49, %c0_50] : memref<256x1024xbf16, #tpu.memory_space<vmem>>, vector<256x1024xbf16>
    %cst_51 = arith.constant dense<0.000000e+00> : vector<8x1024xf32>
    %165 = tpu.matmul %163, %164, %cst_51 {dimension_numbers = #tpu.dot_dimension_numbers<[1], [0], [0], [1], [0, 0, 1, 1], [], []>} : vector<8x256xbf16>, vector<256x1024xbf16>, vector<8x1024xf32> -> vector<8x1024xf32>
    %166 = arith.addf %162, %165 : vector<8x1024xf32>
    %167 = vector.extract_strided_slice %166 {offsets = [0, 0], sizes = [8, 768], strides = [1, 1]} : vector<8x1024xf32> to vector<8x768xf32>
    %168 = arith.negf %167 : vector<8x768xf32>
    %169 = math.exp %168 : vector<8x768xf32>
    %cst_52 = arith.constant 1.000000e+00 : f32
    %170 = vector.broadcast %cst_52 : f32 to vector<8x768xf32>
    %171 = arith.addf %170, %169 : vector<8x768xf32>
    %172 = arith.divf %170, %171 : vector<8x768xf32>
    %173 = vector.extract_strided_slice %172 {offsets = [0, 0], sizes = [8, 256], strides = [1, 1]} : vector<8x768xf32> to vector<8x256xf32>
    %174 = vector.extract_strided_slice %172 {offsets = [0, 256], sizes = [8, 256], strides = [1, 1]} : vector<8x768xf32> to vector<8x256xf32>
    %175 = vector.extract_strided_slice %172 {offsets = [0, 512], sizes = [8, 256], strides = [1, 1]} : vector<8x768xf32> to vector<8x256xf32>
    %176 = vector.extract_strided_slice %166 {offsets = [0, 768], sizes = [8, 256], strides = [1, 1]} : vector<8x1024xf32> to vector<8x256xf32>
    %177 = math.tanh %176 : vector<8x256xf32>
    %178 = arith.mulf %174, %156 : vector<8x256xf32>
    %179 = arith.mulf %173, %177 : vector<8x256xf32>
    %180 = arith.addf %178, %179 : vector<8x256xf32>
    %181 = math.tanh %180 : vector<8x256xf32>
    %182 = arith.mulf %175, %181 : vector<8x256xf32>
    %c7_i32 = arith.constant 7 : i32
    %c8_i32_53 = arith.constant 8 : i32
    %183 = arith.muli %c7_i32, %c8_i32_53 : i32
    %184 = tpu.assume_multiple %183, 8 : i32
    %185 = arith.index_cast %184 : i32 to index
    %c0_54 = arith.constant 0 : index
    %186 = vector.load %arg7[%185, %c0_54] : memref<64x1024xf32, #tpu.memory_space<vmem>>, vector<8x1024xf32>
    %187 = arith.truncf %182 : vector<8x256xf32> to vector<8x256xbf16>
    %c0_55 = arith.constant 0 : index
    %c0_56 = arith.constant 0 : index
    %188 = vector.load %arg8[%c0_55, %c0_56] : memref<256x1024xbf16, #tpu.memory_space<vmem>>, vector<256x1024xbf16>
    %cst_57 = arith.constant dense<0.000000e+00> : vector<8x1024xf32>
    %189 = tpu.matmul %187, %188, %cst_57 {dimension_numbers = #tpu.dot_dimension_numbers<[1], [0], [0], [1], [0, 0, 1, 1], [], []>} : vector<8x256xbf16>, vector<256x1024xbf16>, vector<8x1024xf32> -> vector<8x1024xf32>
    %190 = arith.addf %186, %189 : vector<8x1024xf32>
    %191 = vector.extract_strided_slice %190 {offsets = [0, 0], sizes = [8, 768], strides = [1, 1]} : vector<8x1024xf32> to vector<8x768xf32>
    %192 = arith.negf %191 : vector<8x768xf32>
    %193 = math.exp %192 : vector<8x768xf32>
    %cst_58 = arith.constant 1.000000e+00 : f32
    %194 = vector.broadcast %cst_58 : f32 to vector<8x768xf32>
    %195 = arith.addf %194, %193 : vector<8x768xf32>
    %196 = arith.divf %194, %195 : vector<8x768xf32>
    %197 = vector.extract_strided_slice %196 {offsets = [0, 0], sizes = [8, 256], strides = [1, 1]} : vector<8x768xf32> to vector<8x256xf32>
    %198 = vector.extract_strided_slice %196 {offsets = [0, 256], sizes = [8, 256], strides = [1, 1]} : vector<8x768xf32> to vector<8x256xf32>
    %199 = vector.extract_strided_slice %196 {offsets = [0, 512], sizes = [8, 256], strides = [1, 1]} : vector<8x768xf32> to vector<8x256xf32>
    %200 = vector.extract_strided_slice %190 {offsets = [0, 768], sizes = [8, 256], strides = [1, 1]} : vector<8x1024xf32> to vector<8x256xf32>
    %201 = math.tanh %200 : vector<8x256xf32>
    %202 = arith.mulf %198, %180 : vector<8x256xf32>
    %203 = arith.mulf %197, %201 : vector<8x256xf32>
    %204 = arith.addf %202, %203 : vector<8x256xf32>
    %205 = math.tanh %204 : vector<8x256xf32>
    %206 = arith.mulf %199, %205 : vector<8x256xf32>
    %c8_i32_59 = arith.constant 8 : i32
    %c1_i32_60 = arith.constant 1 : i32
    %207 = tpu.memref_slice %arg10[%c1_i32_60] : memref<2x!tpu.dma_semaphore, #tpu.memory_space<semaphore_mem>> -> memref<1x!tpu.dma_semaphore, #tpu.memory_space<semaphore_mem>>
    %208 = tpu.memref_squeeze %207 : memref<1x!tpu.dma_semaphore, #tpu.memory_space<semaphore_mem>> -> memref<!tpu.dma_semaphore, #tpu.memory_space<semaphore_mem>>
    tpu.wait_dma2 semaphore(%208 : memref<!tpu.dma_semaphore, #tpu.memory_space<semaphore_mem>>) src(%arg5 : memref<256x384xbf16, #tpu.memory_space<any>>) dst(%arg9 : memref<256x384xbf16, #tpu.memory_space<vmem>>)
    %209 = arith.truncf %206 : vector<8x256xf32> to vector<8x256xbf16>
    %c0_61 = arith.constant 0 : index
    %c0_62 = arith.constant 0 : index
    %210 = vector.load %arg9[%c0_61, %c0_62] : memref<256x384xbf16, #tpu.memory_space<vmem>>, vector<256x384xbf16>
    %cst_63 = arith.constant dense<0.000000e+00> : vector<8x384xf32>
    %211 = tpu.matmul %209, %210, %cst_63 {dimension_numbers = #tpu.dot_dimension_numbers<[1], [0], [0], [1], [0, 0, 1, 1], [], []>} : vector<8x256xbf16>, vector<256x384xbf16>, vector<8x384xf32> -> vector<8x384xf32>
    %c0_64 = arith.constant 0 : index
    %c0_65 = arith.constant 0 : index
    %212 = vector.load %arg3[%c0_64, %c0_65] : memref<1x384xf32, #tpu.memory_space<vmem>>, vector<1x384xf32>
    %213 = vector.broadcast %212 : vector<1x384xf32> to vector<8x384xf32>
    %214 = arith.addf %211, %213 : vector<8x384xf32>
    %cst_66 = arith.constant dense<0xFF800000> : vector<8xf32>
    %215 = vector.multi_reduction <maximumf>, %214, %cst_66 [1] : vector<8x384xf32> to vector<8xf32>
    %216 = vector.shape_cast %215 : vector<8xf32> to vector<8x1xf32>
    %217 = vector.broadcast %216 : vector<8x1xf32> to vector<8x384xf32>
    %218 = arith.subf %214, %217 : vector<8x384xf32>
    %219 = math.exp %218 : vector<8x384xf32>
    %cst_67 = arith.constant dense<0.000000e+00> : vector<8xf32>
    %220 = vector.multi_reduction <add>, %219, %cst_67 [1] : vector<8x384xf32> to vector<8xf32>
    %221 = vector.shape_cast %220 : vector<8xf32> to vector<8x1xf32>
    %222 = math.log %221 : vector<8x1xf32>
    %223 = vector.broadcast %222 : vector<8x1xf32> to vector<8x384xf32>
    %224 = arith.subf %218, %223 : vector<8x384xf32>
    %c0_68 = arith.constant 0 : index
    %c0_69 = arith.constant 0 : index
    %225 = vector.load %arg6[%c0_68, %c0_69] : memref<8x384xf32, #tpu.memory_space<vmem>>, vector<8x384xf32>
    tpu.vector_store %arg6[%c0_68, %c0_69], %224 {strides = array<i32>} : memref<8x384xf32, #tpu.memory_space<vmem>>, vector<8x384xf32>,
    return
  }
}

</mosaic_0001>

<llo_original>
// kernel: tpu_custom_call.1
$region0: #{tpu_custom_call.1}
  #allocation0 [shape = 'u32[]', space=smem, size = 0x4, offset = 0x4, fixed_abs, tag = 'smem constant byte address 0x4 - core index']
  #allocation1 [shape = 'u32[144,128]{1,0:T(1,128)}', space=vmem, size = 0x12000, scoped, tag = 'internal scratch']
  #allocation2 [shape = 'f32[64,1024]{1,0:T(8,128)}', space=vmem, size = 0x40000, scoped, tag = 'scratch operand']
  #allocation3 [shape = 'bf16[256,1024]{1,0:T(16,128)(2,1)}', space=vmem, size = 0x80000, scoped, tag = 'scratch operand']
  #allocation4 [shape = 'bf16[256,384]{1,0:T(16,128)(2,1)}', space=vmem, size = 0x30000, scoped, tag = 'scratch operand']
  #allocation5 [shape = 's32[2]{0}', space=sflag, size = 0x8, scoped, tag = 'scratch operand']
  #allocation13 [shape = 's32[]', space=sflag, size = 0x4, offset = 0, fixed_abs, tag = 'sflag constant byte address 0x0 - dummy sync flag']
  #allocation15 [shape = 's32[]', space=sflag, size = 0x4, offset = 0, fixed_abs, tag = 'sflag constant byte address 0x0 - dummy sync flag']
  %s0 = inlined_call_operand.hbm [shape: bf16[64,512], index: 0, kind: input, shape index: {}]
  %s1 = inlined_call_operand.hbm [shape: bf16[512,1024], index: 1, kind: input, shape index: {}]
  %s2 = inlined_call_operand.hbm [shape: f32[1,1024], index: 2, kind: input, shape index: {}]
  %s3 = inlined_call_operand.vmem [shape: f32[1,384], index: 3, kind: input, shape index: {}]
  %s4 = inlined_call_operand.hbm [shape: bf16[256,1024], index: 4, kind: input, shape index: {}]
  %s5 = inlined_call_operand.hbm [shape: bf16[256,384], index: 5, kind: input, shape index: {}]
  %s6 = inlined_call_operand.hbm [shape: f32[8,384], index: 6, kind: output, shape index: {}]
  %s7 = sld [smem:[#allocation0]]
  $region38: #{tpu_custom_call.1} parent=0
    _
  %s9 = ssub.s32 1, %s7
  %s10 = scalar_select 0, %s9, %s7
  $region1: #{tpu_custom_call.1} parent=0
    #allocation6 [shape = 'u8[65536]{0}', space=vmem, size = 0x10000, scoped, tag = 'input window, operand 0, single buffered']
    #allocation7 [shape = 's32[1]{0}', space=sflag, size = 0x4, scoped, tag = 'scoped memory for tpu_custom_call.1']
    #allocation8 [shape = 's32[1]{0}', space=sflag, size = 0x4, scoped, tag = 'scoped memory for tpu_custom_call.1']
    #allocation9 [shape = 'u8[1048576]{0}', space=vmem, size = 0x100000, scoped, tag = 'input window, operand 1, single buffered']
    #allocation10 [shape = 's32[1]{0}', space=sflag, size = 0x4, scoped, tag = 'scoped memory for tpu_custom_call.1']
    #allocation11 [shape = 'u8[4096]{0}', space=vmem, size = 0x1000, scoped, tag = 'input window, operand 2, single buffered']
    #allocation12 [shape = 'u8[12288]{0}', space=vmem, size = 0x3000, scoped, tag = 'output window, operand 0, single buffered']
    #allocation14 [shape = 'u32[9]{0}', space=smem, size = 0x24, scoped, tag = 'DMA stride descriptor']
    #allocation16 [shape = 'u32[9]{0}', space=smem, size = 0x24, scoped, tag = 'DMA stride descriptor']
    %11 = vsyncpa [#allocation7], 0
    %12 = vsyncpa [#allocation10], 0
    %13 = vsyncpa [#allocation8], 0
    // Predicated region
    $region2: #{tpu_custom_call.1} parent=1 // pred_check
      _
    $region3: #{tpu_custom_call.1} parent=1 // pred_check_branch
      %15 = sbr.rel (0) target = $region5
    $region4: #{tpu_custom_call.1} parent=1 // pred_region
      %s17 = ssub.s32 2048, 2048
      %18 = vsyncadd [#allocation7], %s17
      %s19 = sshll.u32 [#allocation6], 4
      %s20 = int_to_ptr.vmem [resolvable:$true] %s19
      %25 = dma.hbm_to_vmem [thread:$0]  %s0, 2048, %s20, [#allocation7], 256, 256, 16
    $region5: #{tpu_custom_call.1} parent=1 // pred_fallthru
      _
    // Predicated region
    $region6: #{tpu_custom_call.1} parent=1 // pred_check
      _
    $region7: #{tpu_custom_call.1} parent=1 // pred_check_branch
      %27 = sbr.rel (0) target = $region9
    $region8: #{tpu_custom_call.1} parent=1 // pred_region
      %s29 = ssub.s32 32768, 32768
      %30 = vsyncadd [#allocation10], %s29
      %s31 = sshll.u32 [#allocation9], 4
      %s32 = int_to_ptr.vmem [resolvable:$true] %s31
      %37 = dma.hbm_to_vmem [thread:$0]  %s1, 32768, %s32, [#allocation10], 512, 512, 32
    $region9: #{tpu_custom_call.1} parent=1 // pred_fallthru
      _
    // Predicated region
    $region10: #{tpu_custom_call.1} parent=1 // pred_check
      _
    $region11: #{tpu_custom_call.1} parent=1 // pred_check_branch
      %39 = sbr.rel (0) target = $region13
    $region12: #{tpu_custom_call.1} parent=1 // pred_region
      %s41 = ssub.s32 128, 128
      %42 = vsyncadd [#allocation10], %s41
      %s44 = sshll.u32 [#allocation11], 4
      %s45 = int_to_ptr.vmem [resolvable:$true] %s44
      %47 = dma.hbm_to_vmem [thread:$0]  %s2, 128, %s45, [#allocation10]
    $region13: #{tpu_custom_call.1} parent=1 // pred_fallthru
      _
    // Predicated region
    $region14: #{tpu_custom_call.1} parent=1 // pred_check
      _
    $region15: #{tpu_custom_call.1} parent=1 // pred_check_branch
      %49 = sbr.rel (0) target = $region17
    $region16: #{tpu_custom_call.1} parent=1 // pred_region
      _
    $region17: #{tpu_custom_call.1} parent=1 // pred_fallthru
      _
    // Predicated region
    $region18: #{tpu_custom_call.1} parent=1 // pred_check
      _
    $region19: #{tpu_custom_call.1} parent=1 // pred_check_branch
      %51 = sbr.rel (0) target = $region21
    $region20: #{tpu_custom_call.1} parent=1 // pred_region
      %52 = dma.done [#allocation7], 2048
    $region21: #{tpu_custom_call.1} parent=1 // pred_fallthru
      _
    // Predicated region
    $region22: #{tpu_custom_call.1} parent=1 // pred_check
      _
    $region23: #{tpu_custom_call.1} parent=1 // pred_check_branch
      %54 = sbr.rel (0) target = $region25
    $region24: #{tpu_custom_call.1} parent=1 // pred_region
      %55 = dma.done [#allocation10], 32768
    $region25: #{tpu_custom_call.1} parent=1 // pred_fallthru
      _
    // Predicated region
    $region26: #{tpu_custom_call.1} parent=1 // pred_check
      _
    $region27: #{tpu_custom_call.1} parent=1 // pred_check_branch
      %57 = sbr.rel (0) target = $region29
    $region28: #{tpu_custom_call.1} parent=1 // pred_region
      %58 = dma.done [#allocation10], 128
    $region29: #{tpu_custom_call.1} parent=1 // pred_fallthru
      _
    %s61 = sshll.u32 1, 14
    %s62 = sxor.u32 4294967295, %s61
    %s64 = sld [smem:[#allocation0]]
    %s65 = sadd.s32 2, %s64
    %s67 = sshll.u32 7, 26
    %s68 = sxor.u32 4294967295, %s67
    %s69 = sand.u32 0, %s68
    %s70 = sshll.u32 %s65, 26
    %s71 = sor.u32 %s69, %s70
    %s72 = sshll.u32 [#allocation3], 4
    %s73 = int_to_ptr.vmem [resolvable:$true] %s72
    %76 = sst [smem:[#allocation14]] 1024
    %s77 = scalar_lea.smem [#allocation14], 1
    %78 = sst [smem:[%s77]] 1024
    %s79 = scalar_lea.smem [#allocation14], 2
    %80 = sst [smem:[%s79]] 8
    %s81 = scalar_lea.smem [#allocation14], 3
    %82 = sst [smem:[%s81]] 64
    %s83 = scalar_lea.smem [#allocation14], 4
    %84 = sst [smem:[%s83]] 128
    %s85 = scalar_lea.smem [#allocation14], 5
    %86 = sst [smem:[%s85]] 2
    %s87 = scalar_lea.smem [#allocation14], 6
    %88 = sst [smem:[%s87]] 512
    %s89 = scalar_lea.smem [#allocation14], 7
    %90 = sst [smem:[%s89]] 64
    %s91 = scalar_lea.smem [#allocation14], 8
    %92 = sst [smem:[%s91]] 4
    %94 = dma.general %s4, 16384, %s73, [#allocation5], [#allocation13], [#allocation14], %s71, 0
    %s95 = scalar_lea.sflag [#allocation5], 1
    %s97 = sshll.u32 1, 14
    %s98 = sxor.u32 4294967295, %s97
    %s100 = sadd.s32 2, %s64
    %s102 = sshll.u32 7, 26
    %s103 = sxor.u32 4294967295, %s102
    %s104 = sand.u32 0, %s103
    %s105 = sshll.u32 %s100, 26
    %s106 = sor.u32 %s104, %s105
    %s107 = sshll.u32 [#allocation4], 4
    %s108 = int_to_ptr.vmem [resolvable:$true] %s107
    %111 = sst [smem:[#allocation16]] 384
    %s112 = scalar_lea.smem [#allocation16], 1
    %113 = sst [smem:[%s112]] 384
    %s114 = scalar_lea.smem [#allocation16], 2
    %115 = sst [smem:[%s114]] 3
    %s116 = scalar_lea.smem [#allocation16], 3
    %117 = sst [smem:[%s116]] 64
    %s118 = scalar_lea.smem [#allocation16], 4
    %119 = sst [smem:[%s118]] 128
    %s120 = scalar_lea.smem [#allocation16], 5
    %121 = sst [smem:[%s120]] 2
    %s122 = scalar_lea.smem [#allocation16], 6
    %123 = sst [smem:[%s122]] 192
    %s124 = scalar_lea.smem [#allocation16], 7
    %125 = sst [smem:[%s124]] 64
    %s126 = scalar_lea.smem [#allocation16], 8
    %127 = sst [smem:[%s126]] 4
    %129 = dma.general %s5, 6144, %s108, %s95, [#allocation15], [#allocation16], %s106, 0
    %v130 = vld [vmem:[#allocation6] sm:$0xff]
    %v131 = vld [vmem:[#allocation6 + $0x8] sm:$0xff]
    %v132 = vld [vmem:[#allocation6 + $0x10] sm:$0xff]
    %v133 = vld [vmem:[#allocation6 + $0x18] sm:$0xff]
    %v134 = vld [vmem:[#allocation6 + $0x20] sm:$0xff]
    %v135 = vld [vmem:[#allocation6 + $0x28] sm:$0xff]
    %v136 = vld [vmem:[#allocation6 + $0x30] sm:$0xff]
    %v137 = vld [vmem:[#allocation6 + $0x38] sm:$0xff]
    %v138 = vld [vmem:[#allocation6 + $0x40] sm:$0xff]
    %v139 = vld [vmem:[#allocation6 + $0x48] sm:$0xff]
    %v140 = vld [vmem:[#allocation6 + $0x50] sm:$0xff]
    %v141 = vld [vmem:[#allocation6 + $0x58] sm:$0xff]
    %v142 = vld [vmem:[#allocation6 + $0x60] sm:$0xff]
    %v143 = vld [vmem:[#allocation6 + $0x68] sm:$0xff]
    %v144 = vld [vmem:[#allocation6 + $0x70] sm:$0xff]
    %v145 = vld [vmem:[#allocation6 + $0x78] sm:$0xff]
    %v146 = vld [vmem:[#allocation9] sm:$0xff]
    %v147 = vld [vmem:[#allocation9 + $0x8] sm:$0xff]
    %v148 = vld [vmem:[#allocation9 + $0x10] sm:$0xff]
    %v149 = vld [vmem:[#allocation9 + $0x18] sm:$0xff]
    %v150 = vld [vmem:[#allocation9 + $0x20] sm:$0xff]
    %v151 = vld [vmem:[#allocation9 + $0x28] sm:$0xff]
    %v152 = vld [vmem:[#allocation9 + $0x30] sm:$0xff]
    %v153 = vld [vmem:[#allocation9 + $0x38] sm:$0xff]
    %v154 = vld [vmem:[#allocation9 + $0x40] sm:$0xff]
    %v155 = vld [vmem:[#allocation9 + $0x48] sm:$0xff]
    %v156 = vld [vmem:[#allocation9 + $0x50] sm:$0xff]
    %v157 = vld [vmem:[#allocation9 + $0x58] sm:$0xff]
    %v158 = vld [vmem:[#allocation9 + $0x60] sm:$0xff]
    %v159 = vld [vmem:[#allocation9 + $0x68] sm:$0xff]
    %v160 = vld [vmem:[#allocation9 + $0x70] sm:$0xff]
    %v161 = vld [vmem:[#allocation9 + $0x78] sm:$0xff]
    %v162 = vld [vmem:[#allocation9 + $0x80] sm:$0xff]
    %v163 = vld [vmem:[#allocation9 + $0x88] sm:$0xff]
    %v164 = vld [vmem:[#allocation9 + $0x90] sm:$0xff]
    %v165 = vld [vmem:[#allocation9 + $0x98] sm:$0xff]
    %v166 = vld [vmem:[#allocation9 + $0xa0] sm:$0xff]
    %v167 = vld [vmem:[#allocation9 + $0xa8] sm:$0xff]
    %v168 = vld [vmem:[#allocation9 + $0xb0] sm:$0xff]
    %v169 = vld [vmem:[#allocation9 + $0xb8] sm:$0xff]
    %v170 = vld [vmem:[#allocation9 + $0xc0] sm:$0xff]
    %v171 = vld [vmem:[#allocation9 + $0xc8] sm:$0xff]
    %v172 = vld [vmem:[#allocation9 + $0xd0] sm:$0xff]
    %v173 = vld [vmem:[#allocation9 + $0xd8] sm:$0xff]
    %v174 = vld [vmem:[#allocation9 + $0xe0] sm:$0xff]
    %v175 = vld [vmem:[#allocation9 + $0xe8] sm:$0xff]
    %v176 = vld [vmem:[#allocation9 + $0xf0] sm:$0xff]
    %v177 = vld [vmem:[#allocation9 + $0xf8] sm:$0xff]
    %v178 = vld [vmem:[#allocation9 + $0x100] sm:$0xff]
    %v179 = vld [vmem:[#allocation9 + $0x108] sm:$0xff]
    %v180 = vld [vmem:[#allocation9 + $0x110] sm:$0xff]
    %v181 = vld [vmem:[#allocation9 + $0x118] sm:$0xff]
    %v182 = vld [vmem:[#allocation9 + $0x120] sm:$0xff]
    %v183 = vld [vmem:[#allocation9 + $0x128] sm:$0xff]
    %v184 = vld [vmem:[#allocation9 + $0x130] sm:$0xff]
    %v185 = vld [vmem:[#allocation9 + $0x138] sm:$0xff]
    %v186 = vld [vmem:[#allocation9 + $0x140] sm:$0xff]
    %v187 = vld [vmem:[#allocation9 + $0x148] sm:$0xff]
    %v188 = vld [vmem:[#allocation9 + $0x150] sm:$0xff]
    %v189 = vld [vmem:[#allocation9 + $0x158] sm:$0xff]
    %v190 = vld [vmem:[#allocation9 + $0x160] sm:$0xff]
    %v191 = vld [vmem:[#allocation9 + $0x168] sm:$0xff]
    %v192 = vld [vmem:[#allocation9 + $0x170] sm:$0xff]
    %v193 = vld [vmem:[#allocation9 + $0x178] sm:$0xff]
    %v194 = vld [vmem:[#allocation9 + $0x180] sm:$0xff]
    %v195 = vld [vmem:[#allocation9 + $0x188] sm:$0xff]
    %v196 = vld [vmem:[#allocation9 + $0x190] sm:$0xff]
    %v197 = vld [vmem:[#allocation9 + $0x198] sm:$0xff]
    %v198 = vld [vmem:[#allocation9 + $0x1a0] sm:$0xff]
    %v199 = vld [vmem:[#allocation9 + $0x1a8] sm:$0xff]
    %v200 = vld [vmem:[#allocation9 + $0x1b0] sm:$0xff]
    %v201 = vld [vmem:[#allocation9 + $0x1b8] sm:$0xff]
    %v202 = vld [vmem:[#allocation9 + $0x1c0] sm:$0xff]
    %v203 = vld [vmem:[#allocation9 + $0x1c8] sm:$0xff]
    %v204 = vld [vmem:[#allocation9 + $0x1d0] sm:$0xff]
    %v205 = vld [vmem:[#allocation9 + $0x1d8] sm:$0xff]
    %v206 = vld [vmem:[#allocation9 + $0x1e0] sm:$0xff]
    %v207 = vld [vmem:[#allocation9 + $0x1e8] sm:$0xff]
    %v208 = vld [vmem:[#allocation9 + $0x1f0] sm:$0xff]
    %v209 = vld [vmem:[#allocation9 + $0x1f8] sm:$0xff]
    %v210 = vld [vmem:[#allocation9 + $0x200] sm:$0xff]
    %v211 = vld [vmem:[#allocation9 + $0x208] sm:$0xff]
    %v212 = vld [vmem:[#allocation9 + $0x210] sm:$0xff]
    %v213 = vld [vmem:[#allocation9 + $0x218] sm:$0xff]
    %v214 = vld [vmem:[#allocation9 + $0x220] sm:$0xff]
    %v215 = vld [vmem:[#allocation9 + $0x228] sm:$0xff]
    %v216 = vld [vmem:[#allocation9 + $0x230] sm:$0xff]
    %v217 = vld [vmem:[#allocation9 + $0x238] sm:$0xff]
    %v218 = vld [vmem:[#allocation9 + $0x240] sm:$0xff]
    %v219 = vld [vmem:[#allocation9 + $0x248] sm:$0xff]
    %v220 = vld [vmem:[#allocation9 + $0x250] sm:$0xff]
    %v221 = vld [vmem:[#allocation9 + $0x258] sm:$0xff]
    %v222 = vld [vmem:[#allocation9 + $0x260] sm:$0xff]
    %v223 = vld [vmem:[#allocation9 + $0x268] sm:$0xff]
    %v224 = vld [vmem:[#allocation9 + $0x270] sm:$0xff]
    %v225 = vld [vmem:[#allocation9 + $0x278] sm:$0xff]
    %v226 = vld [vmem:[#allocation9 + $0x280] sm:$0xff]
    %v227 = vld [vmem:[#allocation9 + $0x288] sm:$0xff]
    %v228 = vld [vmem:[#allocation9 + $0x290] sm:$0xff]
    %v229 = vld [vmem:[#allocation9 + $0x298] sm:$0xff]
    %v230 = vld [vmem:[#allocation9 + $0x2a0] sm:$0xff]
    %v231 = vld [vmem:[#allocation9 + $0x2a8] sm:$0xff]
    %v232 = vld [vmem:[#allocation9 + $0x2b0] sm:$0xff]
    %v233 = vld [vmem:[#allocation9 + $0x2b8] sm:$0xff]
    %v234 = vld [vmem:[#allocation9 + $0x2c0] sm:$0xff]
    %v235 = vld [vmem:[#allocation9 + $0x2c8] sm:$0xff]
    %v236 = vld [vmem:[#allocation9 + $0x2d0] sm:$0xff]
    %v237 = vld [vmem:[#allocation9 + $0x2d8] sm:$0xff]
    %v238 = vld [vmem:[#allocation9 + $0x2e0] sm:$0xff]
    %v239 = vld [vmem:[#allocation9 + $0x2e8] sm:$0xff]
    %v240 = vld [vmem:[#allocation9 + $0x2f0] sm:$0xff]
    %v241 = vld [vmem:[#allocation9 + $0x2f8] sm:$0xff]
    %v242 = vld [vmem:[#allocation9 + $0x300] sm:$0xff]
    %v243 = vld [vmem:[#allocation9 + $0x308] sm:$0xff]
    %v244 = vld [vmem:[#allocation9 + $0x310] sm:$0xff]
    %v245 = vld [vmem:[#allocation9 + $0x318] sm:$0xff]
    %v246 = vld [vmem:[#allocation9 + $0x320] sm:$0xff]
    %v247 = vld [vmem:[#allocation9 + $0x328] sm:$0xff]
    %v248 = vld [vmem:[#allocation9 + $0x330] sm:$0xff]
    %v249 = vld [vmem:[#allocation9 + $0x338] sm:$0xff]
    %v250 = vld [vmem:[#allocation9 + $0x340] sm:$0xff]
    %v251 = vld [vmem:[#allocation9 + $0x348] sm:$0xff]
    %v252 = vld [vmem:[#allocation9 + $0x350] sm:$0xff]
    %v253 = vld [vmem:[#allocation9 + $0x358] sm:$0xff]
    %v254 = vld [vmem:[#allocation9 + $0x360] sm:$0xff]
    %v255 = vld [vmem:[#allocation9 + $0x368] sm:$0xff]
    %v256 = vld [vmem:[#allocation9 + $0x370] sm:$0xff]
    %v257 = vld [vmem:[#allocation9 + $0x378] sm:$0xff]
    %v258 = vld [vmem:[#allocation9 + $0x380] sm:$0xff]
    %v259 = vld [vmem:[#allocation9 + $0x388] sm:$0xff]
    %v260 = vld [vmem:[#allocation9 + $0x390] sm:$0xff]
    %v261 = vld [vmem:[#allocation9 + $0x398] sm:$0xff]
    %v262 = vld [vmem:[#allocation9 + $0x3a0] sm:$0xff]
    %v263 = vld [vmem:[#allocation9 + $0x3a8] sm:$0xff]
    %v264 = vld [vmem:[#allocation9 + $0x3b0] sm:$0xff]
    %v265 = vld [vmem:[#allocation9 + $0x3b8] sm:$0xff]
    %v266 = vld [vmem:[#allocation9 + $0x3c0] sm:$0xff]
    %v267 = vld [vmem:[#allocation9 + $0x3c8] sm:$0xff]
    %v268 = vld [vmem:[#allocation9 + $0x3d0] sm:$0xff]
    %v269 = vld [vmem:[#allocation9 + $0x3d8] sm:$0xff]
    %v270 = vld [vmem:[#allocation9 + $0x3e0] sm:$0xff]
    %v271 = vld [vmem:[#allocation9 + $0x3e8] sm:$0xff]
    %v272 = vld [vmem:[#allocation9 + $0x3f0] sm:$0xff]
    %v273 = vld [vmem:[#allocation9 + $0x3f8] sm:$0xff]
    %v274 = vld [vmem:[#allocation9 + $0x400] sm:$0xff]
    %v275 = vld [vmem:[#allocation9 + $0x408] sm:$0xff]
    %v276 = vld [vmem:[#allocation9 + $0x410] sm:$0xff]
    %v277 = vld [vmem:[#allocation9 + $0x418] sm:$0xff]
    %v278 = vld [vmem:[#allocation9 + $0x420] sm:$0xff]
    %v279 = vld [vmem:[#allocation9 + $0x428] sm:$0xff]
    %v280 = vld [vmem:[#allocation9 + $0x430] sm:$0xff]
    %v281 = vld [vmem:[#allocation9 + $0x438] sm:$0xff]
    %v282 = vld [vmem:[#allocation9 + $0x440] sm:$0xff]
    %v283 = vld [vmem:[#allocation9 + $0x448] sm:$0xff]
    %v284 = vld [vmem:[#allocation9 + $0x450] sm:$0xff]
    %v285 = vld [vmem:[#allocation9 + $0x458] sm:$0xff]
    %v286 = vld [vmem:[#allocation9 + $0x460] sm:$0xff]
    %v287 = vld [vmem:[#allocation9 + $0x468] sm:$0xff]
    %v288 = vld [vmem:[#allocation9 + $0x470] sm:$0xff]
    %v289 = vld [vmem:[#allocation9 + $0x478] sm:$0xff]
    %v290 = vld [vmem:[#allocation9 + $0x480] sm:$0xff]
    %v291 = vld [vmem:[#allocation9 + $0x488] sm:$0xff]
    %v292 = vld [vmem:[#allocation9 + $0x490] sm:$0xff]
    %v293 = vld [vmem:[#allocation9 + $0x498] sm:$0xff]
    %v294 = vld [vmem:[#allocation9 + $0x4a0] sm:$0xff]
    %v295 = vld [vmem:[#allocation9 + $0x4a8] sm:$0xff]
    %v296 = vld [vmem:[#allocation9 + $0x4b0] sm:$0xff]
    %v297 = vld [vmem:[#allocation9 + $0x4b8] sm:$0xff]
    %v298 = vld [vmem:[#allocation9 + $0x4c0] sm:$0xff]
    %v299 = vld [vmem:[#allocation9 + $0x4c8] sm:$0xff]
    %v300 = vld [vmem:[#allocation9 + $0x4d0] sm:$0xff]
    %v301 = vld [vmem:[#allocation9 + $0x4d8] sm:$0xff]
    %v302 = vld [vmem:[#allocation9 + $0x4e0] sm:$0xff]
    %v303 = vld [vmem:[#allocation9 + $0x4e8] sm:$0xff]
    %v304 = vld [vmem:[#allocation9 + $0x4f0] sm:$0xff]
    %v305 = vld [vmem:[#allocation9 + $0x4f8] sm:$0xff]
    %v306 = vld [vmem:[#allocation9 + $0x500] sm:$0xff]
    %v307 = vld [vmem:[#allocation9 + $0x508] sm:$0xff]
    %v308 = vld [vmem:[#allocation9 + $0x510] sm:$0xff]
    %v309 = vld [vmem:[#allocation9 + $0x518] sm:$0xff]
    %v310 = vld [vmem:[#allocation9 + $0x520] sm:$0xff]
    %v311 = vld [vmem:[#allocation9 + $0x528] sm:$0xff]
    %v312 = vld [vmem:[#allocation9 + $0x530] sm:$0xff]
    %v313 = vld [vmem:[#allocation9 + $0x538] sm:$0xff]
    %v314 = vld [vmem:[#allocation9 + $0x540] sm:$0xff]
    %v315 = vld [vmem:[#allocation9 + $0x548] sm:$0xff]
    %v316 = vld [vmem:[#allocation9 + $0x550] sm:$0xff]
    %v317 = vld [vmem:[#allocation9 + $0x558] sm:$0xff]
    %v318 = vld [vmem:[#allocation9 + $0x560] sm:$0xff]
    %v319 = vld [vmem:[#allocation9 + $0x568] sm:$0xff]
    %v320 = vld [vmem:[#allocation9 + $0x570] sm:$0xff]
    %v321 = vld [vmem:[#allocation9 + $0x578] sm:$0xff]
    %v322 = vld [vmem:[#allocation9 + $0x580] sm:$0xff]
    %v323 = vld [vmem:[#allocation9 + $0x588] sm:$0xff]
    %v324 = vld [vmem:[#allocation9 + $0x590] sm:$0xff]
    %v325 = vld [vmem:[#allocation9 + $0x598] sm:$0xff]
    %v326 = vld [vmem:[#allocation9 + $0x5a0] sm:$0xff]
    %v327 = vld [vmem:[#allocation9 + $0x5a8] sm:$0xff]
    %v328 = vld [vmem:[#allocation9 + $0x5b0] sm:$0xff]
    %v329 = vld [vmem:[#allocation9 + $0x5b8] sm:$0xff]
    %v330 = vld [vmem:[#allocation9 + $0x5c0] sm:$0xff]
    %v331 = vld [vmem:[#allocation9 + $0x5c8] sm:$0xff]
    %v332 = vld [vmem:[#allocation9 + $0x5d0] sm:$0xff]
    %v333 = vld [vmem:[#allocation9 + $0x5d8] sm:$0xff]
    %v334 = vld [vmem:[#allocation9 + $0x5e0] sm:$0xff]
    %v335 = vld [vmem:[#allocation9 + $0x5e8] sm:$0xff]
    %v336 = vld [vmem:[#allocation9 + $0x5f0] sm:$0xff]
    %v337 = vld [vmem:[#allocation9 + $0x5f8] sm:$0xff]
    %v338 = vld [vmem:[#allocation9 + $0x600] sm:$0xff]
    %v339 = vld [vmem:[#allocation9 + $0x608] sm:$0xff]
    %v340 = vld [vmem:[#allocation9 + $0x610] sm:$0xff]
    %v341 = vld [vmem:[#allocation9 + $0x618] sm:$0xff]
    %v342 = vld [vmem:[#allocation9 + $0x620] sm:$0xff]
    %v343 = vld [vmem:[#allocation9 + $0x628] sm:$0xff]
    %v344 = vld [vmem:[#allocation9 + $0x630] sm:$0xff]
    %v345 = vld [vmem:[#allocation9 + $0x638] sm:$0xff]
    %v346 = vld [vmem:[#allocation9 + $0x640] sm:$0xff]
    %v347 = vld [vmem:[#allocation9 + $0x648] sm:$0xff]
    %v348 = vld [vmem:[#allocation9 + $0x650] sm:$0xff]
    %v349 = vld [vmem:[#allocation9 + $0x658] sm:$0xff]
    %v350 = vld [vmem:[#allocation9 + $0x660] sm:$0xff]
    %v351 = vld [vmem:[#allocation9 + $0x668] sm:$0xff]
    %v352 = vld [vmem:[#allocation9 + $0x670] sm:$0xff]
    %v353 = vld [vmem:[#allocation9 + $0x678] sm:$0xff]
    %v354 = vld [vmem:[#allocation9 + $0x680] sm:$0xff]
    %v355 = vld [vmem:[#allocation9 + $0x688] sm:$0xff]
    %v356 = vld [vmem:[#allocation9 + $0x690] sm:$0xff]
    %v357 = vld [vmem:[#allocation9 + $0x698] sm:$0xff]
    %v358 = vld [vmem:[#allocation9 + $0x6a0] sm:$0xff]
    %v359 = vld [vmem:[#allocation9 + $0x6a8] sm:$0xff]
    %v360 = vld [vmem:[#allocation9 + $0x6b0] sm:$0xff]
    %v361 = vld [vmem:[#allocation9 + $0x6b8] sm:$0xff]
    %v362 = vld [vmem:[#allocation9 + $0x6c0] sm:$0xff]
    %v363 = vld [vmem:[#allocation9 + $0x6c8] sm:$0xff]
    %v364 = vld [vmem:[#allocation9 + $0x6d0] sm:$0xff]
    %v365 = vld [vmem:[#allocation9 + $0x6d8] sm:$0xff]
    %v366 = vld [vmem:[#allocation9 + $0x6e0] sm:$0xff]
    %v367 = vld [vmem:[#allocation9 + $0x6e8] sm:$0xff]
    %v368 = vld [vmem:[#allocation9 + $0x6f0] sm:$0xff]
    %v369 = vld [vmem:[#allocation9 + $0x6f8] sm:$0xff]
    %v370 = vld [vmem:[#allocation9 + $0x700] sm:$0xff]
    %v371 = vld [vmem:[#allocation9 + $0x708] sm:$0xff]
    %v372 = vld [vmem:[#allocation9 + $0x710] sm:$0xff]
    %v373 = vld [vmem:[#allocation9 + $0x718] sm:$0xff]
    %v374 = vld [vmem:[#allocation9 + $0x720] sm:$0xff]
    %v375 = vld [vmem:[#allocation9 + $0x728] sm:$0xff]
    %v376 = vld [vmem:[#allocation9 + $0x730] sm:$0xff]
    %v377 = vld [vmem:[#allocation9 + $0x738] sm:$0xff]
    %v378 = vld [vmem:[#allocation9 + $0x740] sm:$0xff]
    %v379 = vld [vmem:[#allocation9 + $0x748] sm:$0xff]
    %v380 = vld [vmem:[#allocation9 + $0x750] sm:$0xff]
    %v381 = vld [vmem:[#allocation9 + $0x758] sm:$0xff]
    %v382 = vld [vmem:[#allocation9 + $0x760] sm:$0xff]
    %v383 = vld [vmem:[#allocation9 + $0x768] sm:$0xff]
    %v384 = vld [vmem:[#allocation9 + $0x770] sm:$0xff]
    %v385 = vld [vmem:[#allocation9 + $0x778] sm:$0xff]
    %v386 = vld [vmem:[#allocation9 + $0x780] sm:$0xff]
    %v387 = vld [vmem:[#allocation9 + $0x788] sm:$0xff]
    %v388 = vld [vmem:[#allocation9 + $0x790] sm:$0xff]
    %v389 = vld [vmem:[#allocation9 + $0x798] sm:$0xff]
    %v390 = vld [vmem:[#allocation9 + $0x7a0] sm:$0xff]
    %v391 = vld [vmem:[#allocation9 + $0x7a8] sm:$0xff]
    %v392 = vld [vmem:[#allocation9 + $0x7b0] sm:$0xff]
    %v393 = vld [vmem:[#allocation9 + $0x7b8] sm:$0xff]
    %v394 = vld [vmem:[#allocation9 + $0x7c0] sm:$0xff]
    %v395 = vld [vmem:[#allocation9 + $0x7c8] sm:$0xff]
    %v396 = vld [vmem:[#allocation9 + $0x7d0] sm:$0xff]
    %v397 = vld [vmem:[#allocation9 + $0x7d8] sm:$0xff]
    %v398 = vld [vmem:[#allocation9 + $0x7e0] sm:$0xff]
    %v399 = vld [vmem:[#allocation9 + $0x7e8] sm:$0xff]
    %v400 = vld [vmem:[#allocation9 + $0x7f0] sm:$0xff]
    %v401 = vld [vmem:[#allocation9 + $0x7f8] sm:$0xff]
    %v402 = vld [vmem:[#allocation11] sm:$0xff]
    %v404 = vlaneseq
    %v405 = vshrl.u32 %v404, 7
    %v406 = vsub.s32 0, %v405
    %v407 = vrot.slane %v402, %v406
    %v408 = vlaneseq
    %v409 = vshrl.u32 %v408, 7
    %v410 = vsub.s32 1, %v409
    %v411 = vrot.slane %v402, %v410
    %v412 = vlaneseq
    %v413 = vshrl.u32 %v412, 7
    %v414 = vsub.s32 2, %v413
    %v415 = vrot.slane %v402, %v414
    %v416 = vlaneseq
    %v417 = vshrl.u32 %v416, 7
    %v418 = vsub.s32 3, %v417
    %v419 = vrot.slane %v402, %v418
    %v420 = vlaneseq
    %v421 = vshrl.u32 %v420, 7
    %v422 = vsub.s32 4, %v421
    %v423 = vrot.slane %v402, %v422
    %v424 = vlaneseq
    %v425 = vshrl.u32 %v424, 7
    %v426 = vsub.s32 5, %v425
    %v427 = vrot.slane %v402, %v426
    %v428 = vlaneseq
    %v429 = vshrl.u32 %v428, 7
    %v430 = vsub.s32 6, %v429
    %v431 = vrot.slane %v402, %v430
    %v432 = vlaneseq
    %v433 = vshrl.u32 %v432, 7
    %v434 = vsub.s32 7, %v433
    %v435 = vrot.slane %v402, %v434
    %v460 = vunpack.c.l.b16 %v130
    %v461 = vunpack.c.h.b16 %v130
    %v462 = vunpack.c.l.b16 %v131
    %v463 = vunpack.c.h.b16 %v131
    %v464 = vunpack.c.l.b16 %v132
    %v465 = vunpack.c.h.b16 %v132
    %v466 = vunpack.c.l.b16 %v133
    %v467 = vunpack.c.h.b16 %v133
    %v468 = vunpack.c.l.b16 %v134
    %v469 = vunpack.c.h.b16 %v134
    %v470 = vunpack.c.l.b16 %v135
    %v471 = vunpack.c.h.b16 %v135
    %v472 = vunpack.c.l.b16 %v136
    %v473 = vunpack.c.h.b16 %v136
    %v474 = vunpack.c.l.b16 %v137
    %v475 = vunpack.c.h.b16 %v137
    %v476 = vunpack.c.l.b16 %v138
    %v477 = vunpack.c.h.b16 %v138
    %v478 = vunpack.c.l.b16 %v139
    %v479 = vunpack.c.h.b16 %v139
    %v480 = vunpack.c.l.b16 %v140
    %v481 = vunpack.c.h.b16 %v140
    %v482 = vunpack.c.l.b16 %v141
    %v483 = vunpack.c.h.b16 %v141
    %v484 = vunpack.c.l.b16 %v142
    %v485 = vunpack.c.h.b16 %v142
    %v486 = vunpack.c.l.b16 %v143
    %v487 = vunpack.c.h.b16 %v143
    %v488 = vunpack.c.l.b16 %v144
    %v489 = vunpack.c.h.b16 %v144
    %v490 = vunpack.c.l.b16 %v145
    %v491 = vunpack.c.h.b16 %v145
    %v492 = vpack.c.b16 %v464, %v460
    %v493 = vpack.c.b16 %v465, %v461
    %v494 = vpack.c.b16 %v466, %v462
    %v495 = vpack.c.b16 %v467, %v463
    %v496 = vpack.c.b16 %v472, %v468
    %v497 = vpack.c.b16 %v473, %v469
    %v498 = vpack.c.b16 %v474, %v470
    %v499 = vpack.c.b16 %v475, %v471
    %v500 = vpack.c.b16 %v480, %v476
    %v501 = vpack.c.b16 %v481, %v477
    %v502 = vpack.c.b16 %v482, %v478
    %v503 = vpack.c.b16 %v483, %v479
    %v504 = vpack.c.b16 %v488, %v484
    %v505 = vpack.c.b16 %v489, %v485
    %v506 = vpack.c.b16 %v490, %v486
    %v507 = vpack.c.b16 %v491, %v487
    %v780 = vunpack.c.l.b16 %v146
    %v781 = vunpack.c.h.b16 %v146
    %v782 = vunpack.c.l.b16 %v147
    %v783 = vunpack.c.h.b16 %v147
    %v784 = vunpack.c.l.b16 %v148
    %v785 = vunpack.c.h.b16 %v148
    %v786 = vunpack.c.l.b16 %v149
    %v787 = vunpack.c.h.b16 %v149
    %v788 = vunpack.c.l.b16 %v150
    %v789 = vunpack.c.h.b16 %v150
    %v790 = vunpack.c.l.b16 %v151
    %v791 = vunpack.c.h.b16 %v151
    %v792 = vunpack.c.l.b16 %v152
    %v793 = vunpack.c.h.b16 %v152
    %v794 = vunpack.c.l.b16 %v153
    %v795 = vunpack.c.h.b16 %v153
    %v796 = vunpack.c.l.b16 %v154
    %v797 = vunpack.c.h.b16 %v154
    %v798 = vunpack.c.l.b16 %v155
    %v799 = vunpack.c.h.b16 %v155
    %v800 = vunpack.c.l.b16 %v156
    %v801 = vunpack.c.h.b16 %v156
    %v802 = vunpack.c.l.b16 %v157
    %v803 = vunpack.c.h.b16 %v157
    %v804 = vunpack.c.l.b16 %v158
    %v805 = vunpack.c.h.b16 %v158
    %v806 = vunpack.c.l.b16 %v159
    %v807 = vunpack.c.h.b16 %v159
    %v808 = vunpack.c.l.b16 %v160
    %v809 = vunpack.c.h.b16 %v160
    %v810 = vunpack.c.l.b16 %v161
    %v811 = vunpack.c.h.b16 %v161
    %v812 = vunpack.c.l.b16 %v162
    %v813 = vunpack.c.h.b16 %v162
    %v814 = vunpack.c.l.b16 %v163
    %v815 = vunpack.c.h.b16 %v163
    %v816 = vunpack.c.l.b16 %v164
    %v817 = vunpack.c.h.b16 %v164
    %v818 = vunpack.c.l.b16 %v165
    %v819 = vunpack.c.h.b16 %v165
    %v820 = vunpack.c.l.b16 %v166
    %v821 = vunpack.c.h.b16 %v166
    %v822 = vunpack.c.l.b16 %v167
    %v823 = vunpack.c.h.b16 %v167
    %v824 = vunpack.c.l.b16 %v168
    %v825 = vunpack.c.h.b16 %v168
    %v826 = vunpack.c.l.b16 %v169
    %v827 = vunpack.c.h.b16 %v169
    %v828 = vunpack.c.l.b16 %v170
    %v829 = vunpack.c.h.b16 %v170
    %v830 = vunpack.c.l.b16 %v171
    %v831 = vunpack.c.h.b16 %v171
    %v832 = vunpack.c.l.b16 %v172
    %v833 = vunpack.c.h.b16 %v172
    %v834 = vunpack.c.l.b16 %v173
    %v835 = vunpack.c.h.b16 %v173
    %v836 = vunpack.c.l.b16 %v174
    %v837 = vunpack.c.h.b16 %v174
    %v838 = vunpack.c.l.b16 %v175
    %v839 = vunpack.c.h.b16 %v175
    %v840 = vunpack.c.l.b16 %v176
    %v841 = vunpack.c.h.b16 %v176
    %v842 = vunpack.c.l.b16 %v177
    %v843 = vunpack.c.h.b16 %v177
    %v844 = vunpack.c.l.b16 %v178
    %v845 = vunpack.c.h.b16 %v178
    %v846 = vunpack.c.l.b16 %v179
    %v847 = vunpack.c.h.b16 %v179
    %v848 = vunpack.c.l.b16 %v180
    %v849 = vunpack.c.h.b16 %v180
    %v850 = vunpack.c.l.b16 %v181
    %v851 = vunpack.c.h.b16 %v181
    %v852 = vunpack.c.l.b16 %v182
    %v853 = vunpack.c.h.b16 %v182
    %v854 = vunpack.c.l.b16 %v183
    %v855 = vunpack.c.h.b16 %v183
    %v856 = vunpack.c.l.b16 %v184
    %v857 = vunpack.c.h.b16 %v184
    %v858 = vunpack.c.l.b16 %v185
    %v859 = vunpack.c.h.b16 %v185
    %v860 = vunpack.c.l.b16 %v186
    %v861 = vunpack.c.h.b16 %v186
    %v862 = vunpack.c.l.b16 %v187
    %v863 = vunpack.c.h.b16 %v187
    %v864 = vunpack.c.l.b16 %v188
    %v865 = vunpack.c.h.b16 %v188
    %v866 = vunpack.c.l.b16 %v189
    %v867 = vunpack.c.h.b16 %v189
    %v868 = vunpack.c.l.b16 %v190
    %v869 = vunpack.c.h.b16 %v190
    %v870 = vunpack.c.l.b16 %v191
    %v871 = vunpack.c.h.b16 %v191
    %v872 = vunpack.c.l.b16 %v192
    %v873 = vunpack.c.h.b16 %v192
    %v874 = vunpack.c.l.b16 %v193
    %v875 = vunpack.c.h.b16 %v193
    %v876 = vunpack.c.l.b16 %v194
    %v877 = vunpack.c.h.b16 %v194
    %v878 = vunpack.c.l.b16 %v195
    %v879 = vunpack.c.h.b16 %v195
    %v880 = vunpack.c.l.b16 %v196
    %v881 = vunpack.c.h.b16 %v196
    %v882 = vunpack.c.l.b16 %v197
    %v883 = vunpack.c.h.b16 %v197
    %v884 = vunpack.c.l.b16 %v198
    %v885 = vunpack.c.h.b16 %v198
    %v886 = vunpack.c.l.b16 %v199
    %v887 = vunpack.c.h.b16 %v199
    %v888 = vunpack.c.l.b16 %v200
    %v889 = vunpack.c.h.b16 %v200
    %v890 = vunpack.c.l.b16 %v201
    %v891 = vunpack.c.h.b16 %v201
    %v892 = vunpack.c.l.b16 %v202
    %v893 = vunpack.c.h.b16 %v202
    %v894 = vunpack.c.l.b16 %v203
    %v895 = vunpack.c.h.b16 %v203
    %v896 = vunpack.c.l.b16 %v204
    %v897 = vunpack.c.h.b16 %v204
    %v898 = vunpack.c.l.b16 %v205
    %v899 = vunpack.c.h.b16 %v205
    %v900 = vunpack.c.l.b16 %v206
    %v901 = vunpack.c.h.b16 %v206
    %v902 = vunpack.c.l.b16 %v207
    %v903 = vunpack.c.h.b16 %v207
    %v904 = vunpack.c.l.b16 %v208
    %v905 = vunpack.c.h.b16 %v208
    %v906 = vunpack.c.l.b16 %v209
    %v907 = vunpack.c.h.b16 %v209
    %v908 = vunpack.c.l.b16 %v210
    %v909 = vunpack.c.h.b16 %v210
    %v910 = vunpack.c.l.b16 %v211
    %v911 = vunpack.c.h.b16 %v211
    %v912 = vunpack.c.l.b16 %v212
    %v913 = vunpack.c.h.b16 %v212
    %v914 = vunpack.c.l.b16 %v213
    %v915 = vunpack.c.h.b16 %v213
    %v916 = vunpack.c.l.b16 %v214
    %v917 = vunpack.c.h.b16 %v214
    %v918 = vunpack.c.l.b16 %v215
    %v919 = vunpack.c.h.b16 %v215
    %v920 = vunpack.c.l.b16 %v216
    %v921 = vunpack.c.h.b16 %v216
    %v922 = vunpack.c.l.b16 %v217
    %v923 = vunpack.c.h.b16 %v217
    %v924 = vunpack.c.l.b16 %v218
    %v925 = vunpack.c.h.b16 %v218
    %v926 = vunpack.c.l.b16 %v219
    %v927 = vunpack.c.h.b16 %v219
    %v928 = vunpack.c.l.b16 %v220
    %v929 = vunpack.c.h.b16 %v220
    %v930 = vunpack.c.l.b16 %v221
    %v931 = vunpack.c.h.b16 %v221
    %v932 = vunpack.c.l.b16 %v222
    %v933 = vunpack.c.h.b16 %v222
    %v934 = vunpack.c.l.b16 %v223
    %v935 = vunpack.c.h.b16 %v223
    %v936 = vunpack.c.l.b16 %v224
    %v937 = vunpack.c.h.b16 %v224
    %v938 = vunpack.c.l.b16 %v225
    %v939 = vunpack.c.h.b16 %v225
    %v940 = vunpack.c.l.b16 %v226
    %v941 = vunpack.c.h.b16 %v226
    %v942 = vunpack.c.l.b16 %v227
    %v943 = vunpack.c.h.b16 %v227
    %v944 = vunpack.c.l.b16 %v228
    %v945 = vunpack.c.h.b16 %v228
    %v946 = vunpack.c.l.b16 %v229
    %v947 = vunpack.c.h.b16 %v229
    %v948 = vunpack.c.l.b16 %v230
    %v949 = vunpack.c.h.b16 %v230
    %v950 = vunpack.c.l.b16 %v231
    %v951 = vunpack.c.h.b16 %v231
    %v952 = vunpack.c.l.b16 %v232
    %v953 = vunpack.c.h.b16 %v232
    %v954 = vunpack.c.l.b16 %v233
    %v955 = vunpack.c.h.b16 %v233
    %v956 = vunpack.c.l.b16 %v234
    %v957 = vunpack.c.h.b16 %v234
    %v958 = vunpack.c.l.b16 %v235
    %v959 = vunpack.c.h.b16 %v235
    %v960 = vunpack.c.l.b16 %v236
    %v961 = vunpack.c.h.b16 %v236
    %v962 = vunpack.c.l.b16 %v237
    %v963 = vunpack.c.h.b16 %v237
    %v964 = vunpack.c.l.b16 %v238
    %v965 = vunpack.c.h.b16 %v238
    %v966 = vunpack.c.l.b16 %v239
    %v967 = vunpack.c.h.b16 %v239
    %v968 = vunpack.c.l.b16 %v240
    %v969 = vunpack.c.h.b16 %v240
    %v970 = vunpack.c.l.b16 %v241
    %v971 = vunpack.c.h.b16 %v241
    %v972 = vunpack.c.l.b16 %v242
    %v973 = vunpack.c.h.b16 %v242
    %v974 = vunpack.c.l.b16 %v243
    %v975 = vunpack.c.h.b16 %v243
    %v976 = vunpack.c.l.b16 %v244
    %v977 = vunpack.c.h.b16 %v244
    %v978 = vunpack.c.l.b16 %v245
    %v979 = vunpack.c.h.b16 %v245
    %v980 = vunpack.c.l.b16 %v246
    %v981 = vunpack.c.h.b16 %v246
    %v982 = vunpack.c.l.b16 %v247
    %v983 = vunpack.c.h.b16 %v247
    %v984 = vunpack.c.l.b16 %v248
    %v985 = vunpack.c.h.b16 %v248
    %v986 = vunpack.c.l.b16 %v249
    %v987 = vunpack.c.h.b16 %v249
    %v988 = vunpack.c.l.b16 %v250
    %v989 = vunpack.c.h.b16 %v250
    %v990 = vunpack.c.l.b16 %v251
    %v991 = vunpack.c.h.b16 %v251
    %v992 = vunpack.c.l.b16 %v252
    %v993 = vunpack.c.h.b16 %v252
    %v994 = vunpack.c.l.b16 %v253
    %v995 = vunpack.c.h.b16 %v253
    %v996 = vunpack.c.l.b16 %v254
    %v997 = vunpack.c.h.b16 %v254
    %v998 = vunpack.c.l.b16 %v255
    %v999 = vunpack.c.h.b16 %v255
    %v1000 = vunpack.c.l.b16 %v256
    %v1001 = vunpack.c.h.b16 %v256
    %v1002 = vunpack.c.l.b16 %v257
    %v1003 = vunpack.c.h.b16 %v257
    %v1004 = vunpack.c.l.b16 %v258
    %v1005 = vunpack.c.h.b16 %v258
    %v1006 = vunpack.c.l.b16 %v259
    %v1007 = vunpack.c.h.b16 %v259
    %v1008 = vunpack.c.l.b16 %v260
    %v1009 = vunpack.c.h.b16 %v260
    %v1010 = vunpack.c.l.b16 %v261
    %v1011 = vunpack.c.h.b16 %v261
    %v1012 = vunpack.c.l.b16 %v262
    %v1013 = vunpack.c.h.b16 %v262
    %v1014 = vunpack.c.l.b16 %v263
    %v1015 = vunpack.c.h.b16 %v263
    %v1016 = vunpack.c.l.b16 %v264
    %v1017 = vunpack.c.h.b16 %v264
    %v1018 = vunpack.c.l.b16 %v265
    %v1019 = vunpack.c.h.b16 %v265
    %v1020 = vunpack.c.l.b16 %v266
    %v1021 = vunpack.c.h.b16 %v266
    %v1022 = vunpack.c.l.b16 %v267
    %v1023 = vunpack.c.h.b16 %v267
    %v1024 = vunpack.c.l.b16 %v268
    %v1025 = vunpack.c.h.b16 %v268
    %v1026 = vunpack.c.l.b16 %v269
    %v1027 = vunpack.c.h.b16 %v269
    %v1028 = vunpack.c.l.b16 %v270
    %v1029 = vunpack.c.h.b16 %v270
    %v1030 = vunpack.c.l.b16 %v271
    %v1031 = vunpack.c.h.b16 %v271
    %v1032 = vunpack.c.l.b16 %v272
    %v1033 = vunpack.c.h.b16 %v272
    %v1034 = vunpack.c.l.b16 %v273
    %v1035 = vunpack.c.h.b16 %v273
    %v1036 = vunpack.c.l.b16 %v274
    %v1037 = vunpack.c.h.b16 %v274
    %v1038 = vunpack.c.l.b16 %v275
    %v1039 = vunpack.c.h.b16 %v275
    %v1040 = vunpack.c.l.b16 %v276
    %v1041 = vunpack.c.h.b16 %v276
    %v1042 = vunpack.c.l.b16 %v277
    %v1043 = vunpack.c.h.b16 %v277
    %v1044 = vunpack.c.l.b16 %v278
    %v1045 = vunpack.c.h.b16 %v278
    %v1046 = vunpack.c.l.b16 %v279
    %v1047 = vunpack.c.h.b16 %v279
    %v1048 = vunpack.c.l.b16 %v280
    %v1049 = vunpack.c.h.b16 %v280
    %v1050 = vunpack.c.l.b16 %v281
    %v1051 = vunpack.c.h.b16 %v281
    %v1052 = vunpack.c.l.b16 %v282
    %v1053 = vunpack.c.h.b16 %v282
    %v1054 = vunpack.c.l.b16 %v283
    %v1055 = vunpack.c.h.b16 %v283
    %v1056 = vunpack.c.l.b16 %v284
    %v1057 = vunpack.c.h.b16 %v284
    %v1058 = vunpack.c.l.b16 %v285
    %v1059 = vunpack.c.h.b16 %v285
    %v1060 = vunpack.c.l.b16 %v286
    %v1061 = vunpack.c.h.b16 %v286
    %v1062 = vunpack.c.l.b16 %v287
    %v1063 = vunpack.c.h.b16 %v287
    %v1064 = vunpack.c.l.b16 %v288
    %v1065 = vunpack.c.h.b16 %v288
    %v1066 = vunpack.c.l.b16 %v289
    %v1067 = vunpack.c.h.b16 %v289
    %v1068 = vunpack.c.l.b16 %v290
    %v1069 = vunpack.c.h.b16 %v290
    %v1070 = vunpack.c.l.b16 %v291
    %v1071 = vunpack.c.h.b16 %v291
    %v1072 = vunpack.c.l.b16 %v292
    %v1073 = vunpack.c.h.b16 %v292
    %v1074 = vunpack.c.l.b16 %v293
    %v1075 = vunpack.c.h.b16 %v293
    %v1076 = vunpack.c.l.b16 %v294
    %v1077 = vunpack.c.h.b16 %v294
    %v1078 = vunpack.c.l.b16 %v295
    %v1079 = vunpack.c.h.b16 %v295
    %v1080 = vunpack.c.l.b16 %v296
    %v1081 = vunpack.c.h.b16 %v296
    %v1082 = vunpack.c.l.b16 %v297
    %v1083 = vunpack.c.h.b16 %v297
    %v1084 = vunpack.c.l.b16 %v298
    %v1085 = vunpack.c.h.b16 %v298
    %v1086 = vunpack.c.l.b16 %v299
    %v1087 = vunpack.c.h.b16 %v299
    %v1088 = vunpack.c.l.b16 %v300
    %v1089 = vunpack.c.h.b16 %v300
    %v1090 = vunpack.c.l.b16 %v301
    %v1091 = vunpack.c.h.b16 %v301
    %v1092 = vunpack.c.l.b16 %v302
    %v1093 = vunpack.c.h.b16 %v302
    %v1094 = vunpack.c.l.b16 %v303
    %v1095 = vunpack.c.h.b16 %v303
    %v1096 = vunpack.c.l.b16 %v304
    %v1097 = vunpack.c.h.b16 %v304
    %v1098 = vunpack.c.l.b16 %v305
    %v1099 = vunpack.c.h.b16 %v305
    %v1100 = vunpack.c.l.b16 %v306
    %v1101 = vunpack.c.h.b16 %v306
    %v1102 = vunpack.c.l.b16 %v307
    %v1103 = vunpack.c.h.b16 %v307
    %v1104 = vunpack.c.l.b16 %v308
    %v1105 = vunpack.c.h.b16 %v308
    %v1106 = vunpack.c.l.b16 %v309
    %v1107 = vunpack.c.h.b16 %v309
    %v1108 = vunpack.c.l.b16 %v310
    %v1109 = vunpack.c.h.b16 %v310
    %v1110 = vunpack.c.l.b16 %v311
    %v1111 = vunpack.c.h.b16 %v311
    %v1112 = vunpack.c.l.b16 %v312
    %v1113 = vunpack.c.h.b16 %v312
    %v1114 = vunpack.c.l.b16 %v313
    %v1115 = vunpack.c.h.b16 %v313
    %v1116 = vunpack.c.l.b16 %v314
    %v1117 = vunpack.c.h.b16 %v314
    %v1118 = vunpack.c.l.b16 %v315
    %v1119 = vunpack.c.h.b16 %v315
    %v1120 = vunpack.c.l.b16 %v316
    %v1121 = vunpack.c.h.b16 %v316
    %v1122 = vunpack.c.l.b16 %v317
    %v1123 = vunpack.c.h.b16 %v317
    %v1124 = vunpack.c.l.b16 %v318
    %v1125 = vunpack.c.h.b16 %v318
    %v1126 = vunpack.c.l.b16 %v319
    %v1127 = vunpack.c.h.b16 %v319
    %v1128 = vunpack.c.l.b16 %v320
    %v1129 = vunpack.c.h.b16 %v320
    %v1130 = vunpack.c.l.b16 %v321
    %v1131 = vunpack.c.h.b16 %v321
    %v1132 = vunpack.c.l.b16 %v322
    %v1133 = vunpack.c.h.b16 %v322
    %v1134 = vunpack.c.l.b16 %v323
    %v1135 = vunpack.c.h.b16 %v323
    %v1136 = vunpack.c.l.b16 %v324
    %v1137 = vunpack.c.h.b16 %v324
    %v1138 = vunpack.c.l.b16 %v325
    %v1139 = vunpack.c.h.b16 %v325
    %v1140 = vunpack.c.l.b16 %v326
    %v1141 = vunpack.c.h.b16 %v326
    %v1142 = vunpack.c.l.b16 %v327
    %v1143 = vunpack.c.h.b16 %v327
    %v1144 = vunpack.c.l.b16 %v328
    %v1145 = vunpack.c.h.b16 %v328
    %v1146 = vunpack.c.l.b16 %v329
    %v1147 = vunpack.c.h.b16 %v329
    %v1148 = vunpack.c.l.b16 %v330
    %v1149 = vunpack.c.h.b16 %v330
    %v1150 = vunpack.c.l.b16 %v331
    %v1151 = vunpack.c.h.b16 %v331
    %v1152 = vunpack.c.l.b16 %v332
    %v1153 = vunpack.c.h.b16 %v332
    %v1154 = vunpack.c.l.b16 %v333
    %v1155 = vunpack.c.h.b16 %v333
    %v1156 = vunpack.c.l.b16 %v334
    %v1157 = vunpack.c.h.b16 %v334
    %v1158 = vunpack.c.l.b16 %v335
    %v1159 = vunpack.c.h.b16 %v335
    %v1160 = vunpack.c.l.b16 %v336
    %v1161 = vunpack.c.h.b16 %v336
    %v1162 = vunpack.c.l.b16 %v337
    %v1163 = vunpack.c.h.b16 %v337
    %v1164 = vunpack.c.l.b16 %v338
    %v1165 = vunpack.c.h.b16 %v338
    %v1166 = vunpack.c.l.b16 %v339
    %v1167 = vunpack.c.h.b16 %v339
    %v1168 = vunpack.c.l.b16 %v340
    %v1169 = vunpack.c.h.b16 %v340
    %v1170 = vunpack.c.l.b16 %v341
    %v1171 = vunpack.c.h.b16 %v341
    %v1172 = vunpack.c.l.b16 %v342
    %v1173 = vunpack.c.h.b16 %v342
    %v1174 = vunpack.c.l.b16 %v343
    %v1175 = vunpack.c.h.b16 %v343
    %v1176 = vunpack.c.l.b16 %v344
    %v1177 = vunpack.c.h.b16 %v344
    %v1178 = vunpack.c.l.b16 %v345
    %v1179 = vunpack.c.h.b16 %v345
    %v1180 = vunpack.c.l.b16 %v346
    %v1181 = vunpack.c.h.b16 %v346
    %v1182 = vunpack.c.l.b16 %v347
    %v1183 = vunpack.c.h.b16 %v347
    %v1184 = vunpack.c.l.b16 %v348
    %v1185 = vunpack.c.h.b16 %v348
    %v1186 = vunpack.c.l.b16 %v349
    %v1187 = vunpack.c.h.b16 %v349
    %v1188 = vunpack.c.l.b16 %v350
    %v1189 = vunpack.c.h.b16 %v350
    %v1190 = vunpack.c.l.b16 %v351
    %v1191 = vunpack.c.h.b16 %v351
    %v1192 = vunpack.c.l.b16 %v352
    %v1193 = vunpack.c.h.b16 %v352
    %v1194 = vunpack.c.l.b16 %v353
    %v1195 = vunpack.c.h.b16 %v353
    %v1196 = vunpack.c.l.b16 %v354
    %v1197 = vunpack.c.h.b16 %v354
    %v1198 = vunpack.c.l.b16 %v355
    %v1199 = vunpack.c.h.b16 %v355
    %v1200 = vunpack.c.l.b16 %v356
    %v1201 = vunpack.c.h.b16 %v356
    %v1202 = vunpack.c.l.b16 %v357
    %v1203 = vunpack.c.h.b16 %v357
    %v1204 = vunpack.c.l.b16 %v358
    %v1205 = vunpack.c.h.b16 %v358
    %v1206 = vunpack.c.l.b16 %v359
    %v1207 = vunpack.c.h.b16 %v359
    %v1208 = vunpack.c.l.b16 %v360
    %v1209 = vunpack.c.h.b16 %v360
    %v1210 = vunpack.c.l.b16 %v361
    %v1211 = vunpack.c.h.b16 %v361
    %v1212 = vunpack.c.l.b16 %v362
    %v1213 = vunpack.c.h.b16 %v362
    %v1214 = vunpack.c.l.b16 %v363
    %v1215 = vunpack.c.h.b16 %v363
    %v1216 = vunpack.c.l.b16 %v364
    %v1217 = vunpack.c.h.b16 %v364
    %v1218 = vunpack.c.l.b16 %v365
    %v1219 = vunpack.c.h.b16 %v365
    %v1220 = vunpack.c.l.b16 %v366
    %v1221 = vunpack.c.h.b16 %v366
    %v1222 = vunpack.c.l.b16 %v367
    %v1223 = vunpack.c.h.b16 %v367
    %v1224 = vunpack.c.l.b16 %v368
    %v1225 = vunpack.c.h.b16 %v368
    %v1226 = vunpack.c.l.b16 %v369
    %v1227 = vunpack.c.h.b16 %v369
    %v1228 = vunpack.c.l.b16 %v370
    %v1229 = vunpack.c.h.b16 %v370
    %v1230 = vunpack.c.l.b16 %v371
    %v1231 = vunpack.c.h.b16 %v371
    %v1232 = vunpack.c.l.b16 %v372
    %v1233 = vunpack.c.h.b16 %v372
    %v1234 = vunpack.c.l.b16 %v373
    %v1235 = vunpack.c.h.b16 %v373
    %v1236 = vunpack.c.l.b16 %v374
    %v1237 = vunpack.c.h.b16 %v374
    %v1238 = vunpack.c.l.b16 %v375
    %v1239 = vunpack.c.h.b16 %v375
    %v1240 = vunpack.c.l.b16 %v376
    %v1241 = vunpack.c.h.b16 %v376
    %v1242 = vunpack.c.l.b16 %v377
    %v1243 = vunpack.c.h.b16 %v377
    %v1244 = vunpack.c.l.b16 %v378
    %v1245 = vunpack.c.h.b16 %v378
    %v1246 = vunpack.c.l.b16 %v379
    %v1247 = vunpack.c.h.b16 %v379
    %v1248 = vunpack.c.l.b16 %v380
    %v1249 = vunpack.c.h.b16 %v380
    %v1250 = vunpack.c.l.b16 %v381
    %v1251 = vunpack.c.h.b16 %v381
    %v1252 = vunpack.c.l.b16 %v382
    %v1253 = vunpack.c.h.b16 %v382
    %v1254 = vunpack.c.l.b16 %v383
    %v1255 = vunpack.c.h.b16 %v383
    %v1256 = vunpack.c.l.b16 %v384
    %v1257 = vunpack.c.h.b16 %v384
    %v1258 = vunpack.c.l.b16 %v385
    %v1259 = vunpack.c.h.b16 %v385
    %v1260 = vunpack.c.l.b16 %v386
    %v1261 = vunpack.c.h.b16 %v386
    %v1262 = vunpack.c.l.b16 %v387
    %v1263 = vunpack.c.h.b16 %v387
    %v1264 = vunpack.c.l.b16 %v388
    %v1265 = vunpack.c.h.b16 %v388
    %v1266 = vunpack.c.l.b16 %v389
    %v1267 = vunpack.c.h.b16 %v389
    %v1268 = vunpack.c.l.b16 %v390
    %v1269 = vunpack.c.h.b16 %v390
    %v1270 = vunpack.c.l.b16 %v391
    %v1271 = vunpack.c.h.b16 %v391
    %v1272 = vunpack.c.l.b16 %v392
    %v1273 = vunpack.c.h.b16 %v392
    %v1274 = vunpack.c.l.b16 %v393
    %v1275 = vunpack.c.h.b16 %v393
    %v1276 = vunpack.c.l.b16 %v394
    %v1277 = vunpack.c.h.b16 %v394
    %v1278 = vunpack.c.l.b16 %v395
    %v1279 = vunpack.c.h.b16 %v395
    %v1280 = vunpack.c.l.b16 %v396
    %v1281 = vunpack.c.h.b16 %v396
    %v1282 = vunpack.c.l.b16 %v397
    %v1283 = vunpack.c.h.b16 %v397
    %v1284 = vunpack.c.l.b16 %v398
    %v1285 = vunpack.c.h.b16 %v398
    %v1286 = vunpack.c.l.b16 %v399
    %v1287 = vunpack.c.h.b16 %v399
    %v1288 = vunpack.c.l.b16 %v400
    %v1289 = vunpack.c.h.b16 %v400
    %v1290 = vunpack.c.l.b16 %v401
    %v1291 = vunpack.c.h.b16 %v401
    %v1292 = vpack.c.b16 %v788, %v780
    %v1293 = vpack.c.b16 %v789, %v781
    %v1294 = vpack.c.b16 %v790, %v782
    %v1295 = vpack.c.b16 %v791, %v783
    %v1296 = vpack.c.b16 %v792, %v784
    %v1297 = vpack.c.b16 %v793, %v785
    %v1298 = vpack.c.b16 %v794, %v786
    %v1299 = vpack.c.b16 %v795, %v787
    %v1300 = vpack.c.b16 %v804, %v796
    %v1301 = vpack.c.b16 %v805, %v797
    %v1302 = vpack.c.b16 %v806, %v798
    %v1303 = vpack.c.b16 %v807, %v799
    %v1304 = vpack.c.b16 %v808, %v800
    %v1305 = vpack.c.b16 %v809, %v801
    %v1306 = vpack.c.b16 %v810, %v802
    %v1307 = vpack.c.b16 %v811, %v803
    %v1308 = vpack.c.b16 %v820, %v812
    %v1309 = vpack.c.b16 %v821, %v813
    %v1310 = vpack.c.b16 %v822, %v814
    %v1311 = vpack.c.b16 %v823, %v815
    %v1312 = vpack.c.b16 %v824, %v816
    %v1313 = vpack.c.b16 %v825, %v817
    %v1314 = vpack.c.b16 %v826, %v818
    %v1315 = vpack.c.b16 %v827, %v819
    %v1316 = vpack.c.b16 %v836, %v828
    %v1317 = vpack.c.b16 %v837, %v829
    %v1318 = vpack.c.b16 %v838, %v830
    %v1319 = vpack.c.b16 %v839, %v831
    %v1320 = vpack.c.b16 %v840, %v832
    %v1321 = vpack.c.b16 %v841, %v833
    %v1322 = vpack.c.b16 %v842, %v834
    %v1323 = vpack.c.b16 %v843, %v835
    %v1324 = vpack.c.b16 %v852, %v844
    %v1325 = vpack.c.b16 %v853, %v845
    %v1326 = vpack.c.b16 %v854, %v846
    %v1327 = vpack.c.b16 %v855, %v847
    %v1328 = vpack.c.b16 %v856, %v848
    %v1329 = vpack.c.b16 %v857, %v849
    %v1330 = vpack.c.b16 %v858, %v850
    %v1331 = vpack.c.b16 %v859, %v851
    %v1332 = vpack.c.b16 %v868, %v860
    %v1333 = vpack.c.b16 %v869, %v861
    %v1334 = vpack.c.b16 %v870, %v862
    %v1335 = vpack.c.b16 %v871, %v863
    %v1336 = vpack.c.b16 %v872, %v864
    %v1337 = vpack.c.b16 %v873, %v865
    %v1338 = vpack.c.b16 %v874, %v866
    %v1339 = vpack.c.b16 %v875, %v867
    %v1340 = vpack.c.b16 %v884, %v876
    %v1341 = vpack.c.b16 %v885, %v877
    %v1342 = vpack.c.b16 %v886, %v878
    %v1343 = vpack.c.b16 %v887, %v879
    %v1344 = vpack.c.b16 %v888, %v880
    %v1345 = vpack.c.b16 %v889, %v881
    %v1346 = vpack.c.b16 %v890, %v882
    %v1347 = vpack.c.b16 %v891, %v883
    %v1348 = vpack.c.b16 %v900, %v892
    %v1349 = vpack.c.b16 %v901, %v893
    %v1350 = vpack.c.b16 %v902, %v894
    %v1351 = vpack.c.b16 %v903, %v895
    %v1352 = vpack.c.b16 %v904, %v896
    %v1353 = vpack.c.b16 %v905, %v897
    %v1354 = vpack.c.b16 %v906, %v898
    %v1355 = vpack.c.b16 %v907, %v899
    %v1356 = vpack.c.b16 %v916, %v908
    %v1357 = vpack.c.b16 %v917, %v909
    %v1358 = vpack.c.b16 %v918, %v910
    %v1359 = vpack.c.b16 %v919, %v911
    %v1360 = vpack.c.b16 %v920, %v912
    %v1361 = vpack.c.b16 %v921, %v913
    %v1362 = vpack.c.b16 %v922, %v914
    %v1363 = vpack.c.b16 %v923, %v915
    %v1364 = vpack.c.b16 %v932, %v924
    %v1365 = vpack.c.b16 %v933, %v925
    %v1366 = vpack.c.b16 %v934, %v926
    %v1367 = vpack.c.b16 %v935, %v927
    %v1368 = vpack.c.b16 %v936, %v928
    %v1369 = vpack.c.b16 %v937, %v929
    %v1370 = vpack.c.b16 %v938, %v930
    %v1371 = vpack.c.b16 %v939, %v931
    %v1372 = vpack.c.b16 %v948, %v940
    %v1373 = vpack.c.b16 %v949, %v941
    %v1374 = vpack.c.b16 %v950, %v942
    %v1375 = vpack.c.b16 %v951, %v943
    %v1376 = vpack.c.b16 %v952, %v944
    %v1377 = vpack.c.b16 %v953, %v945
    %v1378 = vpack.c.b16 %v954, %v946
    %v1379 = vpack.c.b16 %v955, %v947
    %v1380 = vpack.c.b16 %v964, %v956
    %v1381 = vpack.c.b16 %v965, %v957
    %v1382 = vpack.c.b16 %v966, %v958
    %v1383 = vpack.c.b16 %v967, %v959
    %v1384 = vpack.c.b16 %v968, %v960
    %v1385 = vpack.c.b16 %v969, %v961
    %v1386 = vpack.c.b16 %v970, %v962
    %v1387 = vpack.c.b16 %v971, %v963
    %v1388 = vpack.c.b16 %v980, %v972
    %v1389 = vpack.c.b16 %v981, %v973
    %v1390 = vpack.c.b16 %v982, %v974
    %v1391 = vpack.c.b16 %v983, %v975
    %v1392 = vpack.c.b16 %v984, %v976
    %v1393 = vpack.c.b16 %v985, %v977
    %v1394 = vpack.c.b16 %v986, %v978
    %v1395 = vpack.c.b16 %v987, %v979
    %v1396 = vpack.c.b16 %v996, %v988
    %v1397 = vpack.c.b16 %v997, %v989
    %v1398 = vpack.c.b16 %v998, %v990
    %v1399 = vpack.c.b16 %v999, %v991
    %v1400 = vpack.c.b16 %v1000, %v992
    %v1401 = vpack.c.b16 %v1001, %v993
    %v1402 = vpack.c.b16 %v1002, %v994
    %v1403 = vpack.c.b16 %v1003, %v995
    %v1404 = vpack.c.b16 %v1012, %v1004
    %v1405 = vpack.c.b16 %v1013, %v1005
    %v1406 = vpack.c.b16 %v1014, %v1006
    %v1407 = vpack.c.b16 %v1015, %v1007
    %v1408 = vpack.c.b16 %v1016, %v1008
    %v1409 = vpack.c.b16 %v1017, %v1009
    %v1410 = vpack.c.b16 %v1018, %v1010
    %v1411 = vpack.c.b16 %v1019, %v1011
    %v1412 = vpack.c.b16 %v1028, %v1020
    %v1413 = vpack.c.b16 %v1029, %v1021
    %v1414 = vpack.c.b16 %v1030, %v1022
    %v1415 = vpack.c.b16 %v1031, %v1023
    %v1416 = vpack.c.b16 %v1032, %v1024
    %v1417 = vpack.c.b16 %v1033, %v1025
    %v1418 = vpack.c.b16 %v1034, %v1026
    %v1419 = vpack.c.b16 %v1035, %v1027
    %v1420 = vpack.c.b16 %v1044, %v1036
    %v1421 = vpack.c.b16 %v1045, %v1037
    %v1422 = vpack.c.b16 %v1046, %v1038
    %v1423 = vpack.c.b16 %v1047, %v1039
    %v1424 = vpack.c.b16 %v1048, %v1040
    %v1425 = vpack.c.b16 %v1049, %v1041
    %v1426 = vpack.c.b16 %v1050, %v1042
    %v1427 = vpack.c.b16 %v1051, %v1043
    %v1428 = vpack.c.b16 %v1060, %v1052
    %v1429 = vpack.c.b16 %v1061, %v1053
    %v1430 = vpack.c.b16 %v1062, %v1054
    %v1431 = vpack.c.b16 %v1063, %v1055
    %v1432 = vpack.c.b16 %v1064, %v1056
    %v1433 = vpack.c.b16 %v1065, %v1057
    %v1434 = vpack.c.b16 %v1066, %v1058
    %v1435 = vpack.c.b16 %v1067, %v1059
    %v1436 = vpack.c.b16 %v1076, %v1068
    %v1437 = vpack.c.b16 %v1077, %v1069
    %v1438 = vpack.c.b16 %v1078, %v1070
    %v1439 = vpack.c.b16 %v1079, %v1071
    %v1440 = vpack.c.b16 %v1080, %v1072
    %v1441 = vpack.c.b16 %v1081, %v1073
    %v1442 = vpack.c.b16 %v1082, %v1074
    %v1443 = vpack.c.b16 %v1083, %v1075
    %v1444 = vpack.c.b16 %v1092, %v1084
    %v1445 = vpack.c.b16 %v1093, %v1085
    %v1446 = vpack.c.b16 %v1094, %v1086
    %v1447 = vpack.c.b16 %v1095, %v1087
    %v1448 = vpack.c.b16 %v1096, %v1088
    %v1449 = vpack.c.b16 %v1097, %v1089
    %v1450 = vpack.c.b16 %v1098, %v1090
    %v1451 = vpack.c.b16 %v1099, %v1091
    %v1452 = vpack.c.b16 %v1108, %v1100
    %v1453 = vpack.c.b16 %v1109, %v1101
    %v1454 = vpack.c.b16 %v1110, %v1102
    %v1455 = vpack.c.b16 %v1111, %v1103
    %v1456 = vpack.c.b16 %v1112, %v1104
    %v1457 = vpack.c.b16 %v1113, %v1105
    %v1458 = vpack.c.b16 %v1114, %v1106
    %v1459 = vpack.c.b16 %v1115, %v1107
    %v1460 = vpack.c.b16 %v1124, %v1116
    %v1461 = vpack.c.b16 %v1125, %v1117
    %v1462 = vpack.c.b16 %v1126, %v1118
    %v1463 = vpack.c.b16 %v1127, %v1119
    %v1464 = vpack.c.b16 %v1128, %v1120
    %v1465 = vpack.c.b16 %v1129, %v1121
    %v1466 = vpack.c.b16 %v1130, %v1122
    %v1467 = vpack.c.b16 %v1131, %v1123
    %v1468 = vpack.c.b16 %v1140, %v1132
    %v1469 = vpack.c.b16 %v1141, %v1133
    %v1470 = vpack.c.b16 %v1142, %v1134
    %v1471 = vpack.c.b16 %v1143, %v1135
    %v1472 = vpack.c.b16 %v1144, %v1136
    %v1473 = vpack.c.b16 %v1145, %v1137
    %v1474 = vpack.c.b16 %v1146, %v1138
    %v1475 = vpack.c.b16 %v1147, %v1139
    %v1476 = vpack.c.b16 %v1156, %v1148
    %v1477 = vpack.c.b16 %v1157, %v1149
    %v1478 = vpack.c.b16 %v1158, %v1150
    %v1479 = vpack.c.b16 %v1159, %v1151
    %v1480 = vpack.c.b16 %v1160, %v1152
    %v1481 = vpack.c.b16 %v1161, %v1153
    %v1482 = vpack.c.b16 %v1162, %v1154
    %v1483 = vpack.c.b16 %v1163, %v1155
    %v1484 = vpack.c.b16 %v1172, %v1164
    %v1485 = vpack.c.b16 %v1173, %v1165
    %v1486 = vpack.c.b16 %v1174, %v1166
    %v1487 = vpack.c.b16 %v1175, %v1167
    %v1488 = vpack.c.b16 %v1176, %v1168
    %v1489 = vpack.c.b16 %v1177, %v1169
    %v1490 = vpack.c.b16 %v1178, %v1170
    %v1491 = vpack.c.b16 %v1179, %v1171
    %v1492 = vpack.c.b16 %v1188, %v1180
    %v1493 = vpack.c.b16 %v1189, %v1181
    %v1494 = vpack.c.b16 %v1190, %v1182
    %v1495 = vpack.c.b16 %v1191, %v1183
    %v1496 = vpack.c.b16 %v1192, %v1184
    %v1497 = vpack.c.b16 %v1193, %v1185
    %v1498 = vpack.c.b16 %v1194, %v1186
    %v1499 = vpack.c.b16 %v1195, %v1187
    %v1500 = vpack.c.b16 %v1204, %v1196
    %v1501 = vpack.c.b16 %v1205, %v1197
    %v1502 = vpack.c.b16 %v1206, %v1198
    %v1503 = vpack.c.b16 %v1207, %v1199
    %v1504 = vpack.c.b16 %v1208, %v1200
    %v1505 = vpack.c.b16 %v1209, %v1201
    %v1506 = vpack.c.b16 %v1210, %v1202
    %v1507 = vpack.c.b16 %v1211, %v1203
    %v1508 = vpack.c.b16 %v1220, %v1212
    %v1509 = vpack.c.b16 %v1221, %v1213
    %v1510 = vpack.c.b16 %v1222, %v1214
    %v1511 = vpack.c.b16 %v1223, %v1215
    %v1512 = vpack.c.b16 %v1224, %v1216
    %v1513 = vpack.c.b16 %v1225, %v1217
    %v1514 = vpack.c.b16 %v1226, %v1218
    %v1515 = vpack.c.b16 %v1227, %v1219
    %v1516 = vpack.c.b16 %v1236, %v1228
    %v1517 = vpack.c.b16 %v1237, %v1229
    %v1518 = vpack.c.b16 %v1238, %v1230
    %v1519 = vpack.c.b16 %v1239, %v1231
    %v1520 = vpack.c.b16 %v1240, %v1232
    %v1521 = vpack.c.b16 %v1241, %v1233
    %v1522 = vpack.c.b16 %v1242, %v1234
    %v1523 = vpack.c.b16 %v1243, %v1235
    %v1524 = vpack.c.b16 %v1252, %v1244
    %v1525 = vpack.c.b16 %v1253, %v1245
    %v1526 = vpack.c.b16 %v1254, %v1246
    %v1527 = vpack.c.b16 %v1255, %v1247
    %v1528 = vpack.c.b16 %v1256, %v1248
    %v1529 = vpack.c.b16 %v1257, %v1249
    %v1530 = vpack.c.b16 %v1258, %v1250
    %v1531 = vpack.c.b16 %v1259, %v1251
    %v1532 = vpack.c.b16 %v1268, %v1260
    %v1533 = vpack.c.b16 %v1269, %v1261
    %v1534 = vpack.c.b16 %v1270, %v1262
    %v1535 = vpack.c.b16 %v1271, %v1263
    %v1536 = vpack.c.b16 %v1272, %v1264
    %v1537 = vpack.c.b16 %v1273, %v1265
    %v1538 = vpack.c.b16 %v1274, %v1266
    %v1539 = vpack.c.b16 %v1275, %v1267
    %v1540 = vpack.c.b16 %v1284, %v1276
    %v1541 = vpack.c.b16 %v1285, %v1277
    %v1542 = vpack.c.b16 %v1286, %v1278
    %v1543 = vpack.c.b16 %v1287, %v1279
    %v1544 = vpack.c.b16 %v1288, %v1280
    %v1545 = vpack.c.b16 %v1289, %v1281
    %v1546 = vpack.c.b16 %v1290, %v1282
    %v1547 = vpack.c.b16 %v1291, %v1283
    %1804 = vmatprep.subr.bf16.mxu0 %v1293
    %1805 = vmatpush1.bf16.msra.mxu0 %v1292
    %1806 = vmatprep.subr.bf16.mxu0 %v1301
    %1807 = vmatpush1.bf16.msra.mxu0 %v1300
    %1808 = vmatprep.subr.bf16.mxu0 %v1309
    %1809 = vmatpush1.bf16.msra.mxu0 %v1308
    %1810 = vmatprep.subr.bf16.mxu0 %v1317
    %1811 = vmatpush1.bf16.msra.mxu0 %v1316
    %1812 = vmatprep.subr.bf16.mxu0 %v1325
    %1813 = vmatpush1.bf16.msra.mxu0 %v1324
    %1814 = vmatprep.subr.bf16.mxu0 %v1333
    %1815 = vmatpush1.bf16.msra.mxu0 %v1332
    %1816 = vmatprep.subr.bf16.mxu0 %v1341
    %1817 = vmatpush1.bf16.msra.mxu0 %v1340
    %1818 = vmatprep.subr.bf16.mxu0 %v1349
    %1819 = vmatpush1.bf16.msra.mxu0 %v1348
    %1820 = vmatprep.subr.bf16.mxu0 %v1357
    %1821 = vmatpush1.bf16.msra.mxu0 %v1356
    %1822 = vmatprep.subr.bf16.mxu0 %v1365
    %1823 = vmatpush1.bf16.msra.mxu0 %v1364
    %1824 = vmatprep.subr.bf16.mxu0 %v1373
    %1825 = vmatpush1.bf16.msra.mxu0 %v1372
    %1826 = vmatprep.subr.bf16.mxu0 %v1381
    %1827 = vmatpush1.bf16.msra.mxu0 %v1380
    %1828 = vmatprep.subr.bf16.mxu0 %v1389
    %1829 = vmatpush1.bf16.msra.mxu0 %v1388
    %1830 = vmatprep.subr.bf16.mxu0 %v1397
    %1831 = vmatpush1.bf16.msra.mxu0 %v1396
    %1832 = vmatprep.subr.bf16.mxu0 %v1405
    %1833 = vmatpush1.bf16.msra.mxu0 %v1404
    %1834 = vmatprep.subr.bf16.mxu0 %v1413
    %1835 = vmatpush1.bf16.msra.mxu0 %v1412
    %1836 = vmatprep.mubr.bf16.mxu0 %v493
    %1837 = vmatmul.mubr.bf16.gmra.mrb[0].mxu0 %v492
    %v1838 = vpop.f32.mrb[0].mxu0
    %v1839 = vadd.f32 %v407, %v1838
    %v1840 = vpop.f32.mrb[0].mxu0
    %v1841 = vadd.f32 %v411, %v1840
    %v1842 = vpop.f32.mrb[0].mxu0
    %v1843 = vadd.f32 %v407, %v1842
    %v1844 = vpop.f32.mrb[0].mxu0
    %v1845 = vadd.f32 %v411, %v1844
    %1846 = vmatprep.mubr.bf16.mxu0 %v497
    %1847 = vmatmul.mubr.bf16.gmra.mrb[0].mxu0 %v496
    %v1848 = vpop.f32.mrb[0].mxu0
    %v1849 = vadd.f32 %v407, %v1848
    %v1850 = vpop.f32.mrb[0].mxu0
    %v1851 = vadd.f32 %v411, %v1850
    %v1852 = vpop.f32.mrb[0].mxu0
    %v1853 = vadd.f32 %v407, %v1852
    %v1854 = vpop.f32.mrb[0].mxu0
    %v1855 = vadd.f32 %v411, %v1854
    %1856 = vmatprep.mubr.bf16.mxu0 %v501
    %1857 = vmatmul.mubr.bf16.gmra.mrb[0].mxu0 %v500
    %v1858 = vpop.f32.mrb[0].mxu0
    %v1859 = vadd.f32 %v407, %v1858
    %v1860 = vpop.f32.mrb[0].mxu0
    %v1861 = vadd.f32 %v411, %v1860
    %v1862 = vpop.f32.mrb[0].mxu0
    %v1863 = vadd.f32 %v407, %v1862
    %v1864 = vpop.f32.mrb[0].mxu0
    %v1865 = vadd.f32 %v411, %v1864
    %1866 = vmatprep.mubr.bf16.mxu0 %v505
    %1867 = vmatmul.mubr.bf16.gmra.mrb[0].mxu0 %v504
    %v1868 = vpop.f32.mrb[0].mxu0
    %v1869 = vadd.f32 %v407, %v1868
    %v1870 = vpop.f32.mrb[0].mxu0
    %v1871 = vadd.f32 %v411, %v1870
    %v1872 = vpop.f32.mrb[0].mxu0
    %v1873 = vadd.f32 %v407, %v1872
    %v1874 = vpop.f32.mrb[0].mxu0
    %v1875 = vadd.f32 %v411, %v1874
    %1876 = vdwg.mxu0
    %1877 = vmatprep.subr.bf16.mxu0 %v1421
    %1878 = vmatpush1.bf16.msra.mxu0 %v1420
    %1879 = vmatprep.subr.bf16.mxu0 %v1429
    %1880 = vmatpush1.bf16.msra.mxu0 %v1428
    %1881 = vmatprep.subr.bf16.mxu0 %v1437
    %1882 = vmatpush1.bf16.msra.mxu0 %v1436
    %1883 = vmatprep.subr.bf16.mxu0 %v1445
    %1884 = vmatpush1.bf16.msra.mxu0 %v1444
    %1885 = vmatprep.subr.bf16.mxu0 %v1453
    %1886 = vmatpush1.bf16.msra.mxu0 %v1452
    %1887 = vmatprep.subr.bf16.mxu0 %v1461
    %1888 = vmatpush1.bf16.msra.mxu0 %v1460
    %1889 = vmatprep.subr.bf16.mxu0 %v1469
    %1890 = vmatpush1.bf16.msra.mxu0 %v1468
    %1891 = vmatprep.subr.bf16.mxu0 %v1477
    %1892 = vmatpush1.bf16.msra.mxu0 %v1476
    %1893 = vmatprep.subr.bf16.mxu0 %v1485
    %1894 = vmatpush1.bf16.msra.mxu0 %v1484
    %1895 = vmatprep.subr.bf16.mxu0 %v1493
    %1896 = vmatpush1.bf16.msra.mxu0 %v1492
    %1897 = vmatprep.subr.bf16.mxu0 %v1501
    %1898 = vmatpush1.bf16.msra.mxu0 %v1500
    %1899 = vmatprep.subr.bf16.mxu0 %v1509
    %1900 = vmatpush1.bf16.msra.mxu0 %v1508
    %1901 = vmatprep.subr.bf16.mxu0 %v1517
    %1902 = vmatpush1.bf16.msra.mxu0 %v1516
    %1903 = vmatprep.subr.bf16.mxu0 %v1525
    %1904 = vmatpush1.bf16.msra.mxu0 %v1524
    %1905 = vmatprep.subr.bf16.mxu0 %v1533
    %1906 = vmatpush1.bf16.msra.mxu0 %v1532
    %1907 = vmatprep.subr.bf16.mxu0 %v1541
    %1908 = vmatpush1.bf16.msra.mxu0 %v1540
    %1909 = vmatprep.mubr.bf16.mxu0 %v495
    %1910 = vmatmul.mubr.bf16.gmra.mrb[0].mxu0 %v494
    %v1911 = vpop.f32.mrb[0].mxu0
    %v1912 = vadd.f32 %v1839, %v1911
    %v1913 = vpop.f32.mrb[0].mxu0
    %v1914 = vadd.f32 %v1841, %v1913
    %v1915 = vpop.f32.mrb[0].mxu0
    %v1916 = vadd.f32 %v1843, %v1915
    %v1917 = vpop.f32.mrb[0].mxu0
    %v1918 = vadd.f32 %v1845, %v1917
    %1919 = vmatprep.mubr.bf16.mxu0 %v499
    %1920 = vmatmul.mubr.bf16.gmra.mrb[0].mxu0 %v498
    %v1921 = vpop.f32.mrb[0].mxu0
    %v1922 = vadd.f32 %v1849, %v1921
    %v1923 = vpop.f32.mrb[0].mxu0
    %v1924 = vadd.f32 %v1851, %v1923
    %v1925 = vpop.f32.mrb[0].mxu0
    %v1926 = vadd.f32 %v1853, %v1925
    %v1927 = vpop.f32.mrb[0].mxu0
    %v1928 = vadd.f32 %v1855, %v1927
    %1929 = vmatprep.mubr.bf16.mxu0 %v503
    %1930 = vmatmul.mubr.bf16.gmra.mrb[0].mxu0 %v502
    %v1931 = vpop.f32.mrb[0].mxu0
    %v1932 = vadd.f32 %v1859, %v1931
    %v1933 = vpop.f32.mrb[0].mxu0
    %v1934 = vadd.f32 %v1861, %v1933
    %v1935 = vpop.f32.mrb[0].mxu0
    %v1936 = vadd.f32 %v1863, %v1935
    %v1937 = vpop.f32.mrb[0].mxu0
    %v1938 = vadd.f32 %v1865, %v1937
    %1939 = vmatprep.mubr.bf16.mxu0 %v507
    %1940 = vmatmul.mubr.bf16.gmra.mrb[0].mxu0 %v506
    %v1941 = vpop.f32.mrb[0].mxu0
    %v1942 = vadd.f32 %v1869, %v1941
    %v1943 = vpop.f32.mrb[0].mxu0
    %v1944 = vadd.f32 %v1871, %v1943
    %v1945 = vpop.f32.mrb[0].mxu0
    %v1946 = vadd.f32 %v1873, %v1945
    %v1947 = vpop.f32.mrb[0].mxu0
    %v1948 = vadd.f32 %v1875, %v1947
    %1949 = vdwg.mxu0
    %1950 = vmatprep.subr.bf16.mxu0 %v1295
    %1951 = vmatpush1.bf16.msra.mxu0 %v1294
    %1952 = vmatprep.subr.bf16.mxu0 %v1303
    %1953 = vmatpush1.bf16.msra.mxu0 %v1302
    %1954 = vmatprep.subr.bf16.mxu0 %v1311
    %1955 = vmatpush1.bf16.msra.mxu0 %v1310
    %1956 = vmatprep.subr.bf16.mxu0 %v1319
    %1957 = vmatpush1.bf16.msra.mxu0 %v1318
    %1958 = vmatprep.subr.bf16.mxu0 %v1327
    %1959 = vmatpush1.bf16.msra.mxu0 %v1326
    %1960 = vmatprep.subr.bf16.mxu0 %v1335
    %1961 = vmatpush1.bf16.msra.mxu0 %v1334
    %1962 = vmatprep.subr.bf16.mxu0 %v1343
    %1963 = vmatpush1.bf16.msra.mxu0 %v1342
    %1964 = vmatprep.subr.bf16.mxu0 %v1351
    %1965 = vmatpush1.bf16.msra.mxu0 %v1350
    %1966 = vmatprep.subr.bf16.mxu0 %v1359
    %1967 = vmatpush1.bf16.msra.mxu0 %v1358
    %1968 = vmatprep.subr.bf16.mxu0 %v1367
    %1969 = vmatpush1.bf16.msra.mxu0 %v1366
    %1970 = vmatprep.subr.bf16.mxu0 %v1375
    %1971 = vmatpush1.bf16.msra.mxu0 %v1374
    %1972 = vmatprep.subr.bf16.mxu0 %v1383
    %1973 = vmatpush1.bf16.msra.mxu0 %v1382
    %1974 = vmatprep.subr.bf16.mxu0 %v1391
    %1975 = vmatpush1.bf16.msra.mxu0 %v1390
    %1976 = vmatprep.subr.bf16.mxu0 %v1399
    %1977 = vmatpush1.bf16.msra.mxu0 %v1398
    %1978 = vmatprep.subr.bf16.mxu0 %v1407
    %1979 = vmatpush1.bf16.msra.mxu0 %v1406
    %1980 = vmatprep.subr.bf16.mxu0 %v1415
    %1981 = vmatpush1.bf16.msra.mxu0 %v1414
    %1982 = vmatprep.mubr.bf16.mxu0 %v493
    %1983 = vmatmul.mubr.bf16.gmra.mrb[0].mxu0 %v492
    %v1984 = vpop.f32.mrb[0].mxu0
    %v1985 = vadd.f32 %v415, %v1984
    %v1986 = vpop.f32.mrb[0].mxu0
    %v1987 = vadd.f32 %v419, %v1986
    %v1988 = vpop.f32.mrb[0].mxu0
    %v1989 = vadd.f32 %v415, %v1988
    %v1990 = vpop.f32.mrb[0].mxu0
    %v1991 = vadd.f32 %v419, %v1990
    %1992 = vmatprep.mubr.bf16.mxu0 %v497
    %1993 = vmatmul.mubr.bf16.gmra.mrb[0].mxu0 %v496
    %v1994 = vpop.f32.mrb[0].mxu0
    %v1995 = vadd.f32 %v415, %v1994
    %v1996 = vpop.f32.mrb[0].mxu0
    %v1997 = vadd.f32 %v419, %v1996
    %v1998 = vpop.f32.mrb[0].mxu0
    %v1999 = vadd.f32 %v415, %v1998
    %v2000 = vpop.f32.mrb[0].mxu0
    %v2001 = vadd.f32 %v419, %v2000
    %2002 = vmatprep.mubr.bf16.mxu0 %v501
    %2003 = vmatmul.mubr.bf16.gmra.mrb[0].mxu0 %v500
    %v2004 = vpop.f32.mrb[0].mxu0
    %v2005 = vadd.f32 %v415, %v2004
    %v2006 = vpop.f32.mrb[0].mxu0
    %v2007 = vadd.f32 %v419, %v2006
    %v2008 = vpop.f32.mrb[0].mxu0
    %v2009 = vadd.f32 %v415, %v2008
    %v2010 = vpop.f32.mrb[0].mxu0
    %v2011 = vadd.f32 %v419, %v2010
    %2012 = vmatprep.mubr.bf16.mxu0 %v505
    %2013 = vmatmul.mubr.bf16.gmra.mrb[0].mxu0 %v504
    %v2014 = vpop.f32.mrb[0].mxu0
    %v2015 = vadd.f32 %v415, %v2014
    %v2016 = vpop.f32.mrb[0].mxu0
    %v2017 = vadd.f32 %v419, %v2016
    %v2018 = vpop.f32.mrb[0].mxu0
    %v2019 = vadd.f32 %v415, %v2018
    %v2020 = vpop.f32.mrb[0].mxu0
    %v2021 = vadd.f32 %v419, %v2020
    %2022 = vdwg.mxu0
    %2023 = vmatprep.subr.bf16.mxu0 %v1423
    %2024 = vmatpush1.bf16.msra.mxu0 %v1422
    %2025 = vmatprep.subr.bf16.mxu0 %v1431
    %2026 = vmatpush1.bf16.msra.mxu0 %v1430
    %2027 = vmatprep.subr.bf16.mxu0 %v1439
    %2028 = vmatpush1.bf16.msra.mxu0 %v1438
    %2029 = vmatprep.subr.bf16.mxu0 %v1447
    %2030 = vmatpush1.bf16.msra.mxu0 %v1446
    %2031 = vmatprep.subr.bf16.mxu0 %v1455
    %2032 = vmatpush1.bf16.msra.mxu0 %v1454
    %2033 = vmatprep.subr.bf16.mxu0 %v1463
    %2034 = vmatpush1.bf16.msra.mxu0 %v1462
    %2035 = vmatprep.subr.bf16.mxu0 %v1471
    %2036 = vmatpush1.bf16.msra.mxu0 %v1470
    %2037 = vmatprep.subr.bf16.mxu0 %v1479
    %2038 = vmatpush1.bf16.msra.mxu0 %v1478
    %2039 = vmatprep.subr.bf16.mxu0 %v1487
    %2040 = vmatpush1.bf16.msra.mxu0 %v1486
    %2041 = vmatprep.subr.bf16.mxu0 %v1495
    %2042 = vmatpush1.bf16.msra.mxu0 %v1494
    %2043 = vmatprep.subr.bf16.mxu0 %v1503
    %2044 = vmatpush1.bf16.msra.mxu0 %v1502
    %2045 = vmatprep.subr.bf16.mxu0 %v1511
    %2046 = vmatpush1.bf16.msra.mxu0 %v1510
    %2047 = vmatprep.subr.bf16.mxu0 %v1519
    %2048 = vmatpush1.bf16.msra.mxu0 %v1518
    %2049 = vmatprep.subr.bf16.mxu0 %v1527
    %2050 = vmatpush1.bf16.msra.mxu0 %v1526
    %2051 = vmatprep.subr.bf16.mxu0 %v1535
    %2052 = vmatpush1.bf16.msra.mxu0 %v1534
    %2053 = vmatprep.subr.bf16.mxu0 %v1543
    %2054 = vmatpush1.bf16.msra.mxu0 %v1542
    %2055 = vmatprep.mubr.bf16.mxu0 %v495
    %2056 = vmatmul.mubr.bf16.gmra.mrb[0].mxu0 %v494
    %v2057 = vpop.f32.mrb[0].mxu0
    %v2058 = vadd.f32 %v1985, %v2057
    %v2059 = vpop.f32.mrb[0].mxu0
    %v2060 = vadd.f32 %v1987, %v2059
    %v2061 = vpop.f32.mrb[0].mxu0
    %v2062 = vadd.f32 %v1989, %v2061
    %v2063 = vpop.f32.mrb[0].mxu0
    %v2064 = vadd.f32 %v1991, %v2063
    %2065 = vmatprep.mubr.bf16.mxu0 %v499
    %2066 = vmatmul.mubr.bf16.gmra.mrb[0].mxu0 %v498
    %v2067 = vpop.f32.mrb[0].mxu0
    %v2068 = vadd.f32 %v1995, %v2067
    %v2069 = vpop.f32.mrb[0].mxu0
    %v2070 = vadd.f32 %v1997, %v2069
    %v2071 = vpop.f32.mrb[0].mxu0
    %v2072 = vadd.f32 %v1999, %v2071
    %v2073 = vpop.f32.mrb[0].mxu0
    %v2074 = vadd.f32 %v2001, %v2073
    %2075 = vmatprep.mubr.bf16.mxu0 %v503
    %2076 = vmatmul.mubr.bf16.gmra.mrb[0].mxu0 %v502
    %v2077 = vpop.f32.mrb[0].mxu0
    %v2078 = vadd.f32 %v2005, %v2077
    %v2079 = vpop.f32.mrb[0].mxu0
    %v2080 = vadd.f32 %v2007, %v2079
    %v2081 = vpop.f32.mrb[0].mxu0
    %v2082 = vadd.f32 %v2009, %v2081
    %v2083 = vpop.f32.mrb[0].mxu0
    %v2084 = vadd.f32 %v2011, %v2083
    %2085 = vmatprep.mubr.bf16.mxu0 %v507
    %2086 = vmatmul.mubr.bf16.gmra.mrb[0].mxu0 %v506
    %v2087 = vpop.f32.mrb[0].mxu0
    %v2088 = vadd.f32 %v2015, %v2087
    %v2089 = vpop.f32.mrb[0].mxu0
    %v2090 = vadd.f32 %v2017, %v2089
    %v2091 = vpop.f32.mrb[0].mxu0
    %v2092 = vadd.f32 %v2019, %v2091
    %v2093 = vpop.f32.mrb[0].mxu0
    %v2094 = vadd.f32 %v2021, %v2093
    %2095 = vdwg.mxu0
    %2096 = vmatprep.subr.bf16.mxu0 %v1297
    %2097 = vmatpush1.bf16.msra.mxu0 %v1296
    %2098 = vmatprep.subr.bf16.mxu0 %v1305
    %2099 = vmatpush1.bf16.msra.mxu0 %v1304
    %2100 = vmatprep.subr.bf16.mxu0 %v1313
    %2101 = vmatpush1.bf16.msra.mxu0 %v1312
    %2102 = vmatprep.subr.bf16.mxu0 %v1321
    %2103 = vmatpush1.bf16.msra.mxu0 %v1320
    %2104 = vmatprep.subr.bf16.mxu0 %v1329
    %2105 = vmatpush1.bf16.msra.mxu0 %v1328
    %2106 = vmatprep.subr.bf16.mxu0 %v1337
    %2107 = vmatpush1.bf16.msra.mxu0 %v1336
    %2108 = vmatprep.subr.bf16.mxu0 %v1345
    %2109 = vmatpush1.bf16.msra.mxu0 %v1344
    %2110 = vmatprep.subr.bf16.mxu0 %v1353
    %2111 = vmatpush1.bf16.msra.mxu0 %v1352
    %2112 = vmatprep.subr.bf16.mxu0 %v1361
    %2113 = vmatpush1.bf16.msra.mxu0 %v1360
    %2114 = vmatprep.subr.bf16.mxu0 %v1369
    %2115 = vmatpush1.bf16.msra.mxu0 %v1368
    %2116 = vmatprep.subr.bf16.mxu0 %v1377
    %2117 = vmatpush1.bf16.msra.mxu0 %v1376
    %2118 = vmatprep.subr.bf16.mxu0 %v1385
    %2119 = vmatpush1.bf16.msra.mxu0 %v1384
    %2120 = vmatprep.subr.bf16.mxu0 %v1393
    %2121 = vmatpush1.bf16.msra.mxu0 %v1392
    %2122 = vmatprep.subr.bf16.mxu0 %v1401
    %2123 = vmatpush1.bf16.msra.mxu0 %v1400
    %2124 = vmatprep.subr.bf16.mxu0 %v1409
    %2125 = vmatpush1.bf16.msra.mxu0 %v1408
    %2126 = vmatprep.subr.bf16.mxu0 %v1417
    %2127 = vmatpush1.bf16.msra.mxu0 %v1416
    %2128 = vmatprep.mubr.bf16.mxu0 %v493
    %2129 = vmatmul.mubr.bf16.gmra.mrb[0].mxu0 %v492
    %v2130 = vpop.f32.mrb[0].mxu0
    %v2131 = vadd.f32 %v423, %v2130
    %v2132 = vpop.f32.mrb[0].mxu0
    %v2133 = vadd.f32 %v427, %v2132
    %v2134 = vpop.f32.mrb[0].mxu0
    %v2135 = vadd.f32 %v423, %v2134
    %v2136 = vpop.f32.mrb[0].mxu0
    %v2137 = vadd.f32 %v427, %v2136
    %2138 = vmatprep.mubr.bf16.mxu0 %v497
    %2139 = vmatmul.mubr.bf16.gmra.mrb[0].mxu0 %v496
    %v2140 = vpop.f32.mrb[0].mxu0
    %v2141 = vadd.f32 %v423, %v2140
    %v2142 = vpop.f32.mrb[0].mxu0
    %v2143 = vadd.f32 %v427, %v2142
    %v2144 = vpop.f32.mrb[0].mxu0
    %v2145 = vadd.f32 %v423, %v2144
    %v2146 = vpop.f32.mrb[0].mxu0
    %v2147 = vadd.f32 %v427, %v2146
    %2148 = vmatprep.mubr.bf16.mxu0 %v501
    %2149 = vmatmul.mubr.bf16.gmra.mrb[0].mxu0 %v500
    %v2150 = vpop.f32.mrb[0].mxu0
    %v2151 = vadd.f32 %v423, %v2150
    %v2152 = vpop.f32.mrb[0].mxu0
    %v2153 = vadd.f32 %v427, %v2152
    %v2154 = vpop.f32.mrb[0].mxu0
    %v2155 = vadd.f32 %v423, %v2154
    %v2156 = vpop.f32.mrb[0].mxu0
    %v2157 = vadd.f32 %v427, %v2156
    %2158 = vmatprep.mubr.bf16.mxu0 %v505
    %2159 = vmatmul.mubr.bf16.gmra.mrb[0].mxu0 %v504
    %v2160 = vpop.f32.mrb[0].mxu0
    %v2161 = vadd.f32 %v423, %v2160
    %v2162 = vpop.f32.mrb[0].mxu0
    %v2163 = vadd.f32 %v427, %v2162
    %v2164 = vpop.f32.mrb[0].mxu0
    %v2165 = vadd.f32 %v423, %v2164
    %v2166 = vpop.f32.mrb[0].mxu0
    %v2167 = vadd.f32 %v427, %v2166
    %2168 = vdwg.mxu0
    %2169 = vmatprep.subr.bf16.mxu0 %v1425
    %2170 = vmatpush1.bf16.msra.mxu0 %v1424
    %2171 = vmatprep.subr.bf16.mxu0 %v1433
    %2172 = vmatpush1.bf16.msra.mxu0 %v1432
    %2173 = vmatprep.subr.bf16.mxu0 %v1441
    %2174 = vmatpush1.bf16.msra.mxu0 %v1440
    %2175 = vmatprep.subr.bf16.mxu0 %v1449
    %2176 = vmatpush1.bf16.msra.mxu0 %v1448
    %2177 = vmatprep.subr.bf16.mxu0 %v1457
    %2178 = vmatpush1.bf16.msra.mxu0 %v1456
    %2179 = vmatprep.subr.bf16.mxu0 %v1465
    %2180 = vmatpush1.bf16.msra.mxu0 %v1464
    %2181 = vmatprep.subr.bf16.mxu0 %v1473
    %2182 = vmatpush1.bf16.msra.mxu0 %v1472
    %2183 = vmatprep.subr.bf16.mxu0 %v1481
    %2184 = vmatpush1.bf16.msra.mxu0 %v1480
    %2185 = vmatprep.subr.bf16.mxu0 %v1489
    %2186 = vmatpush1.bf16.msra.mxu0 %v1488
    %2187 = vmatprep.subr.bf16.mxu0 %v1497
    %2188 = vmatpush1.bf16.msra.mxu0 %v1496
    %2189 = vmatprep.subr.bf16.mxu0 %v1505
    %2190 = vmatpush1.bf16.msra.mxu0 %v1504
    %2191 = vmatprep.subr.bf16.mxu0 %v1513
    %2192 = vmatpush1.bf16.msra.mxu0 %v1512
    %2193 = vmatprep.subr.bf16.mxu0 %v1521
    %2194 = vmatpush1.bf16.msra.mxu0 %v1520
    %2195 = vmatprep.subr.bf16.mxu0 %v1529
    %2196 = vmatpush1.bf16.msra.mxu0 %v1528
    %2197 = vmatprep.subr.bf16.mxu0 %v1537
    %2198 = vmatpush1.bf16.msra.mxu0 %v1536
    %2199 = vmatprep.subr.bf16.mxu0 %v1545
    %2200 = vmatpush1.bf16.msra.mxu0 %v1544
    %2201 = vmatprep.mubr.bf16.mxu0 %v495
    %2202 = vmatmul.mubr.bf16.gmra.mrb[0].mxu0 %v494
    %v2203 = vpop.f32.mrb[0].mxu0
    %v2204 = vadd.f32 %v2131, %v2203
    %v2205 = vpop.f32.mrb[0].mxu0
    %v2206 = vadd.f32 %v2133, %v2205
    %v2207 = vpop.f32.mrb[0].mxu0
    %v2208 = vadd.f32 %v2135, %v2207
    %v2209 = vpop.f32.mrb[0].mxu0
    %v2210 = vadd.f32 %v2137, %v2209
    %2211 = vmatprep.mubr.bf16.mxu0 %v499
    %2212 = vmatmul.mubr.bf16.gmra.mrb[0].mxu0 %v498
    %v2213 = vpop.f32.mrb[0].mxu0
    %v2214 = vadd.f32 %v2141, %v2213
    %v2215 = vpop.f32.mrb[0].mxu0
    %v2216 = vadd.f32 %v2143, %v2215
    %v2217 = vpop.f32.mrb[0].mxu0
    %v2218 = vadd.f32 %v2145, %v2217
    %v2219 = vpop.f32.mrb[0].mxu0
    %v2220 = vadd.f32 %v2147, %v2219
    %2221 = vmatprep.mubr.bf16.mxu0 %v503
    %2222 = vmatmul.mubr.bf16.gmra.mrb[0].mxu0 %v502
    %v2223 = vpop.f32.mrb[0].mxu0
    %v2224 = vadd.f32 %v2151, %v2223
    %v2225 = vpop.f32.mrb[0].mxu0
    %v2226 = vadd.f32 %v2153, %v2225
    %v2227 = vpop.f32.mrb[0].mxu0
    %v2228 = vadd.f32 %v2155, %v2227
    %v2229 = vpop.f32.mrb[0].mxu0
    %v2230 = vadd.f32 %v2157, %v2229
    %2231 = vmatprep.mubr.bf16.mxu0 %v507
    %2232 = vmatmul.mubr.bf16.gmra.mrb[0].mxu0 %v506
    %v2233 = vpop.f32.mrb[0].mxu0
    %v2234 = vadd.f32 %v2161, %v2233
    %v2235 = vpop.f32.mrb[0].mxu0
    %v2236 = vadd.f32 %v2163, %v2235
    %v2237 = vpop.f32.mrb[0].mxu0
    %v2238 = vadd.f32 %v2165, %v2237
    %v2239 = vpop.f32.mrb[0].mxu0
    %v2240 = vadd.f32 %v2167, %v2239
    %2241 = vdwg.mxu0
    %2242 = vmatprep.subr.bf16.mxu0 %v1299
    %2243 = vmatpush1.bf16.msra.mxu0 %v1298
    %2244 = vmatprep.subr.bf16.mxu0 %v1307
    %2245 = vmatpush1.bf16.msra.mxu0 %v1306
    %2246 = vmatprep.subr.bf16.mxu0 %v1315
    %2247 = vmatpush1.bf16.msra.mxu0 %v1314
    %2248 = vmatprep.subr.bf16.mxu0 %v1323
    %2249 = vmatpush1.bf16.msra.mxu0 %v1322
    %2250 = vmatprep.subr.bf16.mxu0 %v1331
    %2251 = vmatpush1.bf16.msra.mxu0 %v1330
    %2252 = vmatprep.subr.bf16.mxu0 %v1339
    %2253 = vmatpush1.bf16.msra.mxu0 %v1338
    %2254 = vmatprep.subr.bf16.mxu0 %v1347
    %2255 = vmatpush1.bf16.msra.mxu0 %v1346
    %2256 = vmatprep.subr.bf16.mxu0 %v1355
    %2257 = vmatpush1.bf16.msra.mxu0 %v1354
    %2258 = vmatprep.subr.bf16.mxu0 %v1363
    %2259 = vmatpush1.bf16.msra.mxu0 %v1362
    %2260 = vmatprep.subr.bf16.mxu0 %v1371
    %2261 = vmatpush1.bf16.msra.mxu0 %v1370
    %2262 = vmatprep.subr.bf16.mxu0 %v1379
    %2263 = vmatpush1.bf16.msra.mxu0 %v1378
    %2264 = vmatprep.subr.bf16.mxu0 %v1387
    %2265 = vmatpush1.bf16.msra.mxu0 %v1386
    %2266 = vmatprep.subr.bf16.mxu0 %v1395
    %2267 = vmatpush1.bf16.msra.mxu0 %v1394
    %2268 = vmatprep.subr.bf16.mxu0 %v1403
    %2269 = vmatpush1.bf16.msra.mxu0 %v1402
    %2270 = vmatprep.subr.bf16.mxu0 %v1411
    %2271 = vmatpush1.bf16.msra.mxu0 %v1410
    %2272 = vmatprep.subr.bf16.mxu0 %v1419
    %2273 = vmatpush1.bf16.msra.mxu0 %v1418
    %2274 = vmatprep.mubr.bf16.mxu0 %v493
    %2275 = vmatmul.mubr.bf16.gmra.mrb[0].mxu0 %v492
    %v2276 = vpop.f32.mrb[0].mxu0
    %v2277 = vadd.f32 %v431, %v2276
    %v2278 = vpop.f32.mrb[0].mxu0
    %v2279 = vadd.f32 %v435, %v2278
    %v2280 = vpop.f32.mrb[0].mxu0
    %v2281 = vadd.f32 %v431, %v2280
    %v2282 = vpop.f32.mrb[0].mxu0
    %v2283 = vadd.f32 %v435, %v2282
    %2284 = vmatprep.mubr.bf16.mxu0 %v497
    %2285 = vmatmul.mubr.bf16.gmra.mrb[0].mxu0 %v496
    %v2286 = vpop.f32.mrb[0].mxu0
    %v2287 = vadd.f32 %v431, %v2286
    %v2288 = vpop.f32.mrb[0].mxu0
    %v2289 = vadd.f32 %v435, %v2288
    %v2290 = vpop.f32.mrb[0].mxu0
    %v2291 = vadd.f32 %v431, %v2290
    %v2292 = vpop.f32.mrb[0].mxu0
    %v2293 = vadd.f32 %v435, %v2292
    %2294 = vmatprep.mubr.bf16.mxu0 %v501
    %2295 = vmatmul.mubr.bf16.gmra.mrb[0].mxu0 %v500
    %v2296 = vpop.f32.mrb[0].mxu0
    %v2297 = vadd.f32 %v431, %v2296
    %v2298 = vpop.f32.mrb[0].mxu0
    %v2299 = vadd.f32 %v435, %v2298
    %v2300 = vpop.f32.mrb[0].mxu0
    %v2301 = vadd.f32 %v431, %v2300
    %v2302 = vpop.f32.mrb[0].mxu0
    %v2303 = vadd.f32 %v435, %v2302
    %2304 = vmatprep.mubr.bf16.mxu0 %v505
    %2305 = vmatmul.mubr.bf16.gmra.mrb[0].mxu0 %v504
    %v2306 = vpop.f32.mrb[0].mxu0
    %v2307 = vadd.f32 %v431, %v2306
    %v2308 = vpop.f32.mrb[0].mxu0
    %v2309 = vadd.f32 %v435, %v2308
    %v2310 = vpop.f32.mrb[0].mxu0
    %v2311 = vadd.f32 %v431, %v2310
    %v2312 = vpop.f32.mrb[0].mxu0
    %v2313 = vadd.f32 %v435, %v2312
    %2314 = vdwg.mxu0
    %2315 = vmatprep.subr.bf16.mxu0 %v1427
    %2316 = vmatpush1.bf16.msra.mxu0 %v1426
    %2317 = vmatprep.subr.bf16.mxu0 %v1435
    %2318 = vmatpush1.bf16.msra.mxu0 %v1434
    %2319 = vmatprep.subr.bf16.mxu0 %v1443
    %2320 = vmatpush1.bf16.msra.mxu0 %v1442
    %2321 = vmatprep.subr.bf16.mxu0 %v1451
    %2322 = vmatpush1.bf16.msra.mxu0 %v1450
    %2323 = vmatprep.subr.bf16.mxu0 %v1459
    %2324 = vmatpush1.bf16.msra.mxu0 %v1458
    %2325 = vmatprep.subr.bf16.mxu0 %v1467
    %2326 = vmatpush1.bf16.msra.mxu0 %v1466
    %2327 = vmatprep.subr.bf16.mxu0 %v1475
    %2328 = vmatpush1.bf16.msra.mxu0 %v1474
    %2329 = vmatprep.subr.bf16.mxu0 %v1483
    %2330 = vmatpush1.bf16.msra.mxu0 %v1482
    %2331 = vmatprep.subr.bf16.mxu0 %v1491
    %2332 = vmatpush1.bf16.msra.mxu0 %v1490
    %2333 = vmatprep.subr.bf16.mxu0 %v1499
    %2334 = vmatpush1.bf16.msra.mxu0 %v1498
    %2335 = vmatprep.subr.bf16.mxu0 %v1507
    %2336 = vmatpush1.bf16.msra.mxu0 %v1506
    %2337 = vmatprep.subr.bf16.mxu0 %v1515
    %2338 = vmatpush1.bf16.msra.mxu0 %v1514
    %2339 = vmatprep.subr.bf16.mxu0 %v1523
    %2340 = vmatpush1.bf16.msra.mxu0 %v1522
    %2341 = vmatprep.subr.bf16.mxu0 %v1531
    %2342 = vmatpush1.bf16.msra.mxu0 %v1530
    %2343 = vmatprep.subr.bf16.mxu0 %v1539
    %2344 = vmatpush1.bf16.msra.mxu0 %v1538
    %2345 = vmatprep.subr.bf16.mxu0 %v1547
    %2346 = vmatpush1.bf16.msra.mxu0 %v1546
    %2347 = vmatprep.mubr.bf16.mxu0 %v495
    %2348 = vmatmul.mubr.bf16.gmra.mrb[0].mxu0 %v494
    %v2349 = vpop.f32.mrb[0].mxu0
    %v2350 = vadd.f32 %v2277, %v2349
    %v2351 = vpop.f32.mrb[0].mxu0
    %v2352 = vadd.f32 %v2279, %v2351
    %v2353 = vpop.f32.mrb[0].mxu0
    %v2354 = vadd.f32 %v2281, %v2353
    %v2355 = vpop.f32.mrb[0].mxu0
    %v2356 = vadd.f32 %v2283, %v2355
    %2357 = vmatprep.mubr.bf16.mxu0 %v499
    %2358 = vmatmul.mubr.bf16.gmra.mrb[0].mxu0 %v498
    %v2359 = vpop.f32.mrb[0].mxu0
    %v2360 = vadd.f32 %v2287, %v2359
    %v2361 = vpop.f32.mrb[0].mxu0
    %v2362 = vadd.f32 %v2289, %v2361
    %v2363 = vpop.f32.mrb[0].mxu0
    %v2364 = vadd.f32 %v2291, %v2363
    %v2365 = vpop.f32.mrb[0].mxu0
    %v2366 = vadd.f32 %v2293, %v2365
    %2367 = vmatprep.mubr.bf16.mxu0 %v503
    %2368 = vmatmul.mubr.bf16.gmra.mrb[0].mxu0 %v502
    %v2369 = vpop.f32.mrb[0].mxu0
    %v2370 = vadd.f32 %v2297, %v2369
    %v2371 = vpop.f32.mrb[0].mxu0
    %v2372 = vadd.f32 %v2299, %v2371
    %v2373 = vpop.f32.mrb[0].mxu0
    %v2374 = vadd.f32 %v2301, %v2373
    %v2375 = vpop.f32.mrb[0].mxu0
    %v2376 = vadd.f32 %v2303, %v2375
    %2377 = vmatprep.mubr.bf16.mxu0 %v507
    %2378 = vmatmul.mubr.bf16.gmra.mrb[0].mxu0 %v506
    %v2379 = vpop.f32.mrb[0].mxu0
    %v2380 = vadd.f32 %v2307, %v2379
    %v2381 = vpop.f32.mrb[0].mxu0
    %v2382 = vadd.f32 %v2309, %v2381
    %v2383 = vpop.f32.mrb[0].mxu0
    %v2384 = vadd.f32 %v2311, %v2383
    %v2385 = vpop.f32.mrb[0].mxu0
    %v2386 = vadd.f32 %v2313, %v2385
    %2387 = vdwg.mxu0
    %2388 = vst [vmem:[#allocation2] sm:$0xff] %v1912
    %2389 = vst [vmem:[#allocation2 + $0x8] sm:$0xff] %v1914
    %2390 = vst [vmem:[#allocation2 + $0x10] sm:$0xff] %v2058
    %2391 = vst [vmem:[#allocation2 + $0x18] sm:$0xff] %v2060
    %2392 = vst [vmem:[#allocation2 + $0x20] sm:$0xff] %v2204
    %2393 = vst [vmem:[#allocation2 + $0x28] sm:$0xff] %v2206
    %2394 = vst [vmem:[#allocation2 + $0x30] sm:$0xff] %v2350
    %2395 = vst [vmem:[#allocation2 + $0x38] sm:$0xff] %v2352
    %2396 = vst [vmem:[#allocation2 + $0x40] sm:$0xff] %v1916
    %2397 = vst [vmem:[#allocation2 + $0x48] sm:$0xff] %v1918
    %2398 = vst [vmem:[#allocation2 + $0x50] sm:$0xff] %v2062
    %2399 = vst [vmem:[#allocation2 + $0x58] sm:$0xff] %v2064
    %2400 = vst [vmem:[#allocation2 + $0x60] sm:$0xff] %v2208
    %2401 = vst [vmem:[#allocation2 + $0x68] sm:$0xff] %v2210
    %2402 = vst [vmem:[#allocation2 + $0x70] sm:$0xff] %v2354
    %2403 = vst [vmem:[#allocation2 + $0x78] sm:$0xff] %v2356
    %2404 = vst [vmem:[#allocation2 + $0x80] sm:$0xff] %v1922
    %2405 = vst [vmem:[#allocation2 + $0x88] sm:$0xff] %v1924
    %2406 = vst [vmem:[#allocation2 + $0x90] sm:$0xff] %v2068
    %2407 = vst [vmem:[#allocation2 + $0x98] sm:$0xff] %v2070
    %2408 = vst [vmem:[#allocation2 + $0xa0] sm:$0xff] %v2214
    %2409 = vst [vmem:[#allocation2 + $0xa8] sm:$0xff] %v2216
    %2410 = vst [vmem:[#allocation2 + $0xb0] sm:$0xff] %v2360
    %2411 = vst [vmem:[#allocation2 + $0xb8] sm:$0xff] %v2362
    %2412 = vst [vmem:[#allocation2 + $0xc0] sm:$0xff] %v1926
    %2413 = vst [vmem:[#allocation2 + $0xc8] sm:$0xff] %v1928
    %2414 = vst [vmem:[#allocation2 + $0xd0] sm:$0xff] %v2072
    %2415 = vst [vmem:[#allocation2 + $0xd8] sm:$0xff] %v2074
    %2416 = vst [vmem:[#allocation2 + $0xe0] sm:$0xff] %v2218
    %2417 = vst [vmem:[#allocation2 + $0xe8] sm:$0xff] %v2220
    %2418 = vst [vmem:[#allocation2 + $0xf0] sm:$0xff] %v2364
    %2419 = vst [vmem:[#allocation2 + $0xf8] sm:$0xff] %v2366
    %2420 = vst [vmem:[#allocation2 + $0x100] sm:$0xff] %v1932
    %2421 = vst [vmem:[#allocation2 + $0x108] sm:$0xff] %v1934
    %2422 = vst [vmem:[#allocation2 + $0x110] sm:$0xff] %v2078
    %2423 = vst [vmem:[#allocation2 + $0x118] sm:$0xff] %v2080
    %2424 = vst [vmem:[#allocation2 + $0x120] sm:$0xff] %v2224
    %2425 = vst [vmem:[#allocation2 + $0x128] sm:$0xff] %v2226
    %2426 = vst [vmem:[#allocation2 + $0x130] sm:$0xff] %v2370
    %2427 = vst [vmem:[#allocation2 + $0x138] sm:$0xff] %v2372
    %2428 = vst [vmem:[#allocation2 + $0x140] sm:$0xff] %v1936
    %2429 = vst [vmem:[#allocation2 + $0x148] sm:$0xff] %v1938
    %2430 = vst [vmem:[#allocation2 + $0x150] sm:$0xff] %v2082
    %2431 = vst [vmem:[#allocation2 + $0x158] sm:$0xff] %v2084
    %2432 = vst [vmem:[#allocation2 + $0x160] sm:$0xff] %v2228
    %2433 = vst [vmem:[#allocation2 + $0x168] sm:$0xff] %v2230
    %2434 = vst [vmem:[#allocation2 + $0x170] sm:$0xff] %v2374
    %2435 = vst [vmem:[#allocation2 + $0x178] sm:$0xff] %v2376
    %2436 = vst [vmem:[#allocation2 + $0x180] sm:$0xff] %v1942
    %2437 = vst [vmem:[#allocation2 + $0x188] sm:$0xff] %v1944
    %2438 = vst [vmem:[#allocation2 + $0x190] sm:$0xff] %v2088
    %2439 = vst [vmem:[#allocation2 + $0x198] sm:$0xff] %v2090
    %2440 = vst [vmem:[#allocation2 + $0x1a0] sm:$0xff] %v2234
    %2441 = vst [vmem:[#allocation2 + $0x1a8] sm:$0xff] %v2236
    %2442 = vst [vmem:[#allocation2 + $0x1b0] sm:$0xff] %v2380
    %2443 = vst [vmem:[#allocation2 + $0x1b8] sm:$0xff] %v2382
    %2444 = vst [vmem:[#allocation2 + $0x1c0] sm:$0xff] %v1946
    %2445 = vst [vmem:[#allocation2 + $0x1c8] sm:$0xff] %v1948
    %2446 = vst [vmem:[#allocation2 + $0x1d0] sm:$0xff] %v2092
    %2447 = vst [vmem:[#allocation2 + $0x1d8] sm:$0xff] %v2094
    %2448 = vst [vmem:[#allocation2 + $0x1e0] sm:$0xff] %v2238
    %2449 = vst [vmem:[#allocation2 + $0x1e8] sm:$0xff] %v2240
    %2450 = vst [vmem:[#allocation2 + $0x1f0] sm:$0xff] %v2384
    %2451 = vst [vmem:[#allocation2 + $0x1f8] sm:$0xff] %v2386
    %s2452 = smul.u32 4, 32
    %s2453 = smul.u32 %s2452, 8
    %s2454 = sshll.u32 %s2453, 4
    %2455 = dma.done [#allocation5], %s2454
    %s2456 = smul.u32 0, 8
    %s2457 = smul.addr %s2456, 8
    %s2458 = scalar_lea.vmem [#allocation2], %s2457
    %v2459 = vld [vmem:[%s2458] sm:$0xff]
    %v2460 = vld [vmem:[%s2458 + $0x8] sm:$0xff]
    %v2461 = vld [vmem:[%s2458 + $0x10] sm:$0xff]
    %v2462 = vld [vmem:[%s2458 + $0x18] sm:$0xff]
    %v2463 = vld [vmem:[%s2458 + $0x20] sm:$0xff]
    %v2464 = vld [vmem:[%s2458 + $0x28] sm:$0xff]
    %v2465 = vld [vmem:[%s2458 + $0x30] sm:$0xff]
    %v2466 = vld [vmem:[%s2458 + $0x38] sm:$0xff]
    %v2467 = vld [vmem:[#allocation3] sm:$0xff]
    %v2468 = vld [vmem:[#allocation3 + $0x8] sm:$0xff]
    %v2469 = vld [vmem:[#allocation3 + $0x10] sm:$0xff]
    %v2470 = vld [vmem:[#allocation3 + $0x18] sm:$0xff]
    %v2471 = vld [vmem:[#allocation3 + $0x20] sm:$0xff]
    %v2472 = vld [vmem:[#allocation3 + $0x28] sm:$0xff]
    %v2473 = vld [vmem:[#allocation3 + $0x30] sm:$0xff]
    %v2474 = vld [vmem:[#allocation3 + $0x38] sm:$0xff]
    %v2475 = vld [vmem:[#allocation3 + $0x40] sm:$0xff]
    %v2476 = vld [vmem:[#allocation3 + $0x48] sm:$0xff]
    %v2477 = vld [vmem:[#allocation3 + $0x50] sm:$0xff]
    %v2478 = vld [vmem:[#allocation3 + $0x58] sm:$0xff]
    %v2479 = vld [vmem:[#allocation3 + $0x60] sm:$0xff]
    %v2480 = vld [vmem:[#allocation3 + $0x68] sm:$0xff]
    %v2481 = vld [vmem:[#allocation3 + $0x70] sm:$0xff]
    %v2482 = vld [vmem:[#allocation3 + $0x78] sm:$0xff]
    %v2483 = vld [vmem:[#allocation3 + $0x80] sm:$0xff]
    %v2484 = vld [vmem:[#allocation3 + $0x88] sm:$0xff]
    %v2485 = vld [vmem:[#allocation3 + $0x90] sm:$0xff]
    %v2486 = vld [vmem:[#allocation3 + $0x98] sm:$0xff]
    %v2487 = vld [vmem:[#allocation3 + $0xa0] sm:$0xff]
    %v2488 = vld [vmem:[#allocation3 + $0xa8] sm:$0xff]
    %v2489 = vld [vmem:[#allocation3 + $0xb0] sm:$0xff]
    %v2490 = vld [vmem:[#allocation3 + $0xb8] sm:$0xff]
    %v2491 = vld [vmem:[#allocation3 + $0xc0] sm:$0xff]
    %v2492 = vld [vmem:[#allocation3 + $0xc8] sm:$0xff]
    %v2493 = vld [vmem:[#allocation3 + $0xd0] sm:$0xff]
    %v2494 = vld [vmem:[#allocation3 + $0xd8] sm:$0xff]
    %v2495 = vld [vmem:[#allocation3 + $0xe0] sm:$0xff]
    %v2496 = vld [vmem:[#allocation3 + $0xe8] sm:$0xff]
    %v2497 = vld [vmem:[#allocation3 + $0xf0] sm:$0xff]
    %v2498 = vld [vmem:[#allocation3 + $0xf8] sm:$0xff]
    %v2499 = vld [vmem:[#allocation3 + $0x100] sm:$0xff]
    %v2500 = vld [vmem:[#allocation3 + $0x108] sm:$0xff]
    %v2501 = vld [vmem:[#allocation3 + $0x110] sm:$0xff]
    %v2502 = vld [vmem:[#allocation3 + $0x118] sm:$0xff]
    %v2503 = vld [vmem:[#allocation3 + $0x120] sm:$0xff]
    %v2504 = vld [vmem:[#allocation3 + $0x128] sm:$0xff]
    %v2505 = vld [vmem:[#allocation3 + $0x130] sm:$0xff]
    %v2506 = vld [vmem:[#allocation3 + $0x138] sm:$0xff]
    %v2507 = vld [vmem:[#allocation3 + $0x140] sm:$0xff]
    %v2508 = vld [vmem:[#allocation3 + $0x148] sm:$0xff]
    %v2509 = vld [vmem:[#allocation3 + $0x150] sm:$0xff]
    %v2510 = vld [vmem:[#allocation3 + $0x158] sm:$0xff]
    %v2511 = vld [vmem:[#allocation3 + $0x160] sm:$0xff]
    %v2512 = vld [vmem:[#allocation3 + $0x168] sm:$0xff]
    %v2513 = vld [vmem:[#allocation3 + $0x170] sm:$0xff]
    %v2514 = vld [vmem:[#allocation3 + $0x178] sm:$0xff]
    %v2515 = vld [vmem:[#allocation3 + $0x180] sm:$0xff]
    %v2516 = vld [vmem:[#allocation3 + $0x188] sm:$0xff]
    %v2517 = vld [vmem:[#allocation3 + $0x190] sm:$0xff]
    %v2518 = vld [vmem:[#allocation3 + $0x198] sm:$0xff]
    %v2519 = vld [vmem:[#allocation3 + $0x1a0] sm:$0xff]
    %v2520 = vld [vmem:[#allocation3 + $0x1a8] sm:$0xff]
    %v2521 = vld [vmem:[#allocation3 + $0x1b0] sm:$0xff]
    %v2522 = vld [vmem:[#allocation3 + $0x1b8] sm:$0xff]
    %v2523 = vld [vmem:[#allocation3 + $0x1c0] sm:$0xff]
    %v2524 = vld [vmem:[#allocation3 + $0x1c8] sm:$0xff]
    %v2525 = vld [vmem:[#allocation3 + $0x1d0] sm:$0xff]
    %v2526 = vld [vmem:[#allocation3 + $0x1d8] sm:$0xff]
    %v2527 = vld [vmem:[#allocation3 + $0x1e0] sm:$0xff]
    %v2528 = vld [vmem:[#allocation3 + $0x1e8] sm:$0xff]
    %v2529 = vld [vmem:[#allocation3 + $0x1f0] sm:$0xff]
    %v2530 = vld [vmem:[#allocation3 + $0x1f8] sm:$0xff]
    %v2531 = vld [vmem:[#allocation3 + $0x200] sm:$0xff]
    %v2532 = vld [vmem:[#allocation3 + $0x208] sm:$0xff]
    %v2533 = vld [vmem:[#allocation3 + $0x210] sm:$0xff]
    %v2534 = vld [vmem:[#allocation3 + $0x218] sm:$0xff]
    %v2535 = vld [vmem:[#allocation3 + $0x220] sm:$0xff]
    %v2536 = vld [vmem:[#allocation3 + $0x228] sm:$0xff]
    %v2537 = vld [vmem:[#allocation3 + $0x230] sm:$0xff]
    %v2538 = vld [vmem:[#allocation3 + $0x238] sm:$0xff]
    %v2539 = vld [vmem:[#allocation3 + $0x240] sm:$0xff]
    %v2540 = vld [vmem:[#allocation3 + $0x248] sm:$0xff]
    %v2541 = vld [vmem:[#allocation3 + $0x250] sm:$0xff]
    %v2542 = vld [vmem:[#allocation3 + $0x258] sm:$0xff]
    %v2543 = vld [vmem:[#allocation3 + $0x260] sm:$0xff]
    %v2544 = vld [vmem:[#allocation3 + $0x268] sm:$0xff]
    %v2545 = vld [vmem:[#allocation3 + $0x270] sm:$0xff]
    %v2546 = vld [vmem:[#allocation3 + $0x278] sm:$0xff]
    %v2547 = vld [vmem:[#allocation3 + $0x280] sm:$0xff]
    %v2548 = vld [vmem:[#allocation3 + $0x288] sm:$0xff]
    %v2549 = vld [vmem:[#allocation3 + $0x290] sm:$0xff]
    %v2550 = vld [vmem:[#allocation3 + $0x298] sm:$0xff]
    %v2551 = vld [vmem:[#allocation3 + $0x2a0] sm:$0xff]
    %v2552 = vld [vmem:[#allocation3 + $0x2a8] sm:$0xff]
    %v2553 = vld [vmem:[#allocation3 + $0x2b0] sm:$0xff]
    %v2554 = vld [vmem:[#allocation3 + $0x2b8] sm:$0xff]
    %v2555 = vld [vmem:[#allocation3 + $0x2c0] sm:$0xff]
    %v2556 = vld [vmem:[#allocation3 + $0x2c8] sm:$0xff]
    %v2557 = vld [vmem:[#allocation3 + $0x2d0] sm:$0xff]
    %v2558 = vld [vmem:[#allocation3 + $0x2d8] sm:$0xff]
    %v2559 = vld [vmem:[#allocation3 + $0x2e0] sm:$0xff]
    %v2560 = vld [vmem:[#allocation3 + $0x2e8] sm:$0xff]
    %v2561 = vld [vmem:[#allocation3 + $0x2f0] sm:$0xff]
    %v2562 = vld [vmem:[#allocation3 + $0x2f8] sm:$0xff]
    %v2563 = vld [vmem:[#allocation3 + $0x300] sm:$0xff]
    %v2564 = vld [vmem:[#allocation3 + $0x308] sm:$0xff]
    %v2565 = vld [vmem:[#allocation3 + $0x310] sm:$0xff]
    %v2566 = vld [vmem:[#allocation3 + $0x318] sm:$0xff]
    %v2567 = vld [vmem:[#allocation3 + $0x320] sm:$0xff]
    %v2568 = vld [vmem:[#allocation3 + $0x328] sm:$0xff]
    %v2569 = vld [vmem:[#allocation3 + $0x330] sm:$0xff]
    %v2570 = vld [vmem:[#allocation3 + $0x338] sm:$0xff]
    %v2571 = vld [vmem:[#allocation3 + $0x340] sm:$0xff]
    %v2572 = vld [vmem:[#allocation3 + $0x348] sm:$0xff]
    %v2573 = vld [vmem:[#allocation3 + $0x350] sm:$0xff]
    %v2574 = vld [vmem:[#allocation3 + $0x358] sm:$0xff]
    %v2575 = vld [vmem:[#allocation3 + $0x360] sm:$0xff]
    %v2576 = vld [vmem:[#allocation3 + $0x368] sm:$0xff]
    %v2577 = vld [vmem:[#allocation3 + $0x370] sm:$0xff]
    %v2578 = vld [vmem:[#allocation3 + $0x378] sm:$0xff]
    %v2579 = vld [vmem:[#allocation3 + $0x380] sm:$0xff]
    %v2580 = vld [vmem:[#allocation3 + $0x388] sm:$0xff]
    %v2581 = vld [vmem:[#allocation3 + $0x390] sm:$0xff]
    %v2582 = vld [vmem:[#allocation3 + $0x398] sm:$0xff]
    %v2583 = vld [vmem:[#allocation3 + $0x3a0] sm:$0xff]
    %v2584 = vld [vmem:[#allocation3 + $0x3a8] sm:$0xff]
    %v2585 = vld [vmem:[#allocation3 + $0x3b0] sm:$0xff]
    %v2586 = vld [vmem:[#allocation3 + $0x3b8] sm:$0xff]
    %v2587 = vld [vmem:[#allocation3 + $0x3c0] sm:$0xff]
    %v2588 = vld [vmem:[#allocation3 + $0x3c8] sm:$0xff]
    %v2589 = vld [vmem:[#allocation3 + $0x3d0] sm:$0xff]
    %v2590 = vld [vmem:[#allocation3 + $0x3d8] sm:$0xff]
    %v2591 = vld [vmem:[#allocation3 + $0x3e0] sm:$0xff]
    %v2592 = vld [vmem:[#allocation3 + $0x3e8] sm:$0xff]
    %v2593 = vld [vmem:[#allocation3 + $0x3f0] sm:$0xff]
    %v2594 = vld [vmem:[#allocation3 + $0x3f8] sm:$0xff]
    %2595 = vmatprep.subr.bf16.mxu0 %v2468
    %2596 = vmatpush1.bf16.msra.mxu0 %v2467
    %2597 = vmatprep.subr.bf16.mxu0 %v2476
    %2598 = vmatpush1.bf16.msra.mxu0 %v2475
    %2599 = vmatprep.subr.bf16.mxu0 %v2484
    %2600 = vmatpush1.bf16.msra.mxu0 %v2483
    %2601 = vmatprep.subr.bf16.mxu0 %v2492
    %2602 = vmatpush1.bf16.msra.mxu0 %v2491
    %2603 = vmatprep.subr.bf16.mxu0 %v2500
    %2604 = vmatpush1.bf16.msra.mxu0 %v2499
    %2605 = vmatprep.subr.bf16.mxu0 %v2508
    %2606 = vmatpush1.bf16.msra.mxu0 %v2507
    %2607 = vmatprep.subr.bf16.mxu0 %v2516
    %2608 = vmatpush1.bf16.msra.mxu0 %v2515
    %2609 = vmatprep.subr.bf16.mxu0 %v2524
    %2610 = vmatpush1.bf16.msra.mxu0 %v2523
    %2611 = vmatprep.subr.bf16.mxu0 %v2532
    %2612 = vmatpush1.bf16.msra.mxu0 %v2531
    %2613 = vmatprep.subr.bf16.mxu0 %v2540
    %2614 = vmatpush1.bf16.msra.mxu0 %v2539
    %2615 = vmatprep.subr.bf16.mxu0 %v2548
    %2616 = vmatpush1.bf16.msra.mxu0 %v2547
    %2617 = vmatprep.subr.bf16.mxu0 %v2556
    %2618 = vmatpush1.bf16.msra.mxu0 %v2555
    %2619 = vmatprep.subr.bf16.mxu0 %v2564
    %2620 = vmatpush1.bf16.msra.mxu0 %v2563
    %2621 = vmatprep.subr.bf16.mxu0 %v2572
    %2622 = vmatpush1.bf16.msra.mxu0 %v2571
    %2623 = vmatprep.subr.bf16.mxu0 %v2580
    %2624 = vmatpush1.bf16.msra.mxu0 %v2579
    %2625 = vmatprep.subr.bf16.mxu0 %v2588
    %2626 = vmatpush1.bf16.msra.mxu0 %v2587
    %2627 = vmatprep.mubr.bf16.mxu0 0
    %2628 = vmatmul.mubr.bf16.gmra.mrb[0].mxu0 0
    %v2629 = vpop.f32.mrb[0].mxu0
    %v2630 = vadd.f32 0.0, %v2629
    %v2631 = vpop.f32.mrb[0].mxu0
    %v2632 = vadd.f32 0.0, %v2631
    %v2633 = vpop.f32.mrb[0].mxu0
    %v2634 = vpop.f32.mrb[0].mxu0
    %2635 = vdwg.mxu0
    %2636 = vmatprep.subr.bf16.mxu0 %v2470
    %2637 = vmatpush1.bf16.msra.mxu0 %v2469
    %2638 = vmatprep.subr.bf16.mxu0 %v2478
    %2639 = vmatpush1.bf16.msra.mxu0 %v2477
    %2640 = vmatprep.subr.bf16.mxu0 %v2486
    %2641 = vmatpush1.bf16.msra.mxu0 %v2485
    %2642 = vmatprep.subr.bf16.mxu0 %v2494
    %2643 = vmatpush1.bf16.msra.mxu0 %v2493
    %2644 = vmatprep.subr.bf16.mxu0 %v2502
    %2645 = vmatpush1.bf16.msra.mxu0 %v2501
    %2646 = vmatprep.subr.bf16.mxu0 %v2510
    %2647 = vmatpush1.bf16.msra.mxu0 %v2509
    %2648 = vmatprep.subr.bf16.mxu0 %v2518
    %2649 = vmatpush1.bf16.msra.mxu0 %v2517
    %2650 = vmatprep.subr.bf16.mxu0 %v2526
    %2651 = vmatpush1.bf16.msra.mxu0 %v2525
    %2652 = vmatprep.subr.bf16.mxu0 %v2534
    %2653 = vmatpush1.bf16.msra.mxu0 %v2533
    %2654 = vmatprep.subr.bf16.mxu0 %v2542
    %2655 = vmatpush1.bf16.msra.mxu0 %v2541
    %2656 = vmatprep.subr.bf16.mxu0 %v2550
    %2657 = vmatpush1.bf16.msra.mxu0 %v2549
    %2658 = vmatprep.subr.bf16.mxu0 %v2558
    %2659 = vmatpush1.bf16.msra.mxu0 %v2557
    %2660 = vmatprep.subr.bf16.mxu0 %v2566
    %2661 = vmatpush1.bf16.msra.mxu0 %v2565
    %2662 = vmatprep.subr.bf16.mxu0 %v2574
    %2663 = vmatpush1.bf16.msra.mxu0 %v2573
    %2664 = vmatprep.subr.bf16.mxu0 %v2582
    %2665 = vmatpush1.bf16.msra.mxu0 %v2581
    %2666 = vmatprep.subr.bf16.mxu0 %v2590
    %2667 = vmatpush1.bf16.msra.mxu0 %v2589
    %2668 = vmatprep.mubr.bf16.mxu0 0
    %2669 = vmatmul.mubr.bf16.gmra.mrb[0].mxu0 0
    %v2670 = vpop.f32.mrb[0].mxu0
    %v2671 = vadd.f32 0.0, %v2670
    %v2672 = vpop.f32.mrb[0].mxu0
    %v2673 = vadd.f32 0.0, %v2672
    %v2674 = vpop.f32.mrb[0].mxu0
    %v2675 = vpop.f32.mrb[0].mxu0
    %2676 = vdwg.mxu0
    %2677 = vmatprep.subr.bf16.mxu0 %v2472
    %2678 = vmatpush1.bf16.msra.mxu0 %v2471
    %2679 = vmatprep.subr.bf16.mxu0 %v2480
    %2680 = vmatpush1.bf16.msra.mxu0 %v2479
    %2681 = vmatprep.subr.bf16.mxu0 %v2488
    %2682 = vmatpush1.bf16.msra.mxu0 %v2487
    %2683 = vmatprep.subr.bf16.mxu0 %v2496
    %2684 = vmatpush1.bf16.msra.mxu0 %v2495
    %2685 = vmatprep.subr.bf16.mxu0 %v2504
    %2686 = vmatpush1.bf16.msra.mxu0 %v2503
    %2687 = vmatprep.subr.bf16.mxu0 %v2512
    %2688 = vmatpush1.bf16.msra.mxu0 %v2511
    %2689 = vmatprep.subr.bf16.mxu0 %v2520
    %2690 = vmatpush1.bf16.msra.mxu0 %v2519
    %2691 = vmatprep.subr.bf16.mxu0 %v2528
    %2692 = vmatpush1.bf16.msra.mxu0 %v2527
    %2693 = vmatprep.subr.bf16.mxu0 %v2536
    %2694 = vmatpush1.bf16.msra.mxu0 %v2535
    %2695 = vmatprep.subr.bf16.mxu0 %v2544
    %2696 = vmatpush1.bf16.msra.mxu0 %v2543
    %2697 = vmatprep.subr.bf16.mxu0 %v2552
    %2698 = vmatpush1.bf16.msra.mxu0 %v2551
    %2699 = vmatprep.subr.bf16.mxu0 %v2560
    %2700 = vmatpush1.bf16.msra.mxu0 %v2559
    %2701 = vmatprep.subr.bf16.mxu0 %v2568
    %2702 = vmatpush1.bf16.msra.mxu0 %v2567
    %2703 = vmatprep.subr.bf16.mxu0 %v2576
    %2704 = vmatpush1.bf16.msra.mxu0 %v2575
    %2705 = vmatprep.subr.bf16.mxu0 %v2584
    %2706 = vmatpush1.bf16.msra.mxu0 %v2583
    %2707 = vmatprep.subr.bf16.mxu0 %v2592
    %2708 = vmatpush1.bf16.msra.mxu0 %v2591
    %2709 = vmatprep.mubr.bf16.mxu0 0
    %2710 = vmatmul.mubr.bf16.gmra.mrb[0].mxu0 0
    %v2711 = vpop.f32.mrb[0].mxu0
    %v2712 = vadd.f32 0.0, %v2711
    %v2713 = vpop.f32.mrb[0].mxu0
    %v2714 = vadd.f32 0.0, %v2713
    %v2715 = vpop.f32.mrb[0].mxu0
    %v2716 = vpop.f32.mrb[0].mxu0
    %2717 = vdwg.mxu0
    %2718 = vmatprep.subr.bf16.mxu0 %v2474
    %2719 = vmatpush1.bf16.msra.mxu0 %v2473
    %2720 = vmatprep.subr.bf16.mxu0 %v2482
    %2721 = vmatpush1.bf16.msra.mxu0 %v2481
    %2722 = vmatprep.subr.bf16.mxu0 %v2490
    %2723 = vmatpush1.bf16.msra.mxu0 %v2489
    %2724 = vmatprep.subr.bf16.mxu0 %v2498
    %2725 = vmatpush1.bf16.msra.mxu0 %v2497
    %2726 = vmatprep.subr.bf16.mxu0 %v2506
    %2727 = vmatpush1.bf16.msra.mxu0 %v2505
    %2728 = vmatprep.subr.bf16.mxu0 %v2514
    %2729 = vmatpush1.bf16.msra.mxu0 %v2513
    %2730 = vmatprep.subr.bf16.mxu0 %v2522
    %2731 = vmatpush1.bf16.msra.mxu0 %v2521
    %2732 = vmatprep.subr.bf16.mxu0 %v2530
    %2733 = vmatpush1.bf16.msra.mxu0 %v2529
    %2734 = vmatprep.subr.bf16.mxu0 %v2538
    %2735 = vmatpush1.bf16.msra.mxu0 %v2537
    %2736 = vmatprep.subr.bf16.mxu0 %v2546
    %2737 = vmatpush1.bf16.msra.mxu0 %v2545
    %2738 = vmatprep.subr.bf16.mxu0 %v2554
    %2739 = vmatpush1.bf16.msra.mxu0 %v2553
    %2740 = vmatprep.subr.bf16.mxu0 %v2562
    %2741 = vmatpush1.bf16.msra.mxu0 %v2561
    %2742 = vmatprep.subr.bf16.mxu0 %v2570
    %2743 = vmatpush1.bf16.msra.mxu0 %v2569
    %2744 = vmatprep.subr.bf16.mxu0 %v2578
    %2745 = vmatpush1.bf16.msra.mxu0 %v2577
    %2746 = vmatprep.subr.bf16.mxu0 %v2586
    %2747 = vmatpush1.bf16.msra.mxu0 %v2585
    %2748 = vmatprep.subr.bf16.mxu0 %v2594
    %2749 = vmatpush1.bf16.msra.mxu0 %v2593
    %2750 = vmatprep.mubr.bf16.mxu0 0
    %2751 = vmatmul.mubr.bf16.gmra.mrb[0].mxu0 0
    %v2752 = vpop.f32.mrb[0].mxu0
    %v2753 = vadd.f32 0.0, %v2752
    %v2754 = vpop.f32.mrb[0].mxu0
    %v2755 = vadd.f32 0.0, %v2754
    %v2756 = vpop.f32.mrb[0].mxu0
    %v2757 = vpop.f32.mrb[0].mxu0
    %2758 = vdwg.mxu0
    %v2759 = vadd.f32 %v2459, %v2630
    %v2760 = vadd.f32 %v2460, %v2632
    %v2761 = vadd.f32 %v2461, %v2671
    %v2762 = vadd.f32 %v2462, %v2673
    %v2763 = vadd.f32 %v2463, %v2712
    %v2764 = vadd.f32 %v2464, %v2714
    %v2765 = vadd.f32 %v2465, %v2753
    %v2766 = vadd.f32 %v2466, %v2755
    %v2767 = vxor.u32 %v2759, 2147483648
    %v2768 = vxor.u32 %v2760, 2147483648
    %v2769 = vxor.u32 %v2761, 2147483648
    %v2770 = vxor.u32 %v2762, 2147483648
    %v2771 = vxor.u32 %v2763, 2147483648
    %v2772 = vxor.u32 %v2764, 2147483648
    %v2773 = vmul.f32 %v2767, 1.442695
    %v2774 = vpow.pop %v2773
    %v2775 = vmul.f32 %v2768, 1.442695
    %v2776 = vpow.pop %v2775
    %v2777 = vmul.f32 %v2769, 1.442695
    %v2778 = vpow.pop %v2777
    %v2779 = vmul.f32 %v2770, 1.442695
    %v2780 = vpow.pop %v2779
    %v2781 = vmul.f32 %v2771, 1.442695
    %v2782 = vpow.pop %v2781
    %v2783 = vmul.f32 %v2772, 1.442695
    %v2784 = vpow.pop %v2783
    %v2785 = vadd.f32 %v2774, 1.0
    %v2786 = vadd.f32 %v2776, 1.0
    %v2787 = vadd.f32 %v2778, 1.0
    %v2788 = vadd.f32 %v2780, 1.0
    %v2789 = vadd.f32 %v2782, 1.0
    %v2790 = vadd.f32 %v2784, 1.0
    %v2791 = vrcp.pop %v2785
    %v2792 = vmul.f32 1.0, %v2791
    %v2793 = vrcp.pop %v2786
    %v2794 = vmul.f32 1.0, %v2793
    %v2795 = vrcp.pop %v2787
    %v2796 = vmul.f32 1.0, %v2795
    %v2797 = vrcp.pop %v2788
    %v2798 = vmul.f32 1.0, %v2797
    %v2799 = vrcp.pop %v2789
    %v2800 = vmul.f32 1.0, %v2799
    %v2801 = vrcp.pop %v2790
    %v2802 = vmul.f32 1.0, %v2801
    %v2803 = vtanh.pop %v2765
    %v2804 = vtanh.pop %v2766
    %v2805 = vmul.f32 %v2796, 0.0
    %v2806 = vmul.f32 %v2798, 0.0
    %v2807 = vmul.f32 %v2792, %v2803
    %v2808 = vmul.f32 %v2794, %v2804
    %v2809 = vadd.f32 %v2805, %v2807
    %v2810 = vadd.f32 %v2806, %v2808
    %v2811 = vtanh.pop %v2809
    %v2812 = vtanh.pop %v2810
    %v2813 = vmul.f32 %v2800, %v2811
    %v2814 = vmul.f32 %v2802, %v2812
    %s2815 = smul.u32 1, 8
    %s2816 = smul.addr %s2815, 8
    %s2817 = scalar_lea.vmem [#allocation2], %s2816
    %v2818 = vld [vmem:[%s2817] sm:$0xff]
    %v2819 = vld [vmem:[%s2817 + $0x8] sm:$0xff]
    %v2820 = vld [vmem:[%s2817 + $0x10] sm:$0xff]
    %v2821 = vld [vmem:[%s2817 + $0x18] sm:$0xff]
    %v2822 = vld [vmem:[%s2817 + $0x20] sm:$0xff]
    %v2823 = vld [vmem:[%s2817 + $0x28] sm:$0xff]
    %v2824 = vld [vmem:[%s2817 + $0x30] sm:$0xff]
    %v2825 = vld [vmem:[%s2817 + $0x38] sm:$0xff]
    %v2826 = vpack.c.bf16 %v2813, %v2813
    %v2827 = vpack.c.bf16 %v2814, %v2814
    %2828 = vmatprep.subr.bf16.mxu0 %v2468
    %2829 = vmatpush1.bf16.msra.mxu0 %v2467
    %2830 = vmatprep.subr.bf16.mxu0 %v2476
    %2831 = vmatpush1.bf16.msra.mxu0 %v2475
    %2832 = vmatprep.subr.bf16.mxu0 %v2484
    %2833 = vmatpush1.bf16.msra.mxu0 %v2483
    %2834 = vmatprep.subr.bf16.mxu0 %v2492
    %2835 = vmatpush1.bf16.msra.mxu0 %v2491
    %2836 = vmatprep.subr.bf16.mxu0 %v2500
    %2837 = vmatpush1.bf16.msra.mxu0 %v2499
    %2838 = vmatprep.subr.bf16.mxu0 %v2508
    %2839 = vmatpush1.bf16.msra.mxu0 %v2507
    %2840 = vmatprep.subr.bf16.mxu0 %v2516
    %2841 = vmatpush1.bf16.msra.mxu0 %v2515
    %2842 = vmatprep.subr.bf16.mxu0 %v2524
    %2843 = vmatpush1.bf16.msra.mxu0 %v2523
    %2844 = vmatprep.subr.bf16.mxu0 %v2532
    %2845 = vmatpush1.bf16.msra.mxu0 %v2531
    %2846 = vmatprep.subr.bf16.mxu0 %v2540
    %2847 = vmatpush1.bf16.msra.mxu0 %v2539
    %2848 = vmatprep.subr.bf16.mxu0 %v2548
    %2849 = vmatpush1.bf16.msra.mxu0 %v2547
    %2850 = vmatprep.subr.bf16.mxu0 %v2556
    %2851 = vmatpush1.bf16.msra.mxu0 %v2555
    %2852 = vmatprep.subr.bf16.mxu0 %v2564
    %2853 = vmatpush1.bf16.msra.mxu0 %v2563
    %2854 = vmatprep.subr.bf16.mxu0 %v2572
    %2855 = vmatpush1.bf16.msra.mxu0 %v2571
    %2856 = vmatprep.subr.bf16.mxu0 %v2580
    %2857 = vmatpush1.bf16.msra.mxu0 %v2579
    %2858 = vmatprep.subr.bf16.mxu0 %v2588
    %2859 = vmatpush1.bf16.msra.mxu0 %v2587
    %2860 = vmatprep.mubr.bf16.mxu0 %v2827
    %2861 = vmatmul.mubr.bf16.gmra.mrb[0].mxu0 %v2826
    %v2862 = vpop.f32.mrb[0].mxu0
    %v2863 = vadd.f32 0.0, %v2862
    %v2864 = vpop.f32.mrb[0].mxu0
    %v2865 = vadd.f32 0.0, %v2864
    %v2866 = vpop.f32.mrb[0].mxu0
    %v2867 = vpop.f32.mrb[0].mxu0
    %2868 = vdwg.mxu0
    %2869 = vmatprep.subr.bf16.mxu0 %v2470
    %2870 = vmatpush1.bf16.msra.mxu0 %v2469
    %2871 = vmatprep.subr.bf16.mxu0 %v2478
    %2872 = vmatpush1.bf16.msra.mxu0 %v2477
    %2873 = vmatprep.subr.bf16.mxu0 %v2486
    %2874 = vmatpush1.bf16.msra.mxu0 %v2485
    %2875 = vmatprep.subr.bf16.mxu0 %v2494
    %2876 = vmatpush1.bf16.msra.mxu0 %v2493
    %2877 = vmatprep.subr.bf16.mxu0 %v2502
    %2878 = vmatpush1.bf16.msra.mxu0 %v2501
    %2879 = vmatprep.subr.bf16.mxu0 %v2510
    %2880 = vmatpush1.bf16.msra.mxu0 %v2509
    %2881 = vmatprep.subr.bf16.mxu0 %v2518
    %2882 = vmatpush1.bf16.msra.mxu0 %v2517
    %2883 = vmatprep.subr.bf16.mxu0 %v2526
    %2884 = vmatpush1.bf16.msra.mxu0 %v2525
    %2885 = vmatprep.subr.bf16.mxu0 %v2534
    %2886 = vmatpush1.bf16.msra.mxu0 %v2533
    %2887 = vmatprep.subr.bf16.mxu0 %v2542
    %2888 = vmatpush1.bf16.msra.mxu0 %v2541
    %2889 = vmatprep.subr.bf16.mxu0 %v2550
    %2890 = vmatpush1.bf16.msra.mxu0 %v2549
    %2891 = vmatprep.subr.bf16.mxu0 %v2558
    %2892 = vmatpush1.bf16.msra.mxu0 %v2557
    %2893 = vmatprep.subr.bf16.mxu0 %v2566
    %2894 = vmatpush1.bf16.msra.mxu0 %v2565
    %2895 = vmatprep.subr.bf16.mxu0 %v2574
    %2896 = vmatpush1.bf16.msra.mxu0 %v2573
    %2897 = vmatprep.subr.bf16.mxu0 %v2582
    %2898 = vmatpush1.bf16.msra.mxu0 %v2581
    %2899 = vmatprep.subr.bf16.mxu0 %v2590
    %2900 = vmatpush1.bf16.msra.mxu0 %v2589
    %2901 = vmatprep.mubr.bf16.mxu0 %v2827
    %2902 = vmatmul.mubr.bf16.gmra.mrb[0].mxu0 %v2826
    %v2903 = vpop.f32.mrb[0].mxu0
    %v2904 = vadd.f32 0.0, %v2903
    %v2905 = vpop.f32.mrb[0].mxu0
    %v2906 = vadd.f32 0.0, %v2905
    %v2907 = vpop.f32.mrb[0].mxu0
    %v2908 = vpop.f32.mrb[0].mxu0
    %2909 = vdwg.mxu0
    %2910 = vmatprep.subr.bf16.mxu0 %v2472
    %2911 = vmatpush1.bf16.msra.mxu0 %v2471
    %2912 = vmatprep.subr.bf16.mxu0 %v2480
    %2913 = vmatpush1.bf16.msra.mxu0 %v2479
    %2914 = vmatprep.subr.bf16.mxu0 %v2488
    %2915 = vmatpush1.bf16.msra.mxu0 %v2487
    %2916 = vmatprep.subr.bf16.mxu0 %v2496
    %2917 = vmatpush1.bf16.msra.mxu0 %v2495
    %2918 = vmatprep.subr.bf16.mxu0 %v2504
    %2919 = vmatpush1.bf16.msra.mxu0 %v2503
    %2920 = vmatprep.subr.bf16.mxu0 %v2512
    %2921 = vmatpush1.bf16.msra.mxu0 %v2511
    %2922 = vmatprep.subr.bf16.mxu0 %v2520
    %2923 = vmatpush1.bf16.msra.mxu0 %v2519
    %2924 = vmatprep.subr.bf16.mxu0 %v2528
    %2925 = vmatpush1.bf16.msra.mxu0 %v2527
    %2926 = vmatprep.subr.bf16.mxu0 %v2536
    %2927 = vmatpush1.bf16.msra.mxu0 %v2535
    %2928 = vmatprep.subr.bf16.mxu0 %v2544
    %2929 = vmatpush1.bf16.msra.mxu0 %v2543
    %2930 = vmatprep.subr.bf16.mxu0 %v2552
    %2931 = vmatpush1.bf16.msra.mxu0 %v2551
    %2932 = vmatprep.subr.bf16.mxu0 %v2560
    %2933 = vmatpush1.bf16.msra.mxu0 %v2559
    %2934 = vmatprep.subr.bf16.mxu0 %v2568
    %2935 = vmatpush1.bf16.msra.mxu0 %v2567
    %2936 = vmatprep.subr.bf16.mxu0 %v2576
    %2937 = vmatpush1.bf16.msra.mxu0 %v2575
    %2938 = vmatprep.subr.bf16.mxu0 %v2584
    %2939 = vmatpush1.bf16.msra.mxu0 %v2583
    %2940 = vmatprep.subr.bf16.mxu0 %v2592
    %2941 = vmatpush1.bf16.msra.mxu0 %v2591
    %2942 = vmatprep.mubr.bf16.mxu0 %v2827
    %2943 = vmatmul.mubr.bf16.gmra.mrb[0].mxu0 %v2826
    %v2944 = vpop.f32.mrb[0].mxu0
    %v2945 = vadd.f32 0.0, %v2944
    %v2946 = vpop.f32.mrb[0].mxu0
    %v2947 = vadd.f32 0.0, %v2946
    %v2948 = vpop.f32.mrb[0].mxu0
    %v2949 = vpop.f32.mrb[0].mxu0
    %2950 = vdwg.mxu0
    %2951 = vmatprep.subr.bf16.mxu0 %v2474
    %2952 = vmatpush1.bf16.msra.mxu0 %v2473
    %2953 = vmatprep.subr.bf16.mxu0 %v2482
    %2954 = vmatpush1.bf16.msra.mxu0 %v2481
    %2955 = vmatprep.subr.bf16.mxu0 %v2490
    %2956 = vmatpush1.bf16.msra.mxu0 %v2489
    %2957 = vmatprep.subr.bf16.mxu0 %v2498
    %2958 = vmatpush1.bf16.msra.mxu0 %v2497
    %2959 = vmatprep.subr.bf16.mxu0 %v2506
    %2960 = vmatpush1.bf16.msra.mxu0 %v2505
    %2961 = vmatprep.subr.bf16.mxu0 %v2514
    %2962 = vmatpush1.bf16.msra.mxu0 %v2513
    %2963 = vmatprep.subr.bf16.mxu0 %v2522
    %2964 = vmatpush1.bf16.msra.mxu0 %v2521
    %2965 = vmatprep.subr.bf16.mxu0 %v2530
    %2966 = vmatpush1.bf16.msra.mxu0 %v2529
    %2967 = vmatprep.subr.bf16.mxu0 %v2538
    %2968 = vmatpush1.bf16.msra.mxu0 %v2537
    %2969 = vmatprep.subr.bf16.mxu0 %v2546
    %2970 = vmatpush1.bf16.msra.mxu0 %v2545
    %2971 = vmatprep.subr.bf16.mxu0 %v2554
    %2972 = vmatpush1.bf16.msra.mxu0 %v2553
    %2973 = vmatprep.subr.bf16.mxu0 %v2562
    %2974 = vmatpush1.bf16.msra.mxu0 %v2561
    %2975 = vmatprep.subr.bf16.mxu0 %v2570
    %2976 = vmatpush1.bf16.msra.mxu0 %v2569
    %2977 = vmatprep.subr.bf16.mxu0 %v2578
    %2978 = vmatpush1.bf16.msra.mxu0 %v2577
    %2979 = vmatprep.subr.bf16.mxu0 %v2586
    %2980 = vmatpush1.bf16.msra.mxu0 %v2585
    %2981 = vmatprep.subr.bf16.mxu0 %v2594
    %2982 = vmatpush1.bf16.msra.mxu0 %v2593
    %2983 = vmatprep.mubr.bf16.mxu0 %v2827
    %2984 = vmatmul.mubr.bf16.gmra.mrb[0].mxu0 %v2826
    %v2985 = vpop.f32.mrb[0].mxu0
    %v2986 = vadd.f32 0.0, %v2985
    %v2987 = vpop.f32.mrb[0].mxu0
    %v2988 = vadd.f32 0.0, %v2987
    %v2989 = vpop.f32.mrb[0].mxu0
    %v2990 = vpop.f32.mrb[0].mxu0
    %2991 = vdwg.mxu0
    %v2992 = vadd.f32 %v2818, %v2863
    %v2993 = vadd.f32 %v2819, %v2865
    %v2994 = vadd.f32 %v2820, %v2904
    %v2995 = vadd.f32 %v2821, %v2906
    %v2996 = vadd.f32 %v2822, %v2945
    %v2997 = vadd.f32 %v2823, %v2947
    %v2998 = vadd.f32 %v2824, %v2986
    %v2999 = vadd.f32 %v2825, %v2988
    %v3000 = vxor.u32 %v2992, 2147483648
    %v3001 = vxor.u32 %v2993, 2147483648
    %v3002 = vxor.u32 %v2994, 2147483648
    %v3003 = vxor.u32 %v2995, 2147483648
    %v3004 = vxor.u32 %v2996, 2147483648
    %v3005 = vxor.u32 %v2997, 2147483648
    %v3006 = vmul.f32 %v3000, 1.442695
    %v3007 = vpow.pop %v3006
    %v3008 = vmul.f32 %v3001, 1.442695
    %v3009 = vpow.pop %v3008
    %v3010 = vmul.f32 %v3002, 1.442695
    %v3011 = vpow.pop %v3010
    %v3012 = vmul.f32 %v3003, 1.442695
    %v3013 = vpow.pop %v3012
    %v3014 = vmul.f32 %v3004, 1.442695
    %v3015 = vpow.pop %v3014
    %v3016 = vmul.f32 %v3005, 1.442695
    %v3017 = vpow.pop %v3016
    %v3018 = vadd.f32 %v3007, 1.0
    %v3019 = vadd.f32 %v3009, 1.0
    %v3020 = vadd.f32 %v3011, 1.0
    %v3021 = vadd.f32 %v3013, 1.0
    %v3022 = vadd.f32 %v3015, 1.0
    %v3023 = vadd.f32 %v3017, 1.0
    %v3024 = vrcp.pop %v3018
    %v3025 = vmul.f32 1.0, %v3024
    %v3026 = vrcp.pop %v3019
    %v3027 = vmul.f32 1.0, %v3026
    %v3028 = vrcp.pop %v3020
    %v3029 = vmul.f32 1.0, %v3028
    %v3030 = vrcp.pop %v3021
    %v3031 = vmul.f32 1.0, %v3030
    %v3032 = vrcp.pop %v3022
    %v3033 = vmul.f32 1.0, %v3032
    %v3034 = vrcp.pop %v3023
    %v3035 = vmul.f32 1.0, %v3034
    %v3036 = vtanh.pop %v2998
    %v3037 = vtanh.pop %v2999
    %v3038 = vmul.f32 %v3029, %v2809
    %v3039 = vmul.f32 %v3031, %v2810
    %v3040 = vmul.f32 %v3025, %v3036
    %v3041 = vmul.f32 %v3027, %v3037
    %v3042 = vadd.f32 %v3038, %v3040
    %v3043 = vadd.f32 %v3039, %v3041
    %v3044 = vtanh.pop %v3042
    %v3045 = vtanh.pop %v3043
    %v3046 = vmul.f32 %v3033, %v3044
    %v3047 = vmul.f32 %v3035, %v3045
    %s3048 = smul.u32 2, 8
    %s3049 = smul.addr %s3048, 8
    %s3050 = scalar_lea.vmem [#allocation2], %s3049
    %v3051 = vld [vmem:[%s3050] sm:$0xff]
    %v3052 = vld [vmem:[%s3050 + $0x8] sm:$0xff]
    %v3053 = vld [vmem:[%s3050 + $0x10] sm:$0xff]
    %v3054 = vld [vmem:[%s3050 + $0x18] sm:$0xff]
    %v3055 = vld [vmem:[%s3050 + $0x20] sm:$0xff]
    %v3056 = vld [vmem:[%s3050 + $0x28] sm:$0xff]
    %v3057 = vld [vmem:[%s3050 + $0x30] sm:$0xff]
    %v3058 = vld [vmem:[%s3050 + $0x38] sm:$0xff]
    %v3059 = vpack.c.bf16 %v3046, %v3046
    %v3060 = vpack.c.bf16 %v3047, %v3047
    %3061 = vmatprep.subr.bf16.mxu0 %v2468
    %3062 = vmatpush1.bf16.msra.mxu0 %v2467
    %3063 = vmatprep.subr.bf16.mxu0 %v2476
    %3064 = vmatpush1.bf16.msra.mxu0 %v2475
    %3065 = vmatprep.subr.bf16.mxu0 %v2484
    %3066 = vmatpush1.bf16.msra.mxu0 %v2483
    %3067 = vmatprep.subr.bf16.mxu0 %v2492
    %3068 = vmatpush1.bf16.msra.mxu0 %v2491
    %3069 = vmatprep.subr.bf16.mxu0 %v2500
    %3070 = vmatpush1.bf16.msra.mxu0 %v2499
    %3071 = vmatprep.subr.bf16.mxu0 %v2508
    %3072 = vmatpush1.bf16.msra.mxu0 %v2507
    %3073 = vmatprep.subr.bf16.mxu0 %v2516
    %3074 = vmatpush1.bf16.msra.mxu0 %v2515
    %3075 = vmatprep.subr.bf16.mxu0 %v2524
    %3076 = vmatpush1.bf16.msra.mxu0 %v2523
    %3077 = vmatprep.subr.bf16.mxu0 %v2532
    %3078 = vmatpush1.bf16.msra.mxu0 %v2531
    %3079 = vmatprep.subr.bf16.mxu0 %v2540
    %3080 = vmatpush1.bf16.msra.mxu0 %v2539
    %3081 = vmatprep.subr.bf16.mxu0 %v2548
    %3082 = vmatpush1.bf16.msra.mxu0 %v2547
    %3083 = vmatprep.subr.bf16.mxu0 %v2556
    %3084 = vmatpush1.bf16.msra.mxu0 %v2555
    %3085 = vmatprep.subr.bf16.mxu0 %v2564
    %3086 = vmatpush1.bf16.msra.mxu0 %v2563
    %3087 = vmatprep.subr.bf16.mxu0 %v2572
    %3088 = vmatpush1.bf16.msra.mxu0 %v2571
    %3089 = vmatprep.subr.bf16.mxu0 %v2580
    %3090 = vmatpush1.bf16.msra.mxu0 %v2579
    %3091 = vmatprep.subr.bf16.mxu0 %v2588
    %3092 = vmatpush1.bf16.msra.mxu0 %v2587
    %3093 = vmatprep.mubr.bf16.mxu0 %v3060
    %3094 = vmatmul.mubr.bf16.gmra.mrb[0].mxu0 %v3059
    %v3095 = vpop.f32.mrb[0].mxu0
    %v3096 = vadd.f32 0.0, %v3095
    %v3097 = vpop.f32.mrb[0].mxu0
    %v3098 = vadd.f32 0.0, %v3097
    %v3099 = vpop.f32.mrb[0].mxu0
    %v3100 = vpop.f32.mrb[0].mxu0
    %3101 = vdwg.mxu0
    %3102 = vmatprep.subr.bf16.mxu0 %v2470
    %3103 = vmatpush1.bf16.msra.mxu0 %v2469
    %3104 = vmatprep.subr.bf16.mxu0 %v2478
    %3105 = vmatpush1.bf16.msra.mxu0 %v2477
    %3106 = vmatprep.subr.bf16.mxu0 %v2486
    %3107 = vmatpush1.bf16.msra.mxu0 %v2485
    %3108 = vmatprep.subr.bf16.mxu0 %v2494
    %3109 = vmatpush1.bf16.msra.mxu0 %v2493
    %3110 = vmatprep.subr.bf16.mxu0 %v2502
    %3111 = vmatpush1.bf16.msra.mxu0 %v2501
    %3112 = vmatprep.subr.bf16.mxu0 %v2510
    %3113 = vmatpush1.bf16.msra.mxu0 %v2509
    %3114 = vmatprep.subr.bf16.mxu0 %v2518
    %3115 = vmatpush1.bf16.msra.mxu0 %v2517
    %3116 = vmatprep.subr.bf16.mxu0 %v2526
    %3117 = vmatpush1.bf16.msra.mxu0 %v2525
    %3118 = vmatprep.subr.bf16.mxu0 %v2534
    %3119 = vmatpush1.bf16.msra.mxu0 %v2533
    %3120 = vmatprep.subr.bf16.mxu0 %v2542
    %3121 = vmatpush1.bf16.msra.mxu0 %v2541
    %3122 = vmatprep.subr.bf16.mxu0 %v2550
    %3123 = vmatpush1.bf16.msra.mxu0 %v2549
    %3124 = vmatprep.subr.bf16.mxu0 %v2558
    %3125 = vmatpush1.bf16.msra.mxu0 %v2557
    %3126 = vmatprep.subr.bf16.mxu0 %v2566
    %3127 = vmatpush1.bf16.msra.mxu0 %v2565
    %3128 = vmatprep.subr.bf16.mxu0 %v2574
    %3129 = vmatpush1.bf16.msra.mxu0 %v2573
    %3130 = vmatprep.subr.bf16.mxu0 %v2582
    %3131 = vmatpush1.bf16.msra.mxu0 %v2581
    %3132 = vmatprep.subr.bf16.mxu0 %v2590
    %3133 = vmatpush1.bf16.msra.mxu0 %v2589
    %3134 = vmatprep.mubr.bf16.mxu0 %v3060
    %3135 = vmatmul.mubr.bf16.gmra.mrb[0].mxu0 %v3059
    %v3136 = vpop.f32.mrb[0].mxu0
    %v3137 = vadd.f32 0.0, %v3136
    %v3138 = vpop.f32.mrb[0].mxu0
    %v3139 = vadd.f32 0.0, %v3138
    %v3140 = vpop.f32.mrb[0].mxu0
    %v3141 = vpop.f32.mrb[0].mxu0
    %3142 = vdwg.mxu0
    %3143 = vmatprep.subr.bf16.mxu0 %v2472
    %3144 = vmatpush1.bf16.msra.mxu0 %v2471
    %3145 = vmatprep.subr.bf16.mxu0 %v2480
    %3146 = vmatpush1.bf16.msra.mxu0 %v2479
    %3147 = vmatprep.subr.bf16.mxu0 %v2488
    %3148 = vmatpush1.bf16.msra.mxu0 %v2487
    %3149 = vmatprep.subr.bf16.mxu0 %v2496
    %3150 = vmatpush1.bf16.msra.mxu0 %v2495
    %3151 = vmatprep.subr.bf16.mxu0 %v2504
    %3152 = vmatpush1.bf16.msra.mxu0 %v2503
    %3153 = vmatprep.subr.bf16.mxu0 %v2512
    %3154 = vmatpush1.bf16.msra.mxu0 %v2511
    %3155 = vmatprep.subr.bf16.mxu0 %v2520
    %3156 = vmatpush1.bf16.msra.mxu0 %v2519
    %3157 = vmatprep.subr.bf16.mxu0 %v2528
    %3158 = vmatpush1.bf16.msra.mxu0 %v2527
    %3159 = vmatprep.subr.bf16.mxu0 %v2536
    %3160 = vmatpush1.bf16.msra.mxu0 %v2535
    %3161 = vmatprep.subr.bf16.mxu0 %v2544
    %3162 = vmatpush1.bf16.msra.mxu0 %v2543
    %3163 = vmatprep.subr.bf16.mxu0 %v2552
    %3164 = vmatpush1.bf16.msra.mxu0 %v2551
    %3165 = vmatprep.subr.bf16.mxu0 %v2560
    %3166 = vmatpush1.bf16.msra.mxu0 %v2559
    %3167 = vmatprep.subr.bf16.mxu0 %v2568
    %3168 = vmatpush1.bf16.msra.mxu0 %v2567
    %3169 = vmatprep.subr.bf16.mxu0 %v2576
    %3170 = vmatpush1.bf16.msra.mxu0 %v2575
    %3171 = vmatprep.subr.bf16.mxu0 %v2584
    %3172 = vmatpush1.bf16.msra.mxu0 %v2583
    %3173 = vmatprep.subr.bf16.mxu0 %v2592
    %3174 = vmatpush1.bf16.msra.mxu0 %v2591
    %3175 = vmatprep.mubr.bf16.mxu0 %v3060
    %3176 = vmatmul.mubr.bf16.gmra.mrb[0].mxu0 %v3059
    %v3177 = vpop.f32.mrb[0].mxu0
    %v3178 = vadd.f32 0.0, %v3177
    %v3179 = vpop.f32.mrb[0].mxu0
    %v3180 = vadd.f32 0.0, %v3179
    %v3181 = vpop.f32.mrb[0].mxu0
    %v3182 = vpop.f32.mrb[0].mxu0
    %3183 = vdwg.mxu0
    %3184 = vmatprep.subr.bf16.mxu0 %v2474
    %3185 = vmatpush1.bf16.msra.mxu0 %v2473
    %3186 = vmatprep.subr.bf16.mxu0 %v2482
    %3187 = vmatpush1.bf16.msra.mxu0 %v2481
    %3188 = vmatprep.subr.bf16.mxu0 %v2490
    %3189 = vmatpush1.bf16.msra.mxu0 %v2489
    %3190 = vmatprep.subr.bf16.mxu0 %v2498
    %3191 = vmatpush1.bf16.msra.mxu0 %v2497
    %3192 = vmatprep.subr.bf16.mxu0 %v2506
    %3193 = vmatpush1.bf16.msra.mxu0 %v2505
    %3194 = vmatprep.subr.bf16.mxu0 %v2514
    %3195 = vmatpush1.bf16.msra.mxu0 %v2513
    %3196 = vmatprep.subr.bf16.mxu0 %v2522
    %3197 = vmatpush1.bf16.msra.mxu0 %v2521
    %3198 = vmatprep.subr.bf16.mxu0 %v2530
    %3199 = vmatpush1.bf16.msra.mxu0 %v2529
    %3200 = vmatprep.subr.bf16.mxu0 %v2538
    %3201 = vmatpush1.bf16.msra.mxu0 %v2537
    %3202 = vmatprep.subr.bf16.mxu0 %v2546
    %3203 = vmatpush1.bf16.msra.mxu0 %v2545
    %3204 = vmatprep.subr.bf16.mxu0 %v2554
    %3205 = vmatpush1.bf16.msra.mxu0 %v2553
    %3206 = vmatprep.subr.bf16.mxu0 %v2562
    %3207 = vmatpush1.bf16.msra.mxu0 %v2561
    %3208 = vmatprep.subr.bf16.mxu0 %v2570
    %3209 = vmatpush1.bf16.msra.mxu0 %v2569
    %3210 = vmatprep.subr.bf16.mxu0 %v2578
    %3211 = vmatpush1.bf16.msra.mxu0 %v2577
    %3212 = vmatprep.subr.bf16.mxu0 %v2586
    %3213 = vmatpush1.bf16.msra.mxu0 %v2585
    %3214 = vmatprep.subr.bf16.mxu0 %v2594
    %3215 = vmatpush1.bf16.msra.mxu0 %v2593
    %3216 = vmatprep.mubr.bf16.mxu0 %v3060
    %3217 = vmatmul.mubr.bf16.gmra.mrb[0].mxu0 %v3059
    %v3218 = vpop.f32.mrb[0].mxu0
    %v3219 = vadd.f32 0.0, %v3218
    %v3220 = vpop.f32.mrb[0].mxu0
    %v3221 = vadd.f32 0.0, %v3220
    %v3222 = vpop.f32.mrb[0].mxu0
    %v3223 = vpop.f32.mrb[0].mxu0
    %3224 = vdwg.mxu0
    %v3225 = vadd.f32 %v3051, %v3096
    %v3226 = vadd.f32 %v3052, %v3098
    %v3227 = vadd.f32 %v3053, %v3137
    %v3228 = vadd.f32 %v3054, %v3139
    %v3229 = vadd.f32 %v3055, %v3178
    %v3230 = vadd.f32 %v3056, %v3180
    %v3231 = vadd.f32 %v3057, %v3219
    %v3232 = vadd.f32 %v3058, %v3221
    %v3233 = vxor.u32 %v3225, 2147483648
    %v3234 = vxor.u32 %v3226, 2147483648
    %v3235 = vxor.u32 %v3227, 2147483648
    %v3236 = vxor.u32 %v3228, 2147483648
    %v3237 = vxor.u32 %v3229, 2147483648
    %v3238 = vxor.u32 %v3230, 2147483648
    %v3239 = vmul.f32 %v3233, 1.442695
    %v3240 = vpow.pop %v3239
    %v3241 = vmul.f32 %v3234, 1.442695
    %v3242 = vpow.pop %v3241
    %v3243 = vmul.f32 %v3235, 1.442695
    %v3244 = vpow.pop %v3243
    %v3245 = vmul.f32 %v3236, 1.442695
    %v3246 = vpow.pop %v3245
    %v3247 = vmul.f32 %v3237, 1.442695
    %v3248 = vpow.pop %v3247
    %v3249 = vmul.f32 %v3238, 1.442695
    %v3250 = vpow.pop %v3249
    %v3251 = vadd.f32 %v3240, 1.0
    %v3252 = vadd.f32 %v3242, 1.0
    %v3253 = vadd.f32 %v3244, 1.0
    %v3254 = vadd.f32 %v3246, 1.0
    %v3255 = vadd.f32 %v3248, 1.0
    %v3256 = vadd.f32 %v3250, 1.0
    %v3257 = vrcp.pop %v3251
    %v3258 = vmul.f32 1.0, %v3257
    %v3259 = vrcp.pop %v3252
    %v3260 = vmul.f32 1.0, %v3259
    %v3261 = vrcp.pop %v3253
    %v3262 = vmul.f32 1.0, %v3261
    %v3263 = vrcp.pop %v3254
    %v3264 = vmul.f32 1.0, %v3263
    %v3265 = vrcp.pop %v3255
    %v3266 = vmul.f32 1.0, %v3265
    %v3267 = vrcp.pop %v3256
    %v3268 = vmul.f32 1.0, %v3267
    %v3269 = vtanh.pop %v3231
    %v3270 = vtanh.pop %v3232
    %v3271 = vmul.f32 %v3262, %v3042
    %v3272 = vmul.f32 %v3264, %v3043
    %v3273 = vmul.f32 %v3258, %v3269
    %v3274 = vmul.f32 %v3260, %v3270
    %v3275 = vadd.f32 %v3271, %v3273
    %v3276 = vadd.f32 %v3272, %v3274
    %v3277 = vtanh.pop %v3275
    %v3278 = vtanh.pop %v3276
    %v3279 = vmul.f32 %v3266, %v3277
    %v3280 = vmul.f32 %v3268, %v3278
    %s3281 = smul.u32 3, 8
    %s3282 = smul.addr %s3281, 8
    %s3283 = scalar_lea.vmem [#allocation2], %s3282
    %v3284 = vld [vmem:[%s3283] sm:$0xff]
    %v3285 = vld [vmem:[%s3283 + $0x8] sm:$0xff]
    %v3286 = vld [vmem:[%s3283 + $0x10] sm:$0xff]
    %v3287 = vld [vmem:[%s3283 + $0x18] sm:$0xff]
    %v3288 = vld [vmem:[%s3283 + $0x20] sm:$0xff]
    %v3289 = vld [vmem:[%s3283 + $0x28] sm:$0xff]
    %v3290 = vld [vmem:[%s3283 + $0x30] sm:$0xff]
    %v3291 = vld [vmem:[%s3283 + $0x38] sm:$0xff]
    %v3292 = vpack.c.bf16 %v3279, %v3279
    %v3293 = vpack.c.bf16 %v3280, %v3280
    %3294 = vmatprep.subr.bf16.mxu0 %v2468
    %3295 = vmatpush1.bf16.msra.mxu0 %v2467
    %3296 = vmatprep.subr.bf16.mxu0 %v2476
    %3297 = vmatpush1.bf16.msra.mxu0 %v2475
    %3298 = vmatprep.subr.bf16.mxu0 %v2484
    %3299 = vmatpush1.bf16.msra.mxu0 %v2483
    %3300 = vmatprep.subr.bf16.mxu0 %v2492
    %3301 = vmatpush1.bf16.msra.mxu0 %v2491
    %3302 = vmatprep.subr.bf16.mxu0 %v2500
    %3303 = vmatpush1.bf16.msra.mxu0 %v2499
    %3304 = vmatprep.subr.bf16.mxu0 %v2508
    %3305 = vmatpush1.bf16.msra.mxu0 %v2507
    %3306 = vmatprep.subr.bf16.mxu0 %v2516
    %3307 = vmatpush1.bf16.msra.mxu0 %v2515
    %3308 = vmatprep.subr.bf16.mxu0 %v2524
    %3309 = vmatpush1.bf16.msra.mxu0 %v2523
    %3310 = vmatprep.subr.bf16.mxu0 %v2532
    %3311 = vmatpush1.bf16.msra.mxu0 %v2531
    %3312 = vmatprep.subr.bf16.mxu0 %v2540
    %3313 = vmatpush1.bf16.msra.mxu0 %v2539
    %3314 = vmatprep.subr.bf16.mxu0 %v2548
    %3315 = vmatpush1.bf16.msra.mxu0 %v2547
    %3316 = vmatprep.subr.bf16.mxu0 %v2556
    %3317 = vmatpush1.bf16.msra.mxu0 %v2555
    %3318 = vmatprep.subr.bf16.mxu0 %v2564
    %3319 = vmatpush1.bf16.msra.mxu0 %v2563
    %3320 = vmatprep.subr.bf16.mxu0 %v2572
    %3321 = vmatpush1.bf16.msra.mxu0 %v2571
    %3322 = vmatprep.subr.bf16.mxu0 %v2580
    %3323 = vmatpush1.bf16.msra.mxu0 %v2579
    %3324 = vmatprep.subr.bf16.mxu0 %v2588
    %3325 = vmatpush1.bf16.msra.mxu0 %v2587
    %3326 = vmatprep.mubr.bf16.mxu0 %v3293
    %3327 = vmatmul.mubr.bf16.gmra.mrb[0].mxu0 %v3292
    %v3328 = vpop.f32.mrb[0].mxu0
    %v3329 = vadd.f32 0.0, %v3328
    %v3330 = vpop.f32.mrb[0].mxu0
    %v3331 = vadd.f32 0.0, %v3330
    %v3332 = vpop.f32.mrb[0].mxu0
    %v3333 = vpop.f32.mrb[0].mxu0
    %3334 = vdwg.mxu0
    %3335 = vmatprep.subr.bf16.mxu0 %v2470
    %3336 = vmatpush1.bf16.msra.mxu0 %v2469
    %3337 = vmatprep.subr.bf16.mxu0 %v2478
    %3338 = vmatpush1.bf16.msra.mxu0 %v2477
    %3339 = vmatprep.subr.bf16.mxu0 %v2486
    %3340 = vmatpush1.bf16.msra.mxu0 %v2485
    %3341 = vmatprep.subr.bf16.mxu0 %v2494
    %3342 = vmatpush1.bf16.msra.mxu0 %v2493
    %3343 = vmatprep.subr.bf16.mxu0 %v2502
    %3344 = vmatpush1.bf16.msra.mxu0 %v2501
    %3345 = vmatprep.subr.bf16.mxu0 %v2510
    %3346 = vmatpush1.bf16.msra.mxu0 %v2509
    %3347 = vmatprep.subr.bf16.mxu0 %v2518
    %3348 = vmatpush1.bf16.msra.mxu0 %v2517
    %3349 = vmatprep.subr.bf16.mxu0 %v2526
    %3350 = vmatpush1.bf16.msra.mxu0 %v2525
    %3351 = vmatprep.subr.bf16.mxu0 %v2534
    %3352 = vmatpush1.bf16.msra.mxu0 %v2533
    %3353 = vmatprep.subr.bf16.mxu0 %v2542
    %3354 = vmatpush1.bf16.msra.mxu0 %v2541
    %3355 = vmatprep.subr.bf16.mxu0 %v2550
    %3356 = vmatpush1.bf16.msra.mxu0 %v2549
    %3357 = vmatprep.subr.bf16.mxu0 %v2558
    %3358 = vmatpush1.bf16.msra.mxu0 %v2557
    %3359 = vmatprep.subr.bf16.mxu0 %v2566
    %3360 = vmatpush1.bf16.msra.mxu0 %v2565
    %3361 = vmatprep.subr.bf16.mxu0 %v2574
    %3362 = vmatpush1.bf16.msra.mxu0 %v2573
    %3363 = vmatprep.subr.bf16.mxu0 %v2582
    %3364 = vmatpush1.bf16.msra.mxu0 %v2581
    %3365 = vmatprep.subr.bf16.mxu0 %v2590
    %3366 = vmatpush1.bf16.msra.mxu0 %v2589
    %3367 = vmatprep.mubr.bf16.mxu0 %v3293
    %3368 = vmatmul.mubr.bf16.gmra.mrb[0].mxu0 %v3292
    %v3369 = vpop.f32.mrb[0].mxu0
    %v3370 = vadd.f32 0.0, %v3369
    %v3371 = vpop.f32.mrb[0].mxu0
    %v3372 = vadd.f32 0.0, %v3371
    %v3373 = vpop.f32.mrb[0].mxu0
    %v3374 = vpop.f32.mrb[0].mxu0
    %3375 = vdwg.mxu0
    %3376 = vmatprep.subr.bf16.mxu0 %v2472
    %3377 = vmatpush1.bf16.msra.mxu0 %v2471
    %3378 = vmatprep.subr.bf16.mxu0 %v2480
    %3379 = vmatpush1.bf16.msra.mxu0 %v2479
    %3380 = vmatprep.subr.bf16.mxu0 %v2488
    %3381 = vmatpush1.bf16.msra.mxu0 %v2487
    %3382 = vmatprep.subr.bf16.mxu0 %v2496
    %3383 = vmatpush1.bf16.msra.mxu0 %v2495
    %3384 = vmatprep.subr.bf16.mxu0 %v2504
    %3385 = vmatpush1.bf16.msra.mxu0 %v2503
    %3386 = vmatprep.subr.bf16.mxu0 %v2512
    %3387 = vmatpush1.bf16.msra.mxu0 %v2511
    %3388 = vmatprep.subr.bf16.mxu0 %v2520
    %3389 = vmatpush1.bf16.msra.mxu0 %v2519
    %3390 = vmatprep.subr.bf16.mxu0 %v2528
    %3391 = vmatpush1.bf16.msra.mxu0 %v2527
    %3392 = vmatprep.subr.bf16.mxu0 %v2536
    %3393 = vmatpush1.bf16.msra.mxu0 %v2535
    %3394 = vmatprep.subr.bf16.mxu0 %v2544
    %3395 = vmatpush1.bf16.msra.mxu0 %v2543
    %3396 = vmatprep.subr.bf16.mxu0 %v2552
    %3397 = vmatpush1.bf16.msra.mxu0 %v2551
    %3398 = vmatprep.subr.bf16.mxu0 %v2560
    %3399 = vmatpush1.bf16.msra.mxu0 %v2559
    %3400 = vmatprep.subr.bf16.mxu0 %v2568
    %3401 = vmatpush1.bf16.msra.mxu0 %v2567
    %3402 = vmatprep.subr.bf16.mxu0 %v2576
    %3403 = vmatpush1.bf16.msra.mxu0 %v2575
    %3404 = vmatprep.subr.bf16.mxu0 %v2584
    %3405 = vmatpush1.bf16.msra.mxu0 %v2583
    %3406 = vmatprep.subr.bf16.mxu0 %v2592
    %3407 = vmatpush1.bf16.msra.mxu0 %v2591
    %3408 = vmatprep.mubr.bf16.mxu0 %v3293
    %3409 = vmatmul.mubr.bf16.gmra.mrb[0].mxu0 %v3292
    %v3410 = vpop.f32.mrb[0].mxu0
    %v3411 = vadd.f32 0.0, %v3410
    %v3412 = vpop.f32.mrb[0].mxu0
    %v3413 = vadd.f32 0.0, %v3412
    %v3414 = vpop.f32.mrb[0].mxu0
    %v3415 = vpop.f32.mrb[0].mxu0
    %3416 = vdwg.mxu0
    %3417 = vmatprep.subr.bf16.mxu0 %v2474
    %3418 = vmatpush1.bf16.msra.mxu0 %v2473
    %3419 = vmatprep.subr.bf16.mxu0 %v2482
    %3420 = vmatpush1.bf16.msra.mxu0 %v2481
    %3421 = vmatprep.subr.bf16.mxu0 %v2490
    %3422 = vmatpush1.bf16.msra.mxu0 %v2489
    %3423 = vmatprep.subr.bf16.mxu0 %v2498
    %3424 = vmatpush1.bf16.msra.mxu0 %v2497
    %3425 = vmatprep.subr.bf16.mxu0 %v2506
    %3426 = vmatpush1.bf16.msra.mxu0 %v2505
    %3427 = vmatprep.subr.bf16.mxu0 %v2514
    %3428 = vmatpush1.bf16.msra.mxu0 %v2513
    %3429 = vmatprep.subr.bf16.mxu0 %v2522
    %3430 = vmatpush1.bf16.msra.mxu0 %v2521
    %3431 = vmatprep.subr.bf16.mxu0 %v2530
    %3432 = vmatpush1.bf16.msra.mxu0 %v2529
    %3433 = vmatprep.subr.bf16.mxu0 %v2538
    %3434 = vmatpush1.bf16.msra.mxu0 %v2537
    %3435 = vmatprep.subr.bf16.mxu0 %v2546
    %3436 = vmatpush1.bf16.msra.mxu0 %v2545
    %3437 = vmatprep.subr.bf16.mxu0 %v2554
    %3438 = vmatpush1.bf16.msra.mxu0 %v2553
    %3439 = vmatprep.subr.bf16.mxu0 %v2562
    %3440 = vmatpush1.bf16.msra.mxu0 %v2561
    %3441 = vmatprep.subr.bf16.mxu0 %v2570
    %3442 = vmatpush1.bf16.msra.mxu0 %v2569
    %3443 = vmatprep.subr.bf16.mxu0 %v2578
    %3444 = vmatpush1.bf16.msra.mxu0 %v2577
    %3445 = vmatprep.subr.bf16.mxu0 %v2586
    %3446 = vmatpush1.bf16.msra.mxu0 %v2585
    %3447 = vmatprep.subr.bf16.mxu0 %v2594
    %3448 = vmatpush1.bf16.msra.mxu0 %v2593
    %3449 = vmatprep.mubr.bf16.mxu0 %v3293
    %3450 = vmatmul.mubr.bf16.gmra.mrb[0].mxu0 %v3292
    %v3451 = vpop.f32.mrb[0].mxu0
    %v3452 = vadd.f32 0.0, %v3451
    %v3453 = vpop.f32.mrb[0].mxu0
    %v3454 = vadd.f32 0.0, %v3453
    %v3455 = vpop.f32.mrb[0].mxu0
    %v3456 = vpop.f32.mrb[0].mxu0
    %3457 = vdwg.mxu0
    %v3458 = vadd.f32 %v3284, %v3329
    %v3459 = vadd.f32 %v3285, %v3331
    %v3460 = vadd.f32 %v3286, %v3370
    %v3461 = vadd.f32 %v3287, %v3372
    %v3462 = vadd.f32 %v3288, %v3411
    %v3463 = vadd.f32 %v3289, %v3413
    %v3464 = vadd.f32 %v3290, %v3452
    %v3465 = vadd.f32 %v3291, %v3454
    %v3466 = vxor.u32 %v3458, 2147483648
    %v3467 = vxor.u32 %v3459, 2147483648
    %v3468 = vxor.u32 %v3460, 2147483648
    %v3469 = vxor.u32 %v3461, 2147483648
    %v3470 = vxor.u32 %v3462, 2147483648
    %v3471 = vxor.u32 %v3463, 2147483648
    %v3472 = vmul.f32 %v3466, 1.442695
    %v3473 = vpow.pop %v3472
    %v3474 = vmul.f32 %v3467, 1.442695
    %v3475 = vpow.pop %v3474
    %v3476 = vmul.f32 %v3468, 1.442695
    %v3477 = vpow.pop %v3476
    %v3478 = vmul.f32 %v3469, 1.442695
    %v3479 = vpow.pop %v3478
    %v3480 = vmul.f32 %v3470, 1.442695
    %v3481 = vpow.pop %v3480
    %v3482 = vmul.f32 %v3471, 1.442695
    %v3483 = vpow.pop %v3482
    %v3484 = vadd.f32 %v3473, 1.0
    %v3485 = vadd.f32 %v3475, 1.0
    %v3486 = vadd.f32 %v3477, 1.0
    %v3487 = vadd.f32 %v3479, 1.0
    %v3488 = vadd.f32 %v3481, 1.0
    %v3489 = vadd.f32 %v3483, 1.0
    %v3490 = vrcp.pop %v3484
    %v3491 = vmul.f32 1.0, %v3490
    %v3492 = vrcp.pop %v3485
    %v3493 = vmul.f32 1.0, %v3492
    %v3494 = vrcp.pop %v3486
    %v3495 = vmul.f32 1.0, %v3494
    %v3496 = vrcp.pop %v3487
    %v3497 = vmul.f32 1.0, %v3496
    %v3498 = vrcp.pop %v3488
    %v3499 = vmul.f32 1.0, %v3498
    %v3500 = vrcp.pop %v3489
    %v3501 = vmul.f32 1.0, %v3500
    %v3502 = vtanh.pop %v3464
    %v3503 = vtanh.pop %v3465
    %v3504 = vmul.f32 %v3495, %v3275
    %v3505 = vmul.f32 %v3497, %v3276
    %v3506 = vmul.f32 %v3491, %v3502
    %v3507 = vmul.f32 %v3493, %v3503
    %v3508 = vadd.f32 %v3504, %v3506
    %v3509 = vadd.f32 %v3505, %v3507
    %v3510 = vtanh.pop %v3508
    %v3511 = vtanh.pop %v3509
    %v3512 = vmul.f32 %v3499, %v3510
    %v3513 = vmul.f32 %v3501, %v3511
    %s3514 = smul.u32 4, 8
    %s3515 = smul.addr %s3514, 8
    %s3516 = scalar_lea.vmem [#allocation2], %s3515
    %v3517 = vld [vmem:[%s3516] sm:$0xff]
    %v3518 = vld [vmem:[%s3516 + $0x8] sm:$0xff]
    %v3519 = vld [vmem:[%s3516 + $0x10] sm:$0xff]
    %v3520 = vld [vmem:[%s3516 + $0x18] sm:$0xff]
    %v3521 = vld [vmem:[%s3516 + $0x20] sm:$0xff]
    %v3522 = vld [vmem:[%s3516 + $0x28] sm:$0xff]
    %v3523 = vld [vmem:[%s3516 + $0x30] sm:$0xff]
    %v3524 = vld [vmem:[%s3516 + $0x38] sm:$0xff]
    %v3525 = vpack.c.bf16 %v3512, %v3512
    %v3526 = vpack.c.bf16 %v3513, %v3513
    %3527 = vmatprep.subr.bf16.mxu0 %v2468
    %3528 = vmatpush1.bf16.msra.mxu0 %v2467
    %3529 = vmatprep.subr.bf16.mxu0 %v2476
    %3530 = vmatpush1.bf16.msra.mxu0 %v2475
    %3531 = vmatprep.subr.bf16.mxu0 %v2484
    %3532 = vmatpush1.bf16.msra.mxu0 %v2483
    %3533 = vmatprep.subr.bf16.mxu0 %v2492
    %3534 = vmatpush1.bf16.msra.mxu0 %v2491
    %3535 = vmatprep.subr.bf16.mxu0 %v2500
    %3536 = vmatpush1.bf16.msra.mxu0 %v2499
    %3537 = vmatprep.subr.bf16.mxu0 %v2508
    %3538 = vmatpush1.bf16.msra.mxu0 %v2507
    %3539 = vmatprep.subr.bf16.mxu0 %v2516
    %3540 = vmatpush1.bf16.msra.mxu0 %v2515
    %3541 = vmatprep.subr.bf16.mxu0 %v2524
    %3542 = vmatpush1.bf16.msra.mxu0 %v2523
    %3543 = vmatprep.subr.bf16.mxu0 %v2532
    %3544 = vmatpush1.bf16.msra.mxu0 %v2531
    %3545 = vmatprep.subr.bf16.mxu0 %v2540
    %3546 = vmatpush1.bf16.msra.mxu0 %v2539
    %3547 = vmatprep.subr.bf16.mxu0 %v2548
    %3548 = vmatpush1.bf16.msra.mxu0 %v2547
    %3549 = vmatprep.subr.bf16.mxu0 %v2556
    %3550 = vmatpush1.bf16.msra.mxu0 %v2555
    %3551 = vmatprep.subr.bf16.mxu0 %v2564
    %3552 = vmatpush1.bf16.msra.mxu0 %v2563
    %3553 = vmatprep.subr.bf16.mxu0 %v2572
    %3554 = vmatpush1.bf16.msra.mxu0 %v2571
    %3555 = vmatprep.subr.bf16.mxu0 %v2580
    %3556 = vmatpush1.bf16.msra.mxu0 %v2579
    %3557 = vmatprep.subr.bf16.mxu0 %v2588
    %3558 = vmatpush1.bf16.msra.mxu0 %v2587
    %3559 = vmatprep.mubr.bf16.mxu0 %v3526
    %3560 = vmatmul.mubr.bf16.gmra.mrb[0].mxu0 %v3525
    %v3561 = vpop.f32.mrb[0].mxu0
    %v3562 = vadd.f32 0.0, %v3561
    %v3563 = vpop.f32.mrb[0].mxu0
    %v3564 = vadd.f32 0.0, %v3563
    %v3565 = vpop.f32.mrb[0].mxu0
    %v3566 = vpop.f32.mrb[0].mxu0
    %3567 = vdwg.mxu0
    %3568 = vmatprep.subr.bf16.mxu0 %v2470
    %3569 = vmatpush1.bf16.msra.mxu0 %v2469
    %3570 = vmatprep.subr.bf16.mxu0 %v2478
    %3571 = vmatpush1.bf16.msra.mxu0 %v2477
    %3572 = vmatprep.subr.bf16.mxu0 %v2486
    %3573 = vmatpush1.bf16.msra.mxu0 %v2485
    %3574 = vmatprep.subr.bf16.mxu0 %v2494
    %3575 = vmatpush1.bf16.msra.mxu0 %v2493
    %3576 = vmatprep.subr.bf16.mxu0 %v2502
    %3577 = vmatpush1.bf16.msra.mxu0 %v2501
    %3578 = vmatprep.subr.bf16.mxu0 %v2510
    %3579 = vmatpush1.bf16.msra.mxu0 %v2509
    %3580 = vmatprep.subr.bf16.mxu0 %v2518
    %3581 = vmatpush1.bf16.msra.mxu0 %v2517
    %3582 = vmatprep.subr.bf16.mxu0 %v2526
    %3583 = vmatpush1.bf16.msra.mxu0 %v2525
    %3584 = vmatprep.subr.bf16.mxu0 %v2534
    %3585 = vmatpush1.bf16.msra.mxu0 %v2533
    %3586 = vmatprep.subr.bf16.mxu0 %v2542
    %3587 = vmatpush1.bf16.msra.mxu0 %v2541
    %3588 = vmatprep.subr.bf16.mxu0 %v2550
    %3589 = vmatpush1.bf16.msra.mxu0 %v2549
    %3590 = vmatprep.subr.bf16.mxu0 %v2558
    %3591 = vmatpush1.bf16.msra.mxu0 %v2557
    %3592 = vmatprep.subr.bf16.mxu0 %v2566
    %3593 = vmatpush1.bf16.msra.mxu0 %v2565
    %3594 = vmatprep.subr.bf16.mxu0 %v2574
    %3595 = vmatpush1.bf16.msra.mxu0 %v2573
    %3596 = vmatprep.subr.bf16.mxu0 %v2582
    %3597 = vmatpush1.bf16.msra.mxu0 %v2581
    %3598 = vmatprep.subr.bf16.mxu0 %v2590
    %3599 = vmatpush1.bf16.msra.mxu0 %v2589
    %3600 = vmatprep.mubr.bf16.mxu0 %v3526
    %3601 = vmatmul.mubr.bf16.gmra.mrb[0].mxu0 %v3525
    %v3602 = vpop.f32.mrb[0].mxu0
    %v3603 = vadd.f32 0.0, %v3602
    %v3604 = vpop.f32.mrb[0].mxu0
    %v3605 = vadd.f32 0.0, %v3604
    %v3606 = vpop.f32.mrb[0].mxu0
    %v3607 = vpop.f32.mrb[0].mxu0
    %3608 = vdwg.mxu0
    %3609 = vmatprep.subr.bf16.mxu0 %v2472
    %3610 = vmatpush1.bf16.msra.mxu0 %v2471
    %3611 = vmatprep.subr.bf16.mxu0 %v2480
    %3612 = vmatpush1.bf16.msra.mxu0 %v2479
    %3613 = vmatprep.subr.bf16.mxu0 %v2488
    %3614 = vmatpush1.bf16.msra.mxu0 %v2487
    %3615 = vmatprep.subr.bf16.mxu0 %v2496
    %3616 = vmatpush1.bf16.msra.mxu0 %v2495
    %3617 = vmatprep.subr.bf16.mxu0 %v2504
    %3618 = vmatpush1.bf16.msra.mxu0 %v2503
    %3619 = vmatprep.subr.bf16.mxu0 %v2512
    %3620 = vmatpush1.bf16.msra.mxu0 %v2511
    %3621 = vmatprep.subr.bf16.mxu0 %v2520
    %3622 = vmatpush1.bf16.msra.mxu0 %v2519
    %3623 = vmatprep.subr.bf16.mxu0 %v2528
    %3624 = vmatpush1.bf16.msra.mxu0 %v2527
    %3625 = vmatprep.subr.bf16.mxu0 %v2536
    %3626 = vmatpush1.bf16.msra.mxu0 %v2535
    %3627 = vmatprep.subr.bf16.mxu0 %v2544
    %3628 = vmatpush1.bf16.msra.mxu0 %v2543
    %3629 = vmatprep.subr.bf16.mxu0 %v2552
    %3630 = vmatpush1.bf16.msra.mxu0 %v2551
    %3631 = vmatprep.subr.bf16.mxu0 %v2560
    %3632 = vmatpush1.bf16.msra.mxu0 %v2559
    %3633 = vmatprep.subr.bf16.mxu0 %v2568
    %3634 = vmatpush1.bf16.msra.mxu0 %v2567
    %3635 = vmatprep.subr.bf16.mxu0 %v2576
    %3636 = vmatpush1.bf16.msra.mxu0 %v2575
    %3637 = vmatprep.subr.bf16.mxu0 %v2584
    %3638 = vmatpush1.bf16.msra.mxu0 %v2583
    %3639 = vmatprep.subr.bf16.mxu0 %v2592
    %3640 = vmatpush1.bf16.msra.mxu0 %v2591
    %3641 = vmatprep.mubr.bf16.mxu0 %v3526
    %3642 = vmatmul.mubr.bf16.gmra.mrb[0].mxu0 %v3525
    %v3643 = vpop.f32.mrb[0].mxu0
    %v3644 = vadd.f32 0.0, %v3643
    %v3645 = vpop.f32.mrb[0].mxu0
    %v3646 = vadd.f32 0.0, %v3645
    %v3647 = vpop.f32.mrb[0].mxu0
    %v3648 = vpop.f32.mrb[0].mxu0
    %3649 = vdwg.mxu0
    %3650 = vmatprep.subr.bf16.mxu0 %v2474
    %3651 = vmatpush1.bf16.msra.mxu0 %v2473
    %3652 = vmatprep.subr.bf16.mxu0 %v2482
    %3653 = vmatpush1.bf16.msra.mxu0 %v2481
    %3654 = vmatprep.subr.bf16.mxu0 %v2490
    %3655 = vmatpush1.bf16.msra.mxu0 %v2489
    %3656 = vmatprep.subr.bf16.mxu0 %v2498
    %3657 = vmatpush1.bf16.msra.mxu0 %v2497
    %3658 = vmatprep.subr.bf16.mxu0 %v2506
    %3659 = vmatpush1.bf16.msra.mxu0 %v2505
    %3660 = vmatprep.subr.bf16.mxu0 %v2514
    %3661 = vmatpush1.bf16.msra.mxu0 %v2513
    %3662 = vmatprep.subr.bf16.mxu0 %v2522
    %3663 = vmatpush1.bf16.msra.mxu0 %v2521
    %3664 = vmatprep.subr.bf16.mxu0 %v2530
    %3665 = vmatpush1.bf16.msra.mxu0 %v2529
    %3666 = vmatprep.subr.bf16.mxu0 %v2538
    %3667 = vmatpush1.bf16.msra.mxu0 %v2537
    %3668 = vmatprep.subr.bf16.mxu0 %v2546
    %3669 = vmatpush1.bf16.msra.mxu0 %v2545
    %3670 = vmatprep.subr.bf16.mxu0 %v2554
    %3671 = vmatpush1.bf16.msra.mxu0 %v2553
    %3672 = vmatprep.subr.bf16.mxu0 %v2562
    %3673 = vmatpush1.bf16.msra.mxu0 %v2561
    %3674 = vmatprep.subr.bf16.mxu0 %v2570
    %3675 = vmatpush1.bf16.msra.mxu0 %v2569
    %3676 = vmatprep.subr.bf16.mxu0 %v2578
    %3677 = vmatpush1.bf16.msra.mxu0 %v2577
    %3678 = vmatprep.subr.bf16.mxu0 %v2586
    %3679 = vmatpush1.bf16.msra.mxu0 %v2585
    %3680 = vmatprep.subr.bf16.mxu0 %v2594
    %3681 = vmatpush1.bf16.msra.mxu0 %v2593
    %3682 = vmatprep.mubr.bf16.mxu0 %v3526
    %3683 = vmatmul.mubr.bf16.gmra.mrb[0].mxu0 %v3525
    %v3684 = vpop.f32.mrb[0].mxu0
    %v3685 = vadd.f32 0.0, %v3684
    %v3686 = vpop.f32.mrb[0].mxu0
    %v3687 = vadd.f32 0.0, %v3686
    %v3688 = vpop.f32.mrb[0].mxu0
    %v3689 = vpop.f32.mrb[0].mxu0
    %3690 = vdwg.mxu0
    %v3691 = vadd.f32 %v3517, %v3562
    %v3692 = vadd.f32 %v3518, %v3564
    %v3693 = vadd.f32 %v3519, %v3603
    %v3694 = vadd.f32 %v3520, %v3605
    %v3695 = vadd.f32 %v3521, %v3644
    %v3696 = vadd.f32 %v3522, %v3646
    %v3697 = vadd.f32 %v3523, %v3685
    %v3698 = vadd.f32 %v3524, %v3687
    %v3699 = vxor.u32 %v3691, 2147483648
    %v3700 = vxor.u32 %v3692, 2147483648
    %v3701 = vxor.u32 %v3693, 2147483648
    %v3702 = vxor.u32 %v3694, 2147483648
    %v3703 = vxor.u32 %v3695, 2147483648
    %v3704 = vxor.u32 %v3696, 2147483648
    %v3705 = vmul.f32 %v3699, 1.442695
    %v3706 = vpow.pop %v3705
    %v3707 = vmul.f32 %v3700, 1.442695
    %v3708 = vpow.pop %v3707
    %v3709 = vmul.f32 %v3701, 1.442695
    %v3710 = vpow.pop %v3709
    %v3711 = vmul.f32 %v3702, 1.442695
    %v3712 = vpow.pop %v3711
    %v3713 = vmul.f32 %v3703, 1.442695
    %v3714 = vpow.pop %v3713
    %v3715 = vmul.f32 %v3704, 1.442695
    %v3716 = vpow.pop %v3715
    %v3717 = vadd.f32 %v3706, 1.0
    %v3718 = vadd.f32 %v3708, 1.0
    %v3719 = vadd.f32 %v3710, 1.0
    %v3720 = vadd.f32 %v3712, 1.0
    %v3721 = vadd.f32 %v3714, 1.0
    %v3722 = vadd.f32 %v3716, 1.0
    %v3723 = vrcp.pop %v3717
    %v3724 = vmul.f32 1.0, %v3723
    %v3725 = vrcp.pop %v3718
    %v3726 = vmul.f32 1.0, %v3725
    %v3727 = vrcp.pop %v3719
    %v3728 = vmul.f32 1.0, %v3727
    %v3729 = vrcp.pop %v3720
    %v3730 = vmul.f32 1.0, %v3729
    %v3731 = vrcp.pop %v3721
    %v3732 = vmul.f32 1.0, %v3731
    %v3733 = vrcp.pop %v3722
    %v3734 = vmul.f32 1.0, %v3733
    %v3735 = vtanh.pop %v3697
    %v3736 = vtanh.pop %v3698
    %v3737 = vmul.f32 %v3728, %v3508
    %v3738 = vmul.f32 %v3730, %v3509
    %v3739 = vmul.f32 %v3724, %v3735
    %v3740 = vmul.f32 %v3726, %v3736
    %v3741 = vadd.f32 %v3737, %v3739
    %v3742 = vadd.f32 %v3738, %v3740
    %v3743 = vtanh.pop %v3741
    %v3744 = vtanh.pop %v3742
    %v3745 = vmul.f32 %v3732, %v3743
    %v3746 = vmul.f32 %v3734, %v3744
    %s3747 = smul.u32 5, 8
    %s3748 = smul.addr %s3747, 8
    %s3749 = scalar_lea.vmem [#allocation2], %s3748
    %v3750 = vld [vmem:[%s3749] sm:$0xff]
    %v3751 = vld [vmem:[%s3749 + $0x8] sm:$0xff]
    %v3752 = vld [vmem:[%s3749 + $0x10] sm:$0xff]
    %v3753 = vld [vmem:[%s3749 + $0x18] sm:$0xff]
    %v3754 = vld [vmem:[%s3749 + $0x20] sm:$0xff]
    %v3755 = vld [vmem:[%s3749 + $0x28] sm:$0xff]
    %v3756 = vld [vmem:[%s3749 + $0x30] sm:$0xff]
    %v3757 = vld [vmem:[%s3749 + $0x38] sm:$0xff]
    %v3758 = vpack.c.bf16 %v3745, %v3745
    %v3759 = vpack.c.bf16 %v3746, %v3746
    %3760 = vmatprep.subr.bf16.mxu0 %v2468
    %3761 = vmatpush1.bf16.msra.mxu0 %v2467
    %3762 = vmatprep.subr.bf16.mxu0 %v2476
    %3763 = vmatpush1.bf16.msra.mxu0 %v2475
    %3764 = vmatprep.subr.bf16.mxu0 %v2484
    %3765 = vmatpush1.bf16.msra.mxu0 %v2483
    %3766 = vmatprep.subr.bf16.mxu0 %v2492
    %3767 = vmatpush1.bf16.msra.mxu0 %v2491
    %3768 = vmatprep.subr.bf16.mxu0 %v2500
    %3769 = vmatpush1.bf16.msra.mxu0 %v2499
    %3770 = vmatprep.subr.bf16.mxu0 %v2508
    %3771 = vmatpush1.bf16.msra.mxu0 %v2507
    %3772 = vmatprep.subr.bf16.mxu0 %v2516
    %3773 = vmatpush1.bf16.msra.mxu0 %v2515
    %3774 = vmatprep.subr.bf16.mxu0 %v2524
    %3775 = vmatpush1.bf16.msra.mxu0 %v2523
    %3776 = vmatprep.subr.bf16.mxu0 %v2532
    %3777 = vmatpush1.bf16.msra.mxu0 %v2531
    %3778 = vmatprep.subr.bf16.mxu0 %v2540
    %3779 = vmatpush1.bf16.msra.mxu0 %v2539
    %3780 = vmatprep.subr.bf16.mxu0 %v2548
    %3781 = vmatpush1.bf16.msra.mxu0 %v2547
    %3782 = vmatprep.subr.bf16.mxu0 %v2556
    %3783 = vmatpush1.bf16.msra.mxu0 %v2555
    %3784 = vmatprep.subr.bf16.mxu0 %v2564
    %3785 = vmatpush1.bf16.msra.mxu0 %v2563
    %3786 = vmatprep.subr.bf16.mxu0 %v2572
    %3787 = vmatpush1.bf16.msra.mxu0 %v2571
    %3788 = vmatprep.subr.bf16.mxu0 %v2580
    %3789 = vmatpush1.bf16.msra.mxu0 %v2579
    %3790 = vmatprep.subr.bf16.mxu0 %v2588
    %3791 = vmatpush1.bf16.msra.mxu0 %v2587
    %3792 = vmatprep.mubr.bf16.mxu0 %v3759
    %3793 = vmatmul.mubr.bf16.gmra.mrb[0].mxu0 %v3758
    %v3794 = vpop.f32.mrb[0].mxu0
    %v3795 = vadd.f32 0.0, %v3794
    %v3796 = vpop.f32.mrb[0].mxu0
    %v3797 = vadd.f32 0.0, %v3796
    %v3798 = vpop.f32.mrb[0].mxu0
    %v3799 = vpop.f32.mrb[0].mxu0
    %3800 = vdwg.mxu0
    %3801 = vmatprep.subr.bf16.mxu0 %v2470
    %3802 = vmatpush1.bf16.msra.mxu0 %v2469
    %3803 = vmatprep.subr.bf16.mxu0 %v2478
    %3804 = vmatpush1.bf16.msra.mxu0 %v2477
    %3805 = vmatprep.subr.bf16.mxu0 %v2486
    %3806 = vmatpush1.bf16.msra.mxu0 %v2485
    %3807 = vmatprep.subr.bf16.mxu0 %v2494
    %3808 = vmatpush1.bf16.msra.mxu0 %v2493
    %3809 = vmatprep.subr.bf16.mxu0 %v2502
    %3810 = vmatpush1.bf16.msra.mxu0 %v2501
    %3811 = vmatprep.subr.bf16.mxu0 %v2510
    %3812 = vmatpush1.bf16.msra.mxu0 %v2509
    %3813 = vmatprep.subr.bf16.mxu0 %v2518
    %3814 = vmatpush1.bf16.msra.mxu0 %v2517
    %3815 = vmatprep.subr.bf16.mxu0 %v2526
    %3816 = vmatpush1.bf16.msra.mxu0 %v2525
    %3817 = vmatprep.subr.bf16.mxu0 %v2534
    %3818 = vmatpush1.bf16.msra.mxu0 %v2533
    %3819 = vmatprep.subr.bf16.mxu0 %v2542
    %3820 = vmatpush1.bf16.msra.mxu0 %v2541
    %3821 = vmatprep.subr.bf16.mxu0 %v2550
    %3822 = vmatpush1.bf16.msra.mxu0 %v2549
    %3823 = vmatprep.subr.bf16.mxu0 %v2558
    %3824 = vmatpush1.bf16.msra.mxu0 %v2557
    %3825 = vmatprep.subr.bf16.mxu0 %v2566
    %3826 = vmatpush1.bf16.msra.mxu0 %v2565
    %3827 = vmatprep.subr.bf16.mxu0 %v2574
    %3828 = vmatpush1.bf16.msra.mxu0 %v2573
    %3829 = vmatprep.subr.bf16.mxu0 %v2582
    %3830 = vmatpush1.bf16.msra.mxu0 %v2581
    %3831 = vmatprep.subr.bf16.mxu0 %v2590
    %3832 = vmatpush1.bf16.msra.mxu0 %v2589
    %3833 = vmatprep.mubr.bf16.mxu0 %v3759
    %3834 = vmatmul.mubr.bf16.gmra.mrb[0].mxu0 %v3758
    %v3835 = vpop.f32.mrb[0].mxu0
    %v3836 = vadd.f32 0.0, %v3835
    %v3837 = vpop.f32.mrb[0].mxu0
    %v3838 = vadd.f32 0.0, %v3837
    %v3839 = vpop.f32.mrb[0].mxu0
    %v3840 = vpop.f32.mrb[0].mxu0
    %3841 = vdwg.mxu0
    %3842 = vmatprep.subr.bf16.mxu0 %v2472
    %3843 = vmatpush1.bf16.msra.mxu0 %v2471
    %3844 = vmatprep.subr.bf16.mxu0 %v2480
    %3845 = vmatpush1.bf16.msra.mxu0 %v2479
    %3846 = vmatprep.subr.bf16.mxu0 %v2488
    %3847 = vmatpush1.bf16.msra.mxu0 %v2487
    %3848 = vmatprep.subr.bf16.mxu0 %v2496
    %3849 = vmatpush1.bf16.msra.mxu0 %v2495
    %3850 = vmatprep.subr.bf16.mxu0 %v2504
    %3851 = vmatpush1.bf16.msra.mxu0 %v2503
    %3852 = vmatprep.subr.bf16.mxu0 %v2512
    %3853 = vmatpush1.bf16.msra.mxu0 %v2511
    %3854 = vmatprep.subr.bf16.mxu0 %v2520
    %3855 = vmatpush1.bf16.msra.mxu0 %v2519
    %3856 = vmatprep.subr.bf16.mxu0 %v2528
    %3857 = vmatpush1.bf16.msra.mxu0 %v2527
    %3858 = vmatprep.subr.bf16.mxu0 %v2536
    %3859 = vmatpush1.bf16.msra.mxu0 %v2535
    %3860 = vmatprep.subr.bf16.mxu0 %v2544
    %3861 = vmatpush1.bf16.msra.mxu0 %v2543
    %3862 = vmatprep.subr.bf16.mxu0 %v2552
    %3863 = vmatpush1.bf16.msra.mxu0 %v2551
    %3864 = vmatprep.subr.bf16.mxu0 %v2560
    %3865 = vmatpush1.bf16.msra.mxu0 %v2559
    %3866 = vmatprep.subr.bf16.mxu0 %v2568
    %3867 = vmatpush1.bf16.msra.mxu0 %v2567
    %3868 = vmatprep.subr.bf16.mxu0 %v2576
    %3869 = vmatpush1.bf16.msra.mxu0 %v2575
    %3870 = vmatprep.subr.bf16.mxu0 %v2584
    %3871 = vmatpush1.bf16.msra.mxu0 %v2583
    %3872 = vmatprep.subr.bf16.mxu0 %v2592
    %3873 = vmatpush1.bf16.msra.mxu0 %v2591
    %3874 = vmatprep.mubr.bf16.mxu0 %v3759
    %3875 = vmatmul.mubr.bf16.gmra.mrb[0].mxu0 %v3758
    %v3876 = vpop.f32.mrb[0].mxu0
    %v3877 = vadd.f32 0.0, %v3876
    %v3878 = vpop.f32.mrb[0].mxu0
    %v3879 = vadd.f32 0.0, %v3878
    %v3880 = vpop.f32.mrb[0].mxu0
    %v3881 = vpop.f32.mrb[0].mxu0
    %3882 = vdwg.mxu0
    %3883 = vmatprep.subr.bf16.mxu0 %v2474
    %3884 = vmatpush1.bf16.msra.mxu0 %v2473
    %3885 = vmatprep.subr.bf16.mxu0 %v2482
    %3886 = vmatpush1.bf16.msra.mxu0 %v2481
    %3887 = vmatprep.subr.bf16.mxu0 %v2490
    %3888 = vmatpush1.bf16.msra.mxu0 %v2489
    %3889 = vmatprep.subr.bf16.mxu0 %v2498
    %3890 = vmatpush1.bf16.msra.mxu0 %v2497
    %3891 = vmatprep.subr.bf16.mxu0 %v2506
    %3892 = vmatpush1.bf16.msra.mxu0 %v2505
    %3893 = vmatprep.subr.bf16.mxu0 %v2514
    %3894 = vmatpush1.bf16.msra.mxu0 %v2513
    %3895 = vmatprep.subr.bf16.mxu0 %v2522
    %3896 = vmatpush1.bf16.msra.mxu0 %v2521
    %3897 = vmatprep.subr.bf16.mxu0 %v2530
    %3898 = vmatpush1.bf16.msra.mxu0 %v2529
    %3899 = vmatprep.subr.bf16.mxu0 %v2538
    %3900 = vmatpush1.bf16.msra.mxu0 %v2537
    %3901 = vmatprep.subr.bf16.mxu0 %v2546
    %3902 = vmatpush1.bf16.msra.mxu0 %v2545
    %3903 = vmatprep.subr.bf16.mxu0 %v2554
    %3904 = vmatpush1.bf16.msra.mxu0 %v2553
    %3905 = vmatprep.subr.bf16.mxu0 %v2562
    %3906 = vmatpush1.bf16.msra.mxu0 %v2561
    %3907 = vmatprep.subr.bf16.mxu0 %v2570
    %3908 = vmatpush1.bf16.msra.mxu0 %v2569
    %3909 = vmatprep.subr.bf16.mxu0 %v2578
    %3910 = vmatpush1.bf16.msra.mxu0 %v2577
    %3911 = vmatprep.subr.bf16.mxu0 %v2586
    %3912 = vmatpush1.bf16.msra.mxu0 %v2585
    %3913 = vmatprep.subr.bf16.mxu0 %v2594
    %3914 = vmatpush1.bf16.msra.mxu0 %v2593
    %3915 = vmatprep.mubr.bf16.mxu0 %v3759
    %3916 = vmatmul.mubr.bf16.gmra.mrb[0].mxu0 %v3758
    %v3917 = vpop.f32.mrb[0].mxu0
    %v3918 = vadd.f32 0.0, %v3917
    %v3919 = vpop.f32.mrb[0].mxu0
    %v3920 = vadd.f32 0.0, %v3919
    %v3921 = vpop.f32.mrb[0].mxu0
    %v3922 = vpop.f32.mrb[0].mxu0
    %3923 = vdwg.mxu0
    %v3924 = vadd.f32 %v3750, %v3795
    %v3925 = vadd.f32 %v3751, %v3797
    %v3926 = vadd.f32 %v3752, %v3836
    %v3927 = vadd.f32 %v3753, %v3838
    %v3928 = vadd.f32 %v3754, %v3877
    %v3929 = vadd.f32 %v3755, %v3879
    %v3930 = vadd.f32 %v3756, %v3918
    %v3931 = vadd.f32 %v3757, %v3920
    %v3932 = vxor.u32 %v3924, 2147483648
    %v3933 = vxor.u32 %v3925, 2147483648
    %v3934 = vxor.u32 %v3926, 2147483648
    %v3935 = vxor.u32 %v3927, 2147483648
    %v3936 = vxor.u32 %v3928, 2147483648
    %v3937 = vxor.u32 %v3929, 2147483648
    %v3938 = vmul.f32 %v3932, 1.442695
    %v3939 = vpow.pop %v3938
    %v3940 = vmul.f32 %v3933, 1.442695
    %v3941 = vpow.pop %v3940
    %v3942 = vmul.f32 %v3934, 1.442695
    %v3943 = vpow.pop %v3942
    %v3944 = vmul.f32 %v3935, 1.442695
    %v3945 = vpow.pop %v3944
    %v3946 = vmul.f32 %v3936, 1.442695
    %v3947 = vpow.pop %v3946
    %v3948 = vmul.f32 %v3937, 1.442695
    %v3949 = vpow.pop %v3948
    %v3950 = vadd.f32 %v3939, 1.0
    %v3951 = vadd.f32 %v3941, 1.0
    %v3952 = vadd.f32 %v3943, 1.0
    %v3953 = vadd.f32 %v3945, 1.0
    %v3954 = vadd.f32 %v3947, 1.0
    %v3955 = vadd.f32 %v3949, 1.0
    %v3956 = vrcp.pop %v3950
    %v3957 = vmul.f32 1.0, %v3956
    %v3958 = vrcp.pop %v3951
    %v3959 = vmul.f32 1.0, %v3958
    %v3960 = vrcp.pop %v3952
    %v3961 = vmul.f32 1.0, %v3960
    %v3962 = vrcp.pop %v3953
    %v3963 = vmul.f32 1.0, %v3962
    %v3964 = vrcp.pop %v3954
    %v3965 = vmul.f32 1.0, %v3964
    %v3966 = vrcp.pop %v3955
    %v3967 = vmul.f32 1.0, %v3966
    %v3968 = vtanh.pop %v3930
    %v3969 = vtanh.pop %v3931
    %v3970 = vmul.f32 %v3961, %v3741
    %v3971 = vmul.f32 %v3963, %v3742
    %v3972 = vmul.f32 %v3957, %v3968
    %v3973 = vmul.f32 %v3959, %v3969
    %v3974 = vadd.f32 %v3970, %v3972
    %v3975 = vadd.f32 %v3971, %v3973
    %v3976 = vtanh.pop %v3974
    %v3977 = vtanh.pop %v3975
    %v3978 = vmul.f32 %v3965, %v3976
    %v3979 = vmul.f32 %v3967, %v3977
    %s3980 = smul.u32 6, 8
    %s3981 = smul.addr %s3980, 8
    %s3982 = scalar_lea.vmem [#allocation2], %s3981
    %v3983 = vld [vmem:[%s3982] sm:$0xff]
    %v3984 = vld [vmem:[%s3982 + $0x8] sm:$0xff]
    %v3985 = vld [vmem:[%s3982 + $0x10] sm:$0xff]
    %v3986 = vld [vmem:[%s3982 + $0x18] sm:$0xff]
    %v3987 = vld [vmem:[%s3982 + $0x20] sm:$0xff]
    %v3988 = vld [vmem:[%s3982 + $0x28] sm:$0xff]
    %v3989 = vld [vmem:[%s3982 + $0x30] sm:$0xff]
    %v3990 = vld [vmem:[%s3982 + $0x38] sm:$0xff]
    %v3991 = vpack.c.bf16 %v3978, %v3978
    %v3992 = vpack.c.bf16 %v3979, %v3979
    %3993 = vmatprep.subr.bf16.mxu0 %v2468
    %3994 = vmatpush1.bf16.msra.mxu0 %v2467
    %3995 = vmatprep.subr.bf16.mxu0 %v2476
    %3996 = vmatpush1.bf16.msra.mxu0 %v2475
    %3997 = vmatprep.subr.bf16.mxu0 %v2484
    %3998 = vmatpush1.bf16.msra.mxu0 %v2483
    %3999 = vmatprep.subr.bf16.mxu0 %v2492
    %4000 = vmatpush1.bf16.msra.mxu0 %v2491
    %4001 = vmatprep.subr.bf16.mxu0 %v2500
    %4002 = vmatpush1.bf16.msra.mxu0 %v2499
    %4003 = vmatprep.subr.bf16.mxu0 %v2508
    %4004 = vmatpush1.bf16.msra.mxu0 %v2507
    %4005 = vmatprep.subr.bf16.mxu0 %v2516
    %4006 = vmatpush1.bf16.msra.mxu0 %v2515
    %4007 = vmatprep.subr.bf16.mxu0 %v2524
    %4008 = vmatpush1.bf16.msra.mxu0 %v2523
    %4009 = vmatprep.subr.bf16.mxu0 %v2532
    %4010 = vmatpush1.bf16.msra.mxu0 %v2531
    %4011 = vmatprep.subr.bf16.mxu0 %v2540
    %4012 = vmatpush1.bf16.msra.mxu0 %v2539
    %4013 = vmatprep.subr.bf16.mxu0 %v2548
    %4014 = vmatpush1.bf16.msra.mxu0 %v2547
    %4015 = vmatprep.subr.bf16.mxu0 %v2556
    %4016 = vmatpush1.bf16.msra.mxu0 %v2555
    %4017 = vmatprep.subr.bf16.mxu0 %v2564
    %4018 = vmatpush1.bf16.msra.mxu0 %v2563
    %4019 = vmatprep.subr.bf16.mxu0 %v2572
    %4020 = vmatpush1.bf16.msra.mxu0 %v2571
    %4021 = vmatprep.subr.bf16.mxu0 %v2580
    %4022 = vmatpush1.bf16.msra.mxu0 %v2579
    %4023 = vmatprep.subr.bf16.mxu0 %v2588
    %4024 = vmatpush1.bf16.msra.mxu0 %v2587
    %4025 = vmatprep.mubr.bf16.mxu0 %v3992
    %4026 = vmatmul.mubr.bf16.gmra.mrb[0].mxu0 %v3991
    %v4027 = vpop.f32.mrb[0].mxu0
    %v4028 = vadd.f32 0.0, %v4027
    %v4029 = vpop.f32.mrb[0].mxu0
    %v4030 = vadd.f32 0.0, %v4029
    %v4031 = vpop.f32.mrb[0].mxu0
    %v4032 = vpop.f32.mrb[0].mxu0
    %4033 = vdwg.mxu0
    %4034 = vmatprep.subr.bf16.mxu0 %v2470
    %4035 = vmatpush1.bf16.msra.mxu0 %v2469
    %4036 = vmatprep.subr.bf16.mxu0 %v2478
    %4037 = vmatpush1.bf16.msra.mxu0 %v2477
    %4038 = vmatprep.subr.bf16.mxu0 %v2486
    %4039 = vmatpush1.bf16.msra.mxu0 %v2485
    %4040 = vmatprep.subr.bf16.mxu0 %v2494
    %4041 = vmatpush1.bf16.msra.mxu0 %v2493
    %4042 = vmatprep.subr.bf16.mxu0 %v2502
    %4043 = vmatpush1.bf16.msra.mxu0 %v2501
    %4044 = vmatprep.subr.bf16.mxu0 %v2510
    %4045 = vmatpush1.bf16.msra.mxu0 %v2509
    %4046 = vmatprep.subr.bf16.mxu0 %v2518
    %4047 = vmatpush1.bf16.msra.mxu0 %v2517
    %4048 = vmatprep.subr.bf16.mxu0 %v2526
    %4049 = vmatpush1.bf16.msra.mxu0 %v2525
    %4050 = vmatprep.subr.bf16.mxu0 %v2534
    %4051 = vmatpush1.bf16.msra.mxu0 %v2533
    %4052 = vmatprep.subr.bf16.mxu0 %v2542
    %4053 = vmatpush1.bf16.msra.mxu0 %v2541
    %4054 = vmatprep.subr.bf16.mxu0 %v2550
    %4055 = vmatpush1.bf16.msra.mxu0 %v2549
    %4056 = vmatprep.subr.bf16.mxu0 %v2558
    %4057 = vmatpush1.bf16.msra.mxu0 %v2557
    %4058 = vmatprep.subr.bf16.mxu0 %v2566
    %4059 = vmatpush1.bf16.msra.mxu0 %v2565
    %4060 = vmatprep.subr.bf16.mxu0 %v2574
    %4061 = vmatpush1.bf16.msra.mxu0 %v2573
    %4062 = vmatprep.subr.bf16.mxu0 %v2582
    %4063 = vmatpush1.bf16.msra.mxu0 %v2581
    %4064 = vmatprep.subr.bf16.mxu0 %v2590
    %4065 = vmatpush1.bf16.msra.mxu0 %v2589
    %4066 = vmatprep.mubr.bf16.mxu0 %v3992
    %4067 = vmatmul.mubr.bf16.gmra.mrb[0].mxu0 %v3991
    %v4068 = vpop.f32.mrb[0].mxu0
    %v4069 = vadd.f32 0.0, %v4068
    %v4070 = vpop.f32.mrb[0].mxu0
    %v4071 = vadd.f32 0.0, %v4070
    %v4072 = vpop.f32.mrb[0].mxu0
    %v4073 = vpop.f32.mrb[0].mxu0
    %4074 = vdwg.mxu0
    %4075 = vmatprep.subr.bf16.mxu0 %v2472
    %4076 = vmatpush1.bf16.msra.mxu0 %v2471
    %4077 = vmatprep.subr.bf16.mxu0 %v2480
    %4078 = vmatpush1.bf16.msra.mxu0 %v2479
    %4079 = vmatprep.subr.bf16.mxu0 %v2488
    %4080 = vmatpush1.bf16.msra.mxu0 %v2487
    %4081 = vmatprep.subr.bf16.mxu0 %v2496
    %4082 = vmatpush1.bf16.msra.mxu0 %v2495
    %4083 = vmatprep.subr.bf16.mxu0 %v2504
    %4084 = vmatpush1.bf16.msra.mxu0 %v2503
    %4085 = vmatprep.subr.bf16.mxu0 %v2512
    %4086 = vmatpush1.bf16.msra.mxu0 %v2511
    %4087 = vmatprep.subr.bf16.mxu0 %v2520
    %4088 = vmatpush1.bf16.msra.mxu0 %v2519
    %4089 = vmatprep.subr.bf16.mxu0 %v2528
    %4090 = vmatpush1.bf16.msra.mxu0 %v2527
    %4091 = vmatprep.subr.bf16.mxu0 %v2536
    %4092 = vmatpush1.bf16.msra.mxu0 %v2535
    %4093 = vmatprep.subr.bf16.mxu0 %v2544
    %4094 = vmatpush1.bf16.msra.mxu0 %v2543
    %4095 = vmatprep.subr.bf16.mxu0 %v2552
    %4096 = vmatpush1.bf16.msra.mxu0 %v2551
    %4097 = vmatprep.subr.bf16.mxu0 %v2560
    %4098 = vmatpush1.bf16.msra.mxu0 %v2559
    %4099 = vmatprep.subr.bf16.mxu0 %v2568
    %4100 = vmatpush1.bf16.msra.mxu0 %v2567
    %4101 = vmatprep.subr.bf16.mxu0 %v2576
    %4102 = vmatpush1.bf16.msra.mxu0 %v2575
    %4103 = vmatprep.subr.bf16.mxu0 %v2584
    %4104 = vmatpush1.bf16.msra.mxu0 %v2583
    %4105 = vmatprep.subr.bf16.mxu0 %v2592
    %4106 = vmatpush1.bf16.msra.mxu0 %v2591
    %4107 = vmatprep.mubr.bf16.mxu0 %v3992
    %4108 = vmatmul.mubr.bf16.gmra.mrb[0].mxu0 %v3991
    %v4109 = vpop.f32.mrb[0].mxu0
    %v4110 = vadd.f32 0.0, %v4109
    %v4111 = vpop.f32.mrb[0].mxu0
    %v4112 = vadd.f32 0.0, %v4111
    %v4113 = vpop.f32.mrb[0].mxu0
    %v4114 = vpop.f32.mrb[0].mxu0
    %4115 = vdwg.mxu0
    %4116 = vmatprep.subr.bf16.mxu0 %v2474
    %4117 = vmatpush1.bf16.msra.mxu0 %v2473
    %4118 = vmatprep.subr.bf16.mxu0 %v2482
    %4119 = vmatpush1.bf16.msra.mxu0 %v2481
    %4120 = vmatprep.subr.bf16.mxu0 %v2490
    %4121 = vmatpush1.bf16.msra.mxu0 %v2489
    %4122 = vmatprep.subr.bf16.mxu0 %v2498
    %4123 = vmatpush1.bf16.msra.mxu0 %v2497
    %4124 = vmatprep.subr.bf16.mxu0 %v2506
    %4125 = vmatpush1.bf16.msra.mxu0 %v2505
    %4126 = vmatprep.subr.bf16.mxu0 %v2514
    %4127 = vmatpush1.bf16.msra.mxu0 %v2513
    %4128 = vmatprep.subr.bf16.mxu0 %v2522
    %4129 = vmatpush1.bf16.msra.mxu0 %v2521
    %4130 = vmatprep.subr.bf16.mxu0 %v2530
    %4131 = vmatpush1.bf16.msra.mxu0 %v2529
    %4132 = vmatprep.subr.bf16.mxu0 %v2538
    %4133 = vmatpush1.bf16.msra.mxu0 %v2537
    %4134 = vmatprep.subr.bf16.mxu0 %v2546
    %4135 = vmatpush1.bf16.msra.mxu0 %v2545
    %4136 = vmatprep.subr.bf16.mxu0 %v2554
    %4137 = vmatpush1.bf16.msra.mxu0 %v2553
    %4138 = vmatprep.subr.bf16.mxu0 %v2562
    %4139 = vmatpush1.bf16.msra.mxu0 %v2561
    %4140 = vmatprep.subr.bf16.mxu0 %v2570
    %4141 = vmatpush1.bf16.msra.mxu0 %v2569
    %4142 = vmatprep.subr.bf16.mxu0 %v2578
    %4143 = vmatpush1.bf16.msra.mxu0 %v2577
    %4144 = vmatprep.subr.bf16.mxu0 %v2586
    %4145 = vmatpush1.bf16.msra.mxu0 %v2585
    %4146 = vmatprep.subr.bf16.mxu0 %v2594
    %4147 = vmatpush1.bf16.msra.mxu0 %v2593
    %4148 = vmatprep.mubr.bf16.mxu0 %v3992
    %4149 = vmatmul.mubr.bf16.gmra.mrb[0].mxu0 %v3991
    %v4150 = vpop.f32.mrb[0].mxu0
    %v4151 = vadd.f32 0.0, %v4150
    %v4152 = vpop.f32.mrb[0].mxu0
    %v4153 = vadd.f32 0.0, %v4152
    %v4154 = vpop.f32.mrb[0].mxu0
    %v4155 = vpop.f32.mrb[0].mxu0
    %4156 = vdwg.mxu0
    %v4157 = vadd.f32 %v3983, %v4028
    %v4158 = vadd.f32 %v3984, %v4030
    %v4159 = vadd.f32 %v3985, %v4069
    %v4160 = vadd.f32 %v3986, %v4071
    %v4161 = vadd.f32 %v3987, %v4110
    %v4162 = vadd.f32 %v3988, %v4112
    %v4163 = vadd.f32 %v3989, %v4151
    %v4164 = vadd.f32 %v3990, %v4153
    %v4165 = vxor.u32 %v4157, 2147483648
    %v4166 = vxor.u32 %v4158, 2147483648
    %v4167 = vxor.u32 %v4159, 2147483648
    %v4168 = vxor.u32 %v4160, 2147483648
    %v4169 = vxor.u32 %v4161, 2147483648
    %v4170 = vxor.u32 %v4162, 2147483648
    %v4171 = vmul.f32 %v4165, 1.442695
    %v4172 = vpow.pop %v4171
    %v4173 = vmul.f32 %v4166, 1.442695
    %v4174 = vpow.pop %v4173
    %v4175 = vmul.f32 %v4167, 1.442695
    %v4176 = vpow.pop %v4175
    %v4177 = vmul.f32 %v4168, 1.442695
    %v4178 = vpow.pop %v4177
    %v4179 = vmul.f32 %v4169, 1.442695
    %v4180 = vpow.pop %v4179
    %v4181 = vmul.f32 %v4170, 1.442695
    %v4182 = vpow.pop %v4181
    %v4183 = vadd.f32 %v4172, 1.0
    %v4184 = vadd.f32 %v4174, 1.0
    %v4185 = vadd.f32 %v4176, 1.0
    %v4186 = vadd.f32 %v4178, 1.0
    %v4187 = vadd.f32 %v4180, 1.0
    %v4188 = vadd.f32 %v4182, 1.0
    %v4189 = vrcp.pop %v4183
    %v4190 = vmul.f32 1.0, %v4189
    %v4191 = vrcp.pop %v4184
    %v4192 = vmul.f32 1.0, %v4191
    %v4193 = vrcp.pop %v4185
    %v4194 = vmul.f32 1.0, %v4193
    %v4195 = vrcp.pop %v4186
    %v4196 = vmul.f32 1.0, %v4195
    %v4197 = vrcp.pop %v4187
    %v4198 = vmul.f32 1.0, %v4197
    %v4199 = vrcp.pop %v4188
    %v4200 = vmul.f32 1.0, %v4199
    %v4201 = vtanh.pop %v4163
    %v4202 = vtanh.pop %v4164
    %v4203 = vmul.f32 %v4194, %v3974
    %v4204 = vmul.f32 %v4196, %v3975
    %v4205 = vmul.f32 %v4190, %v4201
    %v4206 = vmul.f32 %v4192, %v4202
    %v4207 = vadd.f32 %v4203, %v4205
    %v4208 = vadd.f32 %v4204, %v4206
    %v4209 = vtanh.pop %v4207
    %v4210 = vtanh.pop %v4208
    %v4211 = vmul.f32 %v4198, %v4209
    %v4212 = vmul.f32 %v4200, %v4210
    %s4213 = smul.u32 7, 8
    %s4214 = smul.addr %s4213, 8
    %s4215 = scalar_lea.vmem [#allocation2], %s4214
    %v4216 = vld [vmem:[%s4215] sm:$0xff]
    %v4217 = vld [vmem:[%s4215 + $0x8] sm:$0xff]
    %v4218 = vld [vmem:[%s4215 + $0x10] sm:$0xff]
    %v4219 = vld [vmem:[%s4215 + $0x18] sm:$0xff]
    %v4220 = vld [vmem:[%s4215 + $0x20] sm:$0xff]
    %v4221 = vld [vmem:[%s4215 + $0x28] sm:$0xff]
    %v4222 = vld [vmem:[%s4215 + $0x30] sm:$0xff]
    %v4223 = vld [vmem:[%s4215 + $0x38] sm:$0xff]
    %v4224 = vpack.c.bf16 %v4211, %v4211
    %v4225 = vpack.c.bf16 %v4212, %v4212
    %4226 = vmatprep.subr.bf16.mxu0 %v2468
    %4227 = vmatpush1.bf16.msra.mxu0 %v2467
    %4228 = vmatprep.subr.bf16.mxu0 %v2476
    %4229 = vmatpush1.bf16.msra.mxu0 %v2475
    %4230 = vmatprep.subr.bf16.mxu0 %v2484
    %4231 = vmatpush1.bf16.msra.mxu0 %v2483
    %4232 = vmatprep.subr.bf16.mxu0 %v2492
    %4233 = vmatpush1.bf16.msra.mxu0 %v2491
    %4234 = vmatprep.subr.bf16.mxu0 %v2500
    %4235 = vmatpush1.bf16.msra.mxu0 %v2499
    %4236 = vmatprep.subr.bf16.mxu0 %v2508
    %4237 = vmatpush1.bf16.msra.mxu0 %v2507
    %4238 = vmatprep.subr.bf16.mxu0 %v2516
    %4239 = vmatpush1.bf16.msra.mxu0 %v2515
    %4240 = vmatprep.subr.bf16.mxu0 %v2524
    %4241 = vmatpush1.bf16.msra.mxu0 %v2523
    %4242 = vmatprep.subr.bf16.mxu0 %v2532
    %4243 = vmatpush1.bf16.msra.mxu0 %v2531
    %4244 = vmatprep.subr.bf16.mxu0 %v2540
    %4245 = vmatpush1.bf16.msra.mxu0 %v2539
    %4246 = vmatprep.subr.bf16.mxu0 %v2548
    %4247 = vmatpush1.bf16.msra.mxu0 %v2547
    %4248 = vmatprep.subr.bf16.mxu0 %v2556
    %4249 = vmatpush1.bf16.msra.mxu0 %v2555
    %4250 = vmatprep.subr.bf16.mxu0 %v2564
    %4251 = vmatpush1.bf16.msra.mxu0 %v2563
    %4252 = vmatprep.subr.bf16.mxu0 %v2572
    %4253 = vmatpush1.bf16.msra.mxu0 %v2571
    %4254 = vmatprep.subr.bf16.mxu0 %v2580
    %4255 = vmatpush1.bf16.msra.mxu0 %v2579
    %4256 = vmatprep.subr.bf16.mxu0 %v2588
    %4257 = vmatpush1.bf16.msra.mxu0 %v2587
    %4258 = vmatprep.mubr.bf16.mxu0 %v4225
    %4259 = vmatmul.mubr.bf16.gmra.mrb[0].mxu0 %v4224
    %v4260 = vpop.f32.mrb[0].mxu0
    %v4261 = vadd.f32 0.0, %v4260
    %v4262 = vpop.f32.mrb[0].mxu0
    %v4263 = vadd.f32 0.0, %v4262
    %v4264 = vpop.f32.mrb[0].mxu0
    %v4265 = vpop.f32.mrb[0].mxu0
    %4266 = vdwg.mxu0
    %4267 = vmatprep.subr.bf16.mxu0 %v2470
    %4268 = vmatpush1.bf16.msra.mxu0 %v2469
    %4269 = vmatprep.subr.bf16.mxu0 %v2478
    %4270 = vmatpush1.bf16.msra.mxu0 %v2477
    %4271 = vmatprep.subr.bf16.mxu0 %v2486
    %4272 = vmatpush1.bf16.msra.mxu0 %v2485
    %4273 = vmatprep.subr.bf16.mxu0 %v2494
    %4274 = vmatpush1.bf16.msra.mxu0 %v2493
    %4275 = vmatprep.subr.bf16.mxu0 %v2502
    %4276 = vmatpush1.bf16.msra.mxu0 %v2501
    %4277 = vmatprep.subr.bf16.mxu0 %v2510
    %4278 = vmatpush1.bf16.msra.mxu0 %v2509
    %4279 = vmatprep.subr.bf16.mxu0 %v2518
    %4280 = vmatpush1.bf16.msra.mxu0 %v2517
    %4281 = vmatprep.subr.bf16.mxu0 %v2526
    %4282 = vmatpush1.bf16.msra.mxu0 %v2525
    %4283 = vmatprep.subr.bf16.mxu0 %v2534
    %4284 = vmatpush1.bf16.msra.mxu0 %v2533
    %4285 = vmatprep.subr.bf16.mxu0 %v2542
    %4286 = vmatpush1.bf16.msra.mxu0 %v2541
    %4287 = vmatprep.subr.bf16.mxu0 %v2550
    %4288 = vmatpush1.bf16.msra.mxu0 %v2549
    %4289 = vmatprep.subr.bf16.mxu0 %v2558
    %4290 = vmatpush1.bf16.msra.mxu0 %v2557
    %4291 = vmatprep.subr.bf16.mxu0 %v2566
    %4292 = vmatpush1.bf16.msra.mxu0 %v2565
    %4293 = vmatprep.subr.bf16.mxu0 %v2574
    %4294 = vmatpush1.bf16.msra.mxu0 %v2573
    %4295 = vmatprep.subr.bf16.mxu0 %v2582
    %4296 = vmatpush1.bf16.msra.mxu0 %v2581
    %4297 = vmatprep.subr.bf16.mxu0 %v2590
    %4298 = vmatpush1.bf16.msra.mxu0 %v2589
    %4299 = vmatprep.mubr.bf16.mxu0 %v4225
    %4300 = vmatmul.mubr.bf16.gmra.mrb[0].mxu0 %v4224
    %v4301 = vpop.f32.mrb[0].mxu0
    %v4302 = vadd.f32 0.0, %v4301
    %v4303 = vpop.f32.mrb[0].mxu0
    %v4304 = vadd.f32 0.0, %v4303
    %v4305 = vpop.f32.mrb[0].mxu0
    %v4306 = vpop.f32.mrb[0].mxu0
    %4307 = vdwg.mxu0
    %4308 = vmatprep.subr.bf16.mxu0 %v2472
    %4309 = vmatpush1.bf16.msra.mxu0 %v2471
    %4310 = vmatprep.subr.bf16.mxu0 %v2480
    %4311 = vmatpush1.bf16.msra.mxu0 %v2479
    %4312 = vmatprep.subr.bf16.mxu0 %v2488
    %4313 = vmatpush1.bf16.msra.mxu0 %v2487
    %4314 = vmatprep.subr.bf16.mxu0 %v2496
    %4315 = vmatpush1.bf16.msra.mxu0 %v2495
    %4316 = vmatprep.subr.bf16.mxu0 %v2504
    %4317 = vmatpush1.bf16.msra.mxu0 %v2503
    %4318 = vmatprep.subr.bf16.mxu0 %v2512
    %4319 = vmatpush1.bf16.msra.mxu0 %v2511
    %4320 = vmatprep.subr.bf16.mxu0 %v2520
    %4321 = vmatpush1.bf16.msra.mxu0 %v2519
    %4322 = vmatprep.subr.bf16.mxu0 %v2528
    %4323 = vmatpush1.bf16.msra.mxu0 %v2527
    %4324 = vmatprep.subr.bf16.mxu0 %v2536
    %4325 = vmatpush1.bf16.msra.mxu0 %v2535
    %4326 = vmatprep.subr.bf16.mxu0 %v2544
    %4327 = vmatpush1.bf16.msra.mxu0 %v2543
    %4328 = vmatprep.subr.bf16.mxu0 %v2552
    %4329 = vmatpush1.bf16.msra.mxu0 %v2551
    %4330 = vmatprep.subr.bf16.mxu0 %v2560
    %4331 = vmatpush1.bf16.msra.mxu0 %v2559
    %4332 = vmatprep.subr.bf16.mxu0 %v2568
    %4333 = vmatpush1.bf16.msra.mxu0 %v2567
    %4334 = vmatprep.subr.bf16.mxu0 %v2576
    %4335 = vmatpush1.bf16.msra.mxu0 %v2575
    %4336 = vmatprep.subr.bf16.mxu0 %v2584
    %4337 = vmatpush1.bf16.msra.mxu0 %v2583
    %4338 = vmatprep.subr.bf16.mxu0 %v2592
    %4339 = vmatpush1.bf16.msra.mxu0 %v2591
    %4340 = vmatprep.mubr.bf16.mxu0 %v4225
    %4341 = vmatmul.mubr.bf16.gmra.mrb[0].mxu0 %v4224
    %v4342 = vpop.f32.mrb[0].mxu0
    %v4343 = vadd.f32 0.0, %v4342
    %v4344 = vpop.f32.mrb[0].mxu0
    %v4345 = vadd.f32 0.0, %v4344
    %v4346 = vpop.f32.mrb[0].mxu0
    %v4347 = vpop.f32.mrb[0].mxu0
    %4348 = vdwg.mxu0
    %4349 = vmatprep.subr.bf16.mxu0 %v2474
    %4350 = vmatpush1.bf16.msra.mxu0 %v2473
    %4351 = vmatprep.subr.bf16.mxu0 %v2482
    %4352 = vmatpush1.bf16.msra.mxu0 %v2481
    %4353 = vmatprep.subr.bf16.mxu0 %v2490
    %4354 = vmatpush1.bf16.msra.mxu0 %v2489
    %4355 = vmatprep.subr.bf16.mxu0 %v2498
    %4356 = vmatpush1.bf16.msra.mxu0 %v2497
    %4357 = vmatprep.subr.bf16.mxu0 %v2506
    %4358 = vmatpush1.bf16.msra.mxu0 %v2505
    %4359 = vmatprep.subr.bf16.mxu0 %v2514
    %4360 = vmatpush1.bf16.msra.mxu0 %v2513
    %4361 = vmatprep.subr.bf16.mxu0 %v2522
    %4362 = vmatpush1.bf16.msra.mxu0 %v2521
    %4363 = vmatprep.subr.bf16.mxu0 %v2530
    %4364 = vmatpush1.bf16.msra.mxu0 %v2529
    %4365 = vmatprep.subr.bf16.mxu0 %v2538
    %4366 = vmatpush1.bf16.msra.mxu0 %v2537
    %4367 = vmatprep.subr.bf16.mxu0 %v2546
    %4368 = vmatpush1.bf16.msra.mxu0 %v2545
    %4369 = vmatprep.subr.bf16.mxu0 %v2554
    %4370 = vmatpush1.bf16.msra.mxu0 %v2553
    %4371 = vmatprep.subr.bf16.mxu0 %v2562
    %4372 = vmatpush1.bf16.msra.mxu0 %v2561
    %4373 = vmatprep.subr.bf16.mxu0 %v2570
    %4374 = vmatpush1.bf16.msra.mxu0 %v2569
    %4375 = vmatprep.subr.bf16.mxu0 %v2578
    %4376 = vmatpush1.bf16.msra.mxu0 %v2577
    %4377 = vmatprep.subr.bf16.mxu0 %v2586
    %4378 = vmatpush1.bf16.msra.mxu0 %v2585
    %4379 = vmatprep.subr.bf16.mxu0 %v2594
    %4380 = vmatpush1.bf16.msra.mxu0 %v2593
    %4381 = vmatprep.mubr.bf16.mxu0 %v4225
    %4382 = vmatmul.mubr.bf16.gmra.mrb[0].mxu0 %v4224
    %v4383 = vpop.f32.mrb[0].mxu0
    %v4384 = vadd.f32 0.0, %v4383
    %v4385 = vpop.f32.mrb[0].mxu0
    %v4386 = vadd.f32 0.0, %v4385
    %v4387 = vpop.f32.mrb[0].mxu0
    %v4388 = vpop.f32.mrb[0].mxu0
    %4389 = vdwg.mxu0
    %v4390 = vadd.f32 %v4216, %v4261
    %v4391 = vadd.f32 %v4217, %v4263
    %v4392 = vadd.f32 %v4218, %v4302
    %v4393 = vadd.f32 %v4219, %v4304
    %v4394 = vadd.f32 %v4220, %v4343
    %v4395 = vadd.f32 %v4221, %v4345
    %v4396 = vadd.f32 %v4222, %v4384
    %v4397 = vadd.f32 %v4223, %v4386
    %v4398 = vxor.u32 %v4390, 2147483648
    %v4399 = vxor.u32 %v4391, 2147483648
    %v4400 = vxor.u32 %v4392, 2147483648
    %v4401 = vxor.u32 %v4393, 2147483648
    %v4402 = vxor.u32 %v4394, 2147483648
    %v4403 = vxor.u32 %v4395, 2147483648
    %v4404 = vmul.f32 %v4398, 1.442695
    %v4405 = vpow.pop %v4404
    %v4406 = vmul.f32 %v4399, 1.442695
    %v4407 = vpow.pop %v4406
    %v4408 = vmul.f32 %v4400, 1.442695
    %v4409 = vpow.pop %v4408
    %v4410 = vmul.f32 %v4401, 1.442695
    %v4411 = vpow.pop %v4410
    %v4412 = vmul.f32 %v4402, 1.442695
    %v4413 = vpow.pop %v4412
    %v4414 = vmul.f32 %v4403, 1.442695
    %v4415 = vpow.pop %v4414
    %v4416 = vadd.f32 %v4405, 1.0
    %v4417 = vadd.f32 %v4407, 1.0
    %v4418 = vadd.f32 %v4409, 1.0
    %v4419 = vadd.f32 %v4411, 1.0
    %v4420 = vadd.f32 %v4413, 1.0
    %v4421 = vadd.f32 %v4415, 1.0
    %v4422 = vrcp.pop %v4416
    %v4423 = vmul.f32 1.0, %v4422
    %v4424 = vrcp.pop %v4417
    %v4425 = vmul.f32 1.0, %v4424
    %v4426 = vrcp.pop %v4418
    %v4427 = vmul.f32 1.0, %v4426
    %v4428 = vrcp.pop %v4419
    %v4429 = vmul.f32 1.0, %v4428
    %v4430 = vrcp.pop %v4420
    %v4431 = vmul.f32 1.0, %v4430
    %v4432 = vrcp.pop %v4421
    %v4433 = vmul.f32 1.0, %v4432
    %v4434 = vtanh.pop %v4396
    %v4435 = vtanh.pop %v4397
    %v4436 = vmul.f32 %v4427, %v4207
    %v4437 = vmul.f32 %v4429, %v4208
    %v4438 = vmul.f32 %v4423, %v4434
    %v4439 = vmul.f32 %v4425, %v4435
    %v4440 = vadd.f32 %v4436, %v4438
    %v4441 = vadd.f32 %v4437, %v4439
    %v4442 = vtanh.pop %v4440
    %v4443 = vtanh.pop %v4441
    %v4444 = vmul.f32 %v4431, %v4442
    %v4445 = vmul.f32 %v4433, %v4443
    %s4446 = smul.u32 %s2452, 3
    %s4447 = sshll.u32 %s4446, 4
    %4448 = dma.done %s95, %s4447
    %v4449 = vpack.c.bf16 %v4444, %v4444
    %v4450 = vpack.c.bf16 %v4445, %v4445
    %v4451 = vld [vmem:[#allocation4] sm:$0xff]
    %v4452 = vld [vmem:[#allocation4 + $0x8] sm:$0xff]
    %v4453 = vld [vmem:[#allocation4 + $0x10] sm:$0xff]
    %v4454 = vld [vmem:[#allocation4 + $0x18] sm:$0xff]
    %v4455 = vld [vmem:[#allocation4 + $0x20] sm:$0xff]
    %v4456 = vld [vmem:[#allocation4 + $0x28] sm:$0xff]
    %v4457 = vld [vmem:[#allocation4 + $0x30] sm:$0xff]
    %v4458 = vld [vmem:[#allocation4 + $0x38] sm:$0xff]
    %v4459 = vld [vmem:[#allocation4 + $0x40] sm:$0xff]
    %v4460 = vld [vmem:[#allocation4 + $0x48] sm:$0xff]
    %v4461 = vld [vmem:[#allocation4 + $0x50] sm:$0xff]
    %v4462 = vld [vmem:[#allocation4 + $0x58] sm:$0xff]
    %v4463 = vld [vmem:[#allocation4 + $0x60] sm:$0xff]
    %v4464 = vld [vmem:[#allocation4 + $0x68] sm:$0xff]
    %v4465 = vld [vmem:[#allocation4 + $0x70] sm:$0xff]
    %v4466 = vld [vmem:[#allocation4 + $0x78] sm:$0xff]
    %v4467 = vld [vmem:[#allocation4 + $0x80] sm:$0xff]
    %v4468 = vld [vmem:[#allocation4 + $0x88] sm:$0xff]
    %v4469 = vld [vmem:[#allocation4 + $0x90] sm:$0xff]
    %v4470 = vld [vmem:[#allocation4 + $0x98] sm:$0xff]
    %v4471 = vld [vmem:[#allocation4 + $0xa0] sm:$0xff]
    %v4472 = vld [vmem:[#allocation4 + $0xa8] sm:$0xff]
    %v4473 = vld [vmem:[#allocation4 + $0xb0] sm:$0xff]
    %v4474 = vld [vmem:[#allocation4 + $0xb8] sm:$0xff]
    %v4475 = vld [vmem:[#allocation4 + $0xc0] sm:$0xff]
    %v4476 = vld [vmem:[#allocation4 + $0xc8] sm:$0xff]
    %v4477 = vld [vmem:[#allocation4 + $0xd0] sm:$0xff]
    %v4478 = vld [vmem:[#allocation4 + $0xd8] sm:$0xff]
    %v4479 = vld [vmem:[#allocation4 + $0xe0] sm:$0xff]
    %v4480 = vld [vmem:[#allocation4 + $0xe8] sm:$0xff]
    %v4481 = vld [vmem:[#allocation4 + $0xf0] sm:$0xff]
    %v4482 = vld [vmem:[#allocation4 + $0xf8] sm:$0xff]
    %v4483 = vld [vmem:[#allocation4 + $0x100] sm:$0xff]
    %v4484 = vld [vmem:[#allocation4 + $0x108] sm:$0xff]
    %v4485 = vld [vmem:[#allocation4 + $0x110] sm:$0xff]
    %v4486 = vld [vmem:[#allocation4 + $0x118] sm:$0xff]
    %v4487 = vld [vmem:[#allocation4 + $0x120] sm:$0xff]
    %v4488 = vld [vmem:[#allocation4 + $0x128] sm:$0xff]
    %v4489 = vld [vmem:[#allocation4 + $0x130] sm:$0xff]
    %v4490 = vld [vmem:[#allocation4 + $0x138] sm:$0xff]
    %v4491 = vld [vmem:[#allocation4 + $0x140] sm:$0xff]
    %v4492 = vld [vmem:[#allocation4 + $0x148] sm:$0xff]
    %v4493 = vld [vmem:[#allocation4 + $0x150] sm:$0xff]
    %v4494 = vld [vmem:[#allocation4 + $0x158] sm:$0xff]
    %v4495 = vld [vmem:[#allocation4 + $0x160] sm:$0xff]
    %v4496 = vld [vmem:[#allocation4 + $0x168] sm:$0xff]
    %v4497 = vld [vmem:[#allocation4 + $0x170] sm:$0xff]
    %v4498 = vld [vmem:[#allocation4 + $0x178] sm:$0xff]
    %v4499 = vld [vmem:[%s3] sm:$0x7]
    %v4501 = vlaneseq
    %v4502 = vshrl.u32 %v4501, 7
    %v4503 = vsub.s32 0, %v4502
    %v4504 = vrot.slane %v4499, %v4503
    %v4505 = vlaneseq
    %v4506 = vshrl.u32 %v4505, 7
    %v4507 = vsub.s32 1, %v4506
    %v4508 = vrot.slane %v4499, %v4507
    %v4509 = vlaneseq
    %v4510 = vshrl.u32 %v4509, 7
    %v4511 = vsub.s32 2, %v4510
    %v4512 = vrot.slane %v4499, %v4511
    %4516 = vmatprep.subr.bf16.mxu0 %v4452
    %4517 = vmatpush1.bf16.msra.mxu0 %v4451
    %4518 = vmatprep.subr.bf16.mxu0 %v4455
    %4519 = vmatpush1.bf16.msra.mxu0 %v4454
    %4520 = vmatprep.subr.bf16.mxu0 %v4458
    %4521 = vmatpush1.bf16.msra.mxu0 %v4457
    %4522 = vmatprep.subr.bf16.mxu0 %v4461
    %4523 = vmatpush1.bf16.msra.mxu0 %v4460
    %4524 = vmatprep.subr.bf16.mxu0 %v4464
    %4525 = vmatpush1.bf16.msra.mxu0 %v4463
    %4526 = vmatprep.subr.bf16.mxu0 %v4467
    %4527 = vmatpush1.bf16.msra.mxu0 %v4466
    %4528 = vmatprep.subr.bf16.mxu0 %v4470
    %4529 = vmatpush1.bf16.msra.mxu0 %v4469
    %4530 = vmatprep.subr.bf16.mxu0 %v4473
    %4531 = vmatpush1.bf16.msra.mxu0 %v4472
    %4532 = vmatprep.subr.bf16.mxu0 %v4476
    %4533 = vmatpush1.bf16.msra.mxu0 %v4475
    %4534 = vmatprep.subr.bf16.mxu0 %v4479
    %4535 = vmatpush1.bf16.msra.mxu0 %v4478
    %4536 = vmatprep.subr.bf16.mxu0 %v4482
    %4537 = vmatpush1.bf16.msra.mxu0 %v4481
    %4538 = vmatprep.subr.bf16.mxu0 %v4485
    %4539 = vmatpush1.bf16.msra.mxu0 %v4484
    %4540 = vmatprep.subr.bf16.mxu0 %v4488
    %4541 = vmatpush1.bf16.msra.mxu0 %v4487
    %4542 = vmatprep.subr.bf16.mxu0 %v4491
    %4543 = vmatpush1.bf16.msra.mxu0 %v4490
    %4544 = vmatprep.subr.bf16.mxu0 %v4494
    %4545 = vmatpush1.bf16.msra.mxu0 %v4493
    %4546 = vmatprep.subr.bf16.mxu0 %v4497
    %4547 = vmatpush1.bf16.msra.mxu0 %v4496
    %4548 = vmatprep.mubr.bf16.mxu0 %v4450
    %4549 = vmatmul.mubr.bf16.gmra.mrb[0].mxu0 %v4449
    %v4550 = vpop.f32.mrb[0].mxu0
    %v4551 = vadd.f32 %v4504, %v4550
    %v4552 = vpop.f32.mrb[0].mxu0
    %v4553 = vadd.f32 %v4508, %v4552
    %v4554 = vpop.f32.mrb[0].mxu0
    %v4555 = vpop.f32.mrb[0].mxu0
    %4556 = vdwg.mxu0
    %4557 = vmatprep.subr.bf16.mxu0 0
    %4558 = vmatpush1.bf16.msra.mxu0 %v4453
    %4559 = vmatprep.subr.bf16.mxu0 0
    %4560 = vmatpush1.bf16.msra.mxu0 %v4456
    %4561 = vmatprep.subr.bf16.mxu0 0
    %4562 = vmatpush1.bf16.msra.mxu0 %v4459
    %4563 = vmatprep.subr.bf16.mxu0 0
    %4564 = vmatpush1.bf16.msra.mxu0 %v4462
    %4565 = vmatprep.subr.bf16.mxu0 0
    %4566 = vmatpush1.bf16.msra.mxu0 %v4465
    %4567 = vmatprep.subr.bf16.mxu0 0
    %4568 = vmatpush1.bf16.msra.mxu0 %v4468
    %4569 = vmatprep.subr.bf16.mxu0 0
    %4570 = vmatpush1.bf16.msra.mxu0 %v4471
    %4571 = vmatprep.subr.bf16.mxu0 0
    %4572 = vmatpush1.bf16.msra.mxu0 %v4474
    %4573 = vmatprep.subr.bf16.mxu0 0
    %4574 = vmatpush1.bf16.msra.mxu0 %v4477
    %4575 = vmatprep.subr.bf16.mxu0 0
    %4576 = vmatpush1.bf16.msra.mxu0 %v4480
    %4577 = vmatprep.subr.bf16.mxu0 0
    %4578 = vmatpush1.bf16.msra.mxu0 %v4483
    %4579 = vmatprep.subr.bf16.mxu0 0
    %4580 = vmatpush1.bf16.msra.mxu0 %v4486
    %4581 = vmatprep.subr.bf16.mxu0 0
    %4582 = vmatpush1.bf16.msra.mxu0 %v4489
    %4583 = vmatprep.subr.bf16.mxu0 0
    %4584 = vmatpush1.bf16.msra.mxu0 %v4492
    %4585 = vmatprep.subr.bf16.mxu0 0
    %4586 = vmatpush1.bf16.msra.mxu0 %v4495
    %4587 = vmatprep.subr.bf16.mxu0 0
    %4588 = vmatpush1.bf16.msra.mxu0 %v4498
    %4589 = vmatprep.mubr.bf16.mxu0 %v4450
    %4590 = vmatmul.mubr.bf16.gmra.mrb[0].mxu0 %v4449
    %v4591 = vpop.f32.mrb[0].mxu0
    %v4592 = vadd.f32 %v4512, %v4591
    %v4593 = vpop.f32.mrb[0].mxu0
    %v4594 = vpop.f32.mrb[0].mxu0
    %v4595 = vpop.f32.mrb[0].mxu0
    %4596 = vdwg.mxu0
    %v4597 = vmax.f32 %v4551, %v4553
    %v4598 = vmax.f32 %v4597, %v4592
    %4599 = vmax.xlane.f32.xlu0 %v4598
    %v4600 = vpop.xlane.xlu0 %4599
    %v4601 = vsub.f32 %v4551, %v4600
    %v4602 = vsub.f32 %v4553, %v4600
    %v4603 = vsub.f32 %v4592, %v4600
    %v4604 = vmul.f32 %v4601, 1.442695
    %v4605 = vpow.pop %v4604
    %v4606 = vmul.f32 %v4602, 1.442695
    %v4607 = vpow.pop %v4606
    %v4608 = vmul.f32 %v4603, 1.442695
    %v4609 = vpow.pop %v4608
    %v4610 = vadd.f32 %v4605, %v4607
    %v4611 = vadd.f32 %v4610, %v4609
    %4612 = vadd.xlane.f32.xlu0 %v4611
    %v4613 = vpop.xlane.xlu0 %4612
    %v4614 = vlog2.pop %v4613
    %v4615 = vmul.f32 %v4614, 0.6931472
    %v4616 = vsub.f32 %v4601, %v4615
    %v4617 = vsub.f32 %v4602, %v4615
    %v4618 = vsub.f32 %v4603, %v4615
    %4619 = vst [vmem:[#allocation12] sm:$0xff] %v4616
    %4620 = vst [vmem:[#allocation12 + $0x8] sm:$0xff] %v4617
    %4621 = vst [vmem:[#allocation12 + $0x10] sm:$0xff] %v4618
    // Predicated region
    $region30: #{tpu_custom_call.1} parent=1 // pred_check
      _
    $region31: #{tpu_custom_call.1} parent=1 // pred_check_branch
      %4623 = sbr.rel (0) target = $region33
    $region32: #{tpu_custom_call.1} parent=1 // pred_region
      %s4625 = ssub.s32 384, 384
      %4626 = vsyncadd [#allocation8], %s4625
      %s4628 = sshll.u32 [#allocation12], 4
      %s4629 = int_to_ptr.vmem [resolvable:$true] %s4628
      %4631 = dma.vmem_to_hbm [thread:$0]  %s4629, 384, %s6, [#allocation8]
    $region33: #{tpu_custom_call.1} parent=1 // pred_fallthru
      _
    // Predicated region
    $region34: #{tpu_custom_call.1} parent=1 // pred_check
      _
    $region35: #{tpu_custom_call.1} parent=1 // pred_check_branch
      %4633 = sbr.rel (0) target = $region37
    $region36: #{tpu_custom_call.1} parent=1 // pred_region
      %4634 = dma.done [#allocation8], 384
    $region37: #{tpu_custom_call.1} parent=1 // pred_fallthru
      _
    %4635 = vsyncpa [#allocation7], 1
    %4636 = vsyncpa [#allocation10], 1
    %4637 = vsyncpa [#allocation8], 1
  %4638 = vsyncmov [#allocation5]
  %s4639 = vpop.sfrf %4638
  %p4640 = scmp.eq.s32.totalorder %s4639, 0
  %p4641 = pneg %p4640
  %4643 = shalt.err (%p4641)
  %s4644 = scalar_lea.sflag [#allocation5], 1
  %4645 = vsyncmov %s4644
  %s4646 = vpop.sfrf %4645
  %p4647 = scmp.eq.s32.totalorder %s4646, 0
  %p4648 = pneg %p4647
  %4650 = shalt.err (%p4648)

</llo_original>
